<compile_context>
chip_gen: v7x
topology: tpu7x:2x2x1
jax: 0.10.0
libtpu: 0.0.40
codegen_flags: <defaults>
</compile_context>

<pallas_src>
import functools

import jax
import jax.numpy as jnp
from jax import lax
from jax.experimental import pallas as pl
from jax.experimental.pallas import tpu as pltpu


def attention_kernel(x3_ref, wqkv_ref, bqkv_ref, wp_ref, bp_ref, o_ref, *,
                     batch, heads, scale):
    """Fused QKV projection + multi-head attention + output projection.

    Shapes (G = batch*heads, Dh = head_dim, Cp = 128-padded output channels):
      x3_ref   : (3G, N, C)    tokens, replicated per (q/k/v, batch, head)
      wqkv_ref : (3G, C, Dh)   stacked per-(q/k/v, batch, head) weights
      bqkv_ref : (3G, 1, Dh)
      wp_ref   : (G, Dh, Cp)   per-(batch, head) slice of output projection
      bp_ref   : (1, 1, Cp)
      o_ref    : (batch, N, Cp)
    """
    g = batch * heads
    dn = (((2,), (1,)), ((0,), (0,)))                 # 'gnc,gcd->gnd'

    # One batched matmul covers the Q, K and V projections for every
    # (batch, head) pair; q/k/v come back out via free leading-axis slices.
    qkv = lax.dot_general(x3_ref[...], wqkv_ref[...], dn,
                          preferred_element_type=jnp.float32) + bqkv_ref[...]
    q = qkv[:g]                                       # (G, N, Dh)
    k = qkv[g:2 * g]
    v = qkv[2 * g:]

    # Scores for every (batch, head) pair in one batched matmul.
    s = jnp.einsum('gnd,gmd->gnm', q, k,
                   preferred_element_type=jnp.float32) * scale      # (G, N, N)
    s = s - jnp.max(s, axis=-1, keepdims=True)
    p = jnp.exp(s)
    p = p * pl.reciprocal(jnp.sum(p, axis=-1, keepdims=True), approx=True)

    o = jnp.einsum('gnm,gmd->gnd', p, v,
                   preferred_element_type=jnp.float32)               # (G, N, Dh)

    # Per-head partial contribution to the output projection, reduce over
    # heads (leading-axis reshape + sum: no lane/sublane relayout).
    y_g = jnp.einsum('gnd,gdc->gnc', o, wp_ref[...],
                     preferred_element_type=jnp.float32)             # (G, N, Cp)
    n, cp = y_g.shape[1], y_g.shape[2]
    y = y_g.reshape(batch, heads, n, cp).sum(axis=1)                 # (B, N, Cp)
    o_ref[...] = (y + bp_ref[...]).astype(o_ref.dtype)


def attention_forward(x, w_qkv, b_qkv, w_proj, b_proj, *, heads, head_dim):
    """x: (B, N, C).  Params in torch nn.Linear layout:
       w_qkv: (3*H*Dh, C), b_qkv: (3*H*Dh,), w_proj: (C, H*Dh), b_proj: (C,)."""
    B, N, C = x.shape
    H, Dh = heads, head_dim
    G = B * H
    Cp = ((C + 127) // 128) * 128          # lane-dense padded output width
    scale = float(head_dim) ** (-0.5)

    # ---- wrapper-side layout prep (plain XLA, outside the kernel) ----
    # QKV output index in torch layout is (s*H + h)*Dh + d, s in {q,k,v}.
    w = w_qkv.reshape(3, H, Dh, C).transpose(0, 1, 3, 2)              # (3,H,C,Dh)
    wqkv_g = jnp.broadcast_to(w[:, None], (3, B, H, C, Dh)).reshape(3 * G, C, Dh)
    b = b_qkv.reshape(3, H, 1, Dh)
    bqkv_g = jnp.broadcast_to(b[:, None], (3, B, H, 1, Dh)).reshape(3 * G, 1, Dh)

    # Output projection: w_proj[c, h*Dh + d] -> (H, Dh, Cp), zero-padded lanes.
    wp = w_proj.reshape(C, H, Dh).transpose(1, 2, 0)                  # (H, Dh, C)
    wp = jnp.pad(wp, ((0, 0), (0, 0), (0, Cp - C)))
    wp_g = jnp.broadcast_to(wp[None], (B, H, Dh, Cp)).reshape(G, Dh, Cp)
    bp_pad = jnp.pad(b_proj, (0, Cp - C)).reshape(1, 1, Cp)

    # Replicate tokens per (q/k/v, batch, head) so the kernel never relayouts
    # activations and QKV is a single batched matmul.
    x3 = jnp.broadcast_to(x[None, :, None], (3, B, H, N, C)).reshape(3 * G, N, C)

    kernel = functools.partial(attention_kernel, batch=B, heads=H, scale=scale)

    out = pl.pallas_call(
        kernel,
        out_shape=jax.ShapeDtypeStruct((B, N, Cp), x.dtype),
        grid=(1,),
        in_specs=[
            pl.BlockSpec((3 * G, N, C), lambda i: (0, 0, 0)),      # x3
            pl.BlockSpec((3 * G, C, Dh), lambda i: (0, 0, 0)),     # wqkv
            pl.BlockSpec((3 * G, 1, Dh), lambda i: (0, 0, 0)),     # bqkv
            pl.BlockSpec((G, Dh, Cp), lambda i: (0, 0, 0)),        # wp
            pl.BlockSpec((1, 1, Cp), lambda i: (0, 0, 0)),         # bp
        ],
        out_specs=pl.BlockSpec((B, N, Cp), lambda i: (0, 0, 0)),
        compiler_params=pltpu.CompilerParams(
            dimension_semantics=("arbitrary",)),
    )(x3, wqkv_g, bqkv_g, wp_g, bp_pad)

    return out[:, :, :C]


def reference_forward(x, w_qkv, b_qkv, w_proj, b_proj, *, heads, head_dim):
    """Pure-JAX mirror of the PyTorch forward (for verification)."""
    B, N, C = x.shape
    scale = float(head_dim) ** (-0.5)
    qkv = x @ w_qkv.T + b_qkv                                    # (B, N, 3*H*Dh)
    qkv = qkv.reshape(B, N, 3, heads, head_dim).transpose(2, 0, 3, 1, 4)
    q, k, v = qkv[0], qkv[1], qkv[2]
    attn = jnp.einsum('bhnd,bhmd->bhnm', q, k) * scale
    attn = jax.nn.softmax(attn, axis=-1)
    out = jnp.einsum('bhnm,bhmd->bhnd', attn, v)                 # (B, H, N, Dh)
    out = out.transpose(0, 2, 1, 3).reshape(B, N, heads * head_dim)
    return out @ w_proj.T + b_proj


if __name__ == "__main__":
    # Module config: dim=32, heads=4  ->  head_dim = 32 // 4 = 8 (spec formula)
    dim, heads = 32, 4
    head_dim = max(dim, 32) if dim < heads else dim // heads
    B, N = 2, 8
    hd = heads * head_dim

    key = jax.random.PRNGKey(0)
    k_x, k_wqkv, k_bqkv, k_wproj, k_bproj = jax.random.split(key, 5)

    x = jax.random.normal(k_x, (B, N, dim), dtype=jnp.float32)
    # torch nn.Linear layout: weight (out_features, in_features), bias (out,)
    w_qkv = jax.random.normal(k_wqkv, (3 * hd, dim), dtype=jnp.float32) * 0.1
    b_qkv = jax.random.normal(k_bqkv, (3 * hd,), dtype=jnp.float32) * 0.1
    w_proj = jax.random.normal(k_wproj, (dim, hd), dtype=jnp.float32) * 0.1
    b_proj = jax.random.normal(k_bproj, (dim,), dtype=jnp.float32) * 0.1

    out = attention_forward(x, w_qkv, b_qkv, w_proj, b_proj,
                            heads=heads, head_dim=head_dim)
    out = jax.block_until_ready(out)

    ref = reference_forward(x, w_qkv, b_qkv, w_proj, b_proj,
                            heads=heads, head_dim=head_dim)
    assert out.shape == (B, N, dim)
    # tolerance covers the approximate EUP reciprocal in the softmax denominator
    assert jnp.allclose(out, ref, atol=2e-3, rtol=2e-3), "mismatch vs JAX reference"

    print("KERNEL_OK")
</pallas_src>

<mosaic_0001>
module attributes {stable_mosaic.version = 11 : i64} {
  func.func @attention_kernel(%arg0: i32, %arg1: memref<24x8x32xf32, #tpu.memory_space<vmem>>, %arg2: memref<24x32x8xf32, #tpu.memory_space<vmem>>, %arg3: memref<24x1x8xf32, #tpu.memory_space<vmem>>, %arg4: memref<8x8x128xf32, #tpu.memory_space<vmem>>, %arg5: memref<1x1x128xf32, #tpu.memory_space<vmem>>, %arg6: memref<2x8x128xf32, #tpu.memory_space<vmem>>) attributes {dimension_semantics = [#tpu.dimension_semantics<arbitrary>], iteration_bounds = array<i64: 1>, scalar_prefetch = 0 : i64, scratch_operands = 0 : i64, tpu.core_type = #tpu.core_type<tc>, window_params = [{pipeline_mode = #tpu.pipeline_mode<synchronous>, transform_indices = @transform_0, window_bounds = array<i64: 24, 8, 32>}, {pipeline_mode = #tpu.pipeline_mode<synchronous>, transform_indices = @transform_1, window_bounds = array<i64: 24, 32, 8>}, {pipeline_mode = #tpu.pipeline_mode<synchronous>, transform_indices = @transform_2, window_bounds = array<i64: 24, 1, 8>}, {pipeline_mode = #tpu.pipeline_mode<synchronous>, transform_indices = @transform_3, window_bounds = array<i64: 8, 8, 128>}, {pipeline_mode = #tpu.pipeline_mode<synchronous>, transform_indices = @transform_4, window_bounds = array<i64: 1, 1, 128>}, {pipeline_mode = #tpu.pipeline_mode<synchronous>, transform_indices = @transform_5, window_bounds = array<i64: 2, 8, 128>}]} {
    %c0 = arith.constant 0 : index
    %c0_0 = arith.constant 0 : index
    %c0_1 = arith.constant 0 : index
    %0 = vector.load %arg1[%c0, %c0_0, %c0_1] : memref<24x8x32xf32, #tpu.memory_space<vmem>>, vector<24x8x32xf32>
    %c0_2 = arith.constant 0 : index
    %c0_3 = arith.constant 0 : index
    %c0_4 = arith.constant 0 : index
    %1 = vector.load %arg2[%c0_2, %c0_3, %c0_4] : memref<24x32x8xf32, #tpu.memory_space<vmem>>, vector<24x32x8xf32>
    %cst = arith.constant dense<0.000000e+00> : vector<24x8x8xf32>
    %2 = tpu.matmul %0, %1, %cst {dimension_numbers = #tpu.dot_dimension_numbers<[2], [1], [1], [2], [0, 0, 0, 1, 1, 2], [0], [0]>} : vector<24x8x32xf32>, vector<24x32x8xf32>, vector<24x8x8xf32> -> vector<24x8x8xf32>
    %c0_5 = arith.constant 0 : index
    %c0_6 = arith.constant 0 : index
    %c0_7 = arith.constant 0 : index
    %3 = vector.load %arg3[%c0_5, %c0_6, %c0_7] : memref<24x1x8xf32, #tpu.memory_space<vmem>>, vector<24x1x8xf32>
    %4 = vector.broadcast %3 : vector<24x1x8xf32> to vector<24x8x8xf32>
    %5 = arith.addf %2, %4 : vector<24x8x8xf32>
    %6 = vector.extract_strided_slice %5 {offsets = [0, 0, 0], sizes = [8, 8, 8], strides = [1, 1, 1]} : vector<24x8x8xf32> to vector<8x8x8xf32>
    %7 = vector.extract_strided_slice %5 {offsets = [8, 0, 0], sizes = [8, 8, 8], strides = [1, 1, 1]} : vector<24x8x8xf32> to vector<8x8x8xf32>
    %8 = vector.extract_strided_slice %5 {offsets = [16, 0, 0], sizes = [8, 8, 8], strides = [1, 1, 1]} : vector<24x8x8xf32> to vector<8x8x8xf32>
    "tpu.trace_start"() <{level = 10 : i32, message = "gnd,gmd->gnm"}> : () -> ()
    %cst_8 = arith.constant dense<0.000000e+00> : vector<8x8x8xf32>
    %9 = tpu.matmul %6, %7, %cst_8 {dimension_numbers = #tpu.dot_dimension_numbers<[2], [2], [1], [1], [0, 0, 0, 1, 1, 1], [0], [0]>} : vector<8x8x8xf32>, vector<8x8x8xf32>, vector<8x8x8xf32> -> vector<8x8x8xf32>
    "tpu.trace_stop"() : () -> ()
    %cst_9 = arith.constant 0.353553385 : f32
    %10 = vector.broadcast %cst_9 : f32 to vector<8x8x8xf32>
    %11 = arith.mulf %9, %10 : vector<8x8x8xf32>
    %cst_10 = arith.constant dense<0xFF800000> : vector<8x8xf32>
    %12 = vector.multi_reduction <maximumf>, %11, %cst_10 [2] : vector<8x8x8xf32> to vector<8x8xf32>
    %13 = vector.shape_cast %12 : vector<8x8xf32> to vector<8x8x1xf32>
    %14 = vector.broadcast %13 : vector<8x8x1xf32> to vector<8x8x8xf32>
    %15 = arith.subf %11, %14 : vector<8x8x8xf32>
    %16 = math.exp %15 : vector<8x8x8xf32>
    %cst_11 = arith.constant dense<0.000000e+00> : vector<8x8xf32>
    %17 = vector.multi_reduction <add>, %16, %cst_11 [2] : vector<8x8x8xf32> to vector<8x8xf32>
    %18 = vector.shape_cast %17 : vector<8x8xf32> to vector<8x8x1xf32>
    %19 = tpu.reciprocal %18 {approx = true} : vector<8x8x1xf32> -> vector<8x8x1xf32>
    %20 = vector.broadcast %19 : vector<8x8x1xf32> to vector<8x8x8xf32>
    %21 = arith.mulf %16, %20 : vector<8x8x8xf32>
    "tpu.trace_start"() <{level = 10 : i32, message = "gnm,gmd->gnd"}> : () -> ()
    %cst_12 = arith.constant dense<0.000000e+00> : vector<8x8x8xf32>
    %22 = tpu.matmul %21, %8, %cst_12 {dimension_numbers = #tpu.dot_dimension_numbers<[2], [1], [1], [2], [0, 0, 0, 1, 1, 2], [0], [0]>} : vector<8x8x8xf32>, vector<8x8x8xf32>, vector<8x8x8xf32> -> vector<8x8x8xf32>
    "tpu.trace_stop"() : () -> ()
    %c0_13 = arith.constant 0 : index
    %c0_14 = arith.constant 0 : index
    %c0_15 = arith.constant 0 : index
    %23 = vector.load %arg4[%c0_13, %c0_14, %c0_15] : memref<8x8x128xf32, #tpu.memory_space<vmem>>, vector<8x8x128xf32>
    "tpu.trace_start"() <{level = 10 : i32, message = "gnd,gdc->gnc"}> : () -> ()
    %cst_16 = arith.constant dense<0.000000e+00> : vector<8x8x128xf32>
    %24 = tpu.matmul %22, %23, %cst_16 {dimension_numbers = #tpu.dot_dimension_numbers<[2], [1], [1], [2], [0, 0, 0, 1, 1, 2], [0], [0]>} : vector<8x8x8xf32>, vector<8x8x128xf32>, vector<8x8x128xf32> -> vector<8x8x128xf32>
    "tpu.trace_stop"() : () -> ()
    %25 = vector.shape_cast %24 : vector<8x8x128xf32> to vector<2x4x8x128xf32>
    %cst_17 = arith.constant dense<0.000000e+00> : vector<2x8x128xf32>
    %26 = vector.multi_reduction <add>, %25, %cst_17 [1] : vector<2x4x8x128xf32> to vector<2x8x128xf32>
    %c0_18 = arith.constant 0 : index
    %c0_19 = arith.constant 0 : index
    %c0_20 = arith.constant 0 : index
    %27 = vector.load %arg5[%c0_18, %c0_19, %c0_20] : memref<1x1x128xf32, #tpu.memory_space<vmem>>, vector<1x1x128xf32>
    %28 = vector.broadcast %27 : vector<1x1x128xf32> to vector<2x8x128xf32>
    %29 = arith.addf %26, %28 : vector<2x8x128xf32>
    %c0_21 = arith.constant 0 : index
    %c0_22 = arith.constant 0 : index
    %c0_23 = arith.constant 0 : index
    %30 = vector.load %arg6[%c0_21, %c0_22, %c0_23] : memref<2x8x128xf32, #tpu.memory_space<vmem>>, vector<2x8x128xf32>
    tpu.vector_store %arg6[%c0_21, %c0_22, %c0_23], %29 {strides = array<i32>} : memref<2x8x128xf32, #tpu.memory_space<vmem>>, vector<2x8x128xf32>,
    return
  }
  func.func @transform_0(%arg0: i32) -> (i32, i32, i32) {
    %c0_i32 = arith.constant 0 : i32
    %c0_i32_0 = arith.constant 0 : i32
    %c0_i32_1 = arith.constant 0 : i32
    %c0_i32_2 = arith.constant 0 : i32
    return %c0_i32, %c0_i32_0, %c0_i32_1 : i32, i32, i32
  }
  func.func @transform_1(%arg0: i32) -> (i32, i32, i32) {
    %c0_i32 = arith.constant 0 : i32
    %c0_i32_0 = arith.constant 0 : i32
    %c0_i32_1 = arith.constant 0 : i32
    %c0_i32_2 = arith.constant 0 : i32
    return %c0_i32, %c0_i32_0, %c0_i32_1 : i32, i32, i32
  }
  func.func @transform_2(%arg0: i32) -> (i32, i32, i32) {
    %c0_i32 = arith.constant 0 : i32
    %c0_i32_0 = arith.constant 0 : i32
    %c0_i32_1 = arith.constant 0 : i32
    %c0_i32_2 = arith.constant 0 : i32
    return %c0_i32, %c0_i32_0, %c0_i32_1 : i32, i32, i32
  }
  func.func @transform_3(%arg0: i32) -> (i32, i32, i32) {
    %c0_i32 = arith.constant 0 : i32
    %c0_i32_0 = arith.constant 0 : i32
    %c0_i32_1 = arith.constant 0 : i32
    %c0_i32_2 = arith.constant 0 : i32
    return %c0_i32, %c0_i32_0, %c0_i32_1 : i32, i32, i32
  }
  func.func @transform_4(%arg0: i32) -> (i32, i32, i32) {
    %c0_i32 = arith.constant 0 : i32
    %c0_i32_0 = arith.constant 0 : i32
    %c0_i32_1 = arith.constant 0 : i32
    %c0_i32_2 = arith.constant 0 : i32
    return %c0_i32, %c0_i32_0, %c0_i32_1 : i32, i32, i32
  }
  func.func @transform_5(%arg0: i32) -> (i32, i32, i32) {
    %c0_i32 = arith.constant 0 : i32
    %c0_i32_0 = arith.constant 0 : i32
    %c0_i32_1 = arith.constant 0 : i32
    %c0_i32_2 = arith.constant 0 : i32
    return %c0_i32, %c0_i32_0, %c0_i32_1 : i32, i32, i32
  }
}

</mosaic_0001>

<llo_original>
// kernel: tpu_custom_call.1
$region0: #{tpu_custom_call.1}
  #allocation0 [shape = 'u32[]', space=smem, size = 0x4, offset = 0x4, fixed_abs, tag = 'smem constant byte address 0x4 - core index']
  #allocation1 [shape = 'u32[144,128]{1,0:T(1,128)}', space=vmem, size = 0x12000, scoped, tag = 'internal scratch']
  %s0 = inlined_call_operand.vmem [shape: f32[24,8,32], index: 0, kind: input, shape index: {}]
  %s1 = inlined_call_operand.vmem [shape: f32[24,32,8], index: 1, kind: input, shape index: {}]
  %s2 = inlined_call_operand.vmem [shape: f32[24,1,8], index: 2, kind: input, shape index: {}]
  %s3 = inlined_call_operand.vmem [shape: f32[8,8,128], index: 3, kind: input, shape index: {}]
  %s4 = inlined_call_operand.vmem [shape: f32[1,1,128], index: 4, kind: input, shape index: {}]
  %s5 = inlined_call_operand.hbm [shape: f32[2,8,128], index: 5, kind: output, shape index: {}]
  %s6 = sld [smem:[#allocation0]]
  $region30: #{tpu_custom_call.1} parent=0
    _
  %s8 = ssub.s32 1, %s6
  %s9 = scalar_select 0, %s8, %s6
  $region1: #{tpu_custom_call.1} parent=0
    #allocation2 [shape = 'u8[8192]{0}', space=vmem, size = 0x2000, scoped, tag = 'output window, operand 0, single buffered']
    #allocation3 [shape = 's32[1]{0}', space=sflag, size = 0x4, scoped, tag = 'scoped memory for tpu_custom_call.1']
    %10 = vsyncpa [#allocation3], 0
    // Predicated region
    $region2: #{tpu_custom_call.1} parent=1 // pred_check
      _
    $region3: #{tpu_custom_call.1} parent=1 // pred_check_branch
      %12 = sbr.rel (0) target = $region5
    $region4: #{tpu_custom_call.1} parent=1 // pred_region
      _
    $region5: #{tpu_custom_call.1} parent=1 // pred_fallthru
      _
    // Predicated region
    $region6: #{tpu_custom_call.1} parent=1 // pred_check
      _
    $region7: #{tpu_custom_call.1} parent=1 // pred_check_branch
      %14 = sbr.rel (0) target = $region9
    $region8: #{tpu_custom_call.1} parent=1 // pred_region
      _
    $region9: #{tpu_custom_call.1} parent=1 // pred_fallthru
      _
    // Predicated region
    $region10: #{tpu_custom_call.1} parent=1 // pred_check
      _
    $region11: #{tpu_custom_call.1} parent=1 // pred_check_branch
      %16 = sbr.rel (0) target = $region13
    $region12: #{tpu_custom_call.1} parent=1 // pred_region
      _
    $region13: #{tpu_custom_call.1} parent=1 // pred_fallthru
      _
    // Predicated region
    $region14: #{tpu_custom_call.1} parent=1 // pred_check
      _
    $region15: #{tpu_custom_call.1} parent=1 // pred_check_branch
      %18 = sbr.rel (0) target = $region17
    $region16: #{tpu_custom_call.1} parent=1 // pred_region
      _
    $region17: #{tpu_custom_call.1} parent=1 // pred_fallthru
      _
    // Predicated region
    $region18: #{tpu_custom_call.1} parent=1 // pred_check
      _
    $region19: #{tpu_custom_call.1} parent=1 // pred_check_branch
      %20 = sbr.rel (0) target = $region21
    $region20: #{tpu_custom_call.1} parent=1 // pred_region
      _
    $region21: #{tpu_custom_call.1} parent=1 // pred_fallthru
      _
    %v21 = vld [vmem:[%s0] sm:$0xff]
    %v22 = vld [vmem:[%s0 + $0x8] sm:$0xff]
    %v23 = vld [vmem:[%s0 + $0x10] sm:$0xff]
    %v24 = vld [vmem:[%s0 + $0x18] sm:$0xff]
    %v25 = vld [vmem:[%s0 + $0x20] sm:$0xff]
    %v26 = vld [vmem:[%s0 + $0x28] sm:$0xff]
    %v27 = vld [vmem:[%s0 + $0x30] sm:$0xff]
    %v28 = vld [vmem:[%s0 + $0x38] sm:$0xff]
    %v29 = vld [vmem:[%s0 + $0x40] sm:$0xff]
    %v30 = vld [vmem:[%s0 + $0x48] sm:$0xff]
    %v31 = vld [vmem:[%s0 + $0x50] sm:$0xff]
    %v32 = vld [vmem:[%s0 + $0x58] sm:$0xff]
    %v33 = vld [vmem:[%s0 + $0x60] sm:$0xff]
    %v34 = vld [vmem:[%s0 + $0x68] sm:$0xff]
    %v35 = vld [vmem:[%s0 + $0x70] sm:$0xff]
    %v36 = vld [vmem:[%s0 + $0x78] sm:$0xff]
    %v37 = vld [vmem:[%s0 + $0x80] sm:$0xff]
    %v38 = vld [vmem:[%s0 + $0x88] sm:$0xff]
    %v39 = vld [vmem:[%s0 + $0x90] sm:$0xff]
    %v40 = vld [vmem:[%s0 + $0x98] sm:$0xff]
    %v41 = vld [vmem:[%s0 + $0xa0] sm:$0xff]
    %v42 = vld [vmem:[%s0 + $0xa8] sm:$0xff]
    %v43 = vld [vmem:[%s0 + $0xb0] sm:$0xff]
    %v44 = vld [vmem:[%s0 + $0xb8] sm:$0xff]
    %v45 = vld [vmem:[%s1] sm:$0xff]
    %v46 = vld [vmem:[%s1 + $0x8] sm:$0xff]
    %v47 = vld [vmem:[%s1 + $0x10] sm:$0xff]
    %v48 = vld [vmem:[%s1 + $0x18] sm:$0xff]
    %v49 = vld [vmem:[%s1 + $0x20] sm:$0xff]
    %v50 = vld [vmem:[%s1 + $0x28] sm:$0xff]
    %v51 = vld [vmem:[%s1 + $0x30] sm:$0xff]
    %v52 = vld [vmem:[%s1 + $0x38] sm:$0xff]
    %v53 = vld [vmem:[%s1 + $0x40] sm:$0xff]
    %v54 = vld [vmem:[%s1 + $0x48] sm:$0xff]
    %v55 = vld [vmem:[%s1 + $0x50] sm:$0xff]
    %v56 = vld [vmem:[%s1 + $0x58] sm:$0xff]
    %v57 = vld [vmem:[%s1 + $0x60] sm:$0xff]
    %v58 = vld [vmem:[%s1 + $0x68] sm:$0xff]
    %v59 = vld [vmem:[%s1 + $0x70] sm:$0xff]
    %v60 = vld [vmem:[%s1 + $0x78] sm:$0xff]
    %v61 = vld [vmem:[%s1 + $0x80] sm:$0xff]
    %v62 = vld [vmem:[%s1 + $0x88] sm:$0xff]
    %v63 = vld [vmem:[%s1 + $0x90] sm:$0xff]
    %v64 = vld [vmem:[%s1 + $0x98] sm:$0xff]
    %v65 = vld [vmem:[%s1 + $0xa0] sm:$0xff]
    %v66 = vld [vmem:[%s1 + $0xa8] sm:$0xff]
    %v67 = vld [vmem:[%s1 + $0xb0] sm:$0xff]
    %v68 = vld [vmem:[%s1 + $0xb8] sm:$0xff]
    %v69 = vld [vmem:[%s1 + $0xc0] sm:$0xff]
    %v70 = vld [vmem:[%s1 + $0xc8] sm:$0xff]
    %v71 = vld [vmem:[%s1 + $0xd0] sm:$0xff]
    %v72 = vld [vmem:[%s1 + $0xd8] sm:$0xff]
    %v73 = vld [vmem:[%s1 + $0xe0] sm:$0xff]
    %v74 = vld [vmem:[%s1 + $0xe8] sm:$0xff]
    %v75 = vld [vmem:[%s1 + $0xf0] sm:$0xff]
    %v76 = vld [vmem:[%s1 + $0xf8] sm:$0xff]
    %v77 = vld [vmem:[%s1 + $0x100] sm:$0xff]
    %v78 = vld [vmem:[%s1 + $0x108] sm:$0xff]
    %v79 = vld [vmem:[%s1 + $0x110] sm:$0xff]
    %v80 = vld [vmem:[%s1 + $0x118] sm:$0xff]
    %v81 = vld [vmem:[%s1 + $0x120] sm:$0xff]
    %v82 = vld [vmem:[%s1 + $0x128] sm:$0xff]
    %v83 = vld [vmem:[%s1 + $0x130] sm:$0xff]
    %v84 = vld [vmem:[%s1 + $0x138] sm:$0xff]
    %v85 = vld [vmem:[%s1 + $0x140] sm:$0xff]
    %v86 = vld [vmem:[%s1 + $0x148] sm:$0xff]
    %v87 = vld [vmem:[%s1 + $0x150] sm:$0xff]
    %v88 = vld [vmem:[%s1 + $0x158] sm:$0xff]
    %v89 = vld [vmem:[%s1 + $0x160] sm:$0xff]
    %v90 = vld [vmem:[%s1 + $0x168] sm:$0xff]
    %v91 = vld [vmem:[%s1 + $0x170] sm:$0xff]
    %v92 = vld [vmem:[%s1 + $0x178] sm:$0xff]
    %v93 = vld [vmem:[%s1 + $0x180] sm:$0xff]
    %v94 = vld [vmem:[%s1 + $0x188] sm:$0xff]
    %v95 = vld [vmem:[%s1 + $0x190] sm:$0xff]
    %v96 = vld [vmem:[%s1 + $0x198] sm:$0xff]
    %v97 = vld [vmem:[%s1 + $0x1a0] sm:$0xff]
    %v98 = vld [vmem:[%s1 + $0x1a8] sm:$0xff]
    %v99 = vld [vmem:[%s1 + $0x1b0] sm:$0xff]
    %v100 = vld [vmem:[%s1 + $0x1b8] sm:$0xff]
    %v101 = vld [vmem:[%s1 + $0x1c0] sm:$0xff]
    %v102 = vld [vmem:[%s1 + $0x1c8] sm:$0xff]
    %v103 = vld [vmem:[%s1 + $0x1d0] sm:$0xff]
    %v104 = vld [vmem:[%s1 + $0x1d8] sm:$0xff]
    %v105 = vld [vmem:[%s1 + $0x1e0] sm:$0xff]
    %v106 = vld [vmem:[%s1 + $0x1e8] sm:$0xff]
    %v107 = vld [vmem:[%s1 + $0x1f0] sm:$0xff]
    %v108 = vld [vmem:[%s1 + $0x1f8] sm:$0xff]
    %v109 = vld [vmem:[%s1 + $0x200] sm:$0xff]
    %v110 = vld [vmem:[%s1 + $0x208] sm:$0xff]
    %v111 = vld [vmem:[%s1 + $0x210] sm:$0xff]
    %v112 = vld [vmem:[%s1 + $0x218] sm:$0xff]
    %v113 = vld [vmem:[%s1 + $0x220] sm:$0xff]
    %v114 = vld [vmem:[%s1 + $0x228] sm:$0xff]
    %v115 = vld [vmem:[%s1 + $0x230] sm:$0xff]
    %v116 = vld [vmem:[%s1 + $0x238] sm:$0xff]
    %v117 = vld [vmem:[%s1 + $0x240] sm:$0xff]
    %v118 = vld [vmem:[%s1 + $0x248] sm:$0xff]
    %v119 = vld [vmem:[%s1 + $0x250] sm:$0xff]
    %v120 = vld [vmem:[%s1 + $0x258] sm:$0xff]
    %v121 = vld [vmem:[%s1 + $0x260] sm:$0xff]
    %v122 = vld [vmem:[%s1 + $0x268] sm:$0xff]
    %v123 = vld [vmem:[%s1 + $0x270] sm:$0xff]
    %v124 = vld [vmem:[%s1 + $0x278] sm:$0xff]
    %v125 = vld [vmem:[%s1 + $0x280] sm:$0xff]
    %v126 = vld [vmem:[%s1 + $0x288] sm:$0xff]
    %v127 = vld [vmem:[%s1 + $0x290] sm:$0xff]
    %v128 = vld [vmem:[%s1 + $0x298] sm:$0xff]
    %v129 = vld [vmem:[%s1 + $0x2a0] sm:$0xff]
    %v130 = vld [vmem:[%s1 + $0x2a8] sm:$0xff]
    %v131 = vld [vmem:[%s1 + $0x2b0] sm:$0xff]
    %v132 = vld [vmem:[%s1 + $0x2b8] sm:$0xff]
    %v133 = vld [vmem:[%s1 + $0x2c0] sm:$0xff]
    %v134 = vld [vmem:[%s1 + $0x2c8] sm:$0xff]
    %v135 = vld [vmem:[%s1 + $0x2d0] sm:$0xff]
    %v136 = vld [vmem:[%s1 + $0x2d8] sm:$0xff]
    %v137 = vld [vmem:[%s1 + $0x2e0] sm:$0xff]
    %v138 = vld [vmem:[%s1 + $0x2e8] sm:$0xff]
    %v139 = vld [vmem:[%s1 + $0x2f0] sm:$0xff]
    %v140 = vld [vmem:[%s1 + $0x2f8] sm:$0xff]
    %v141 = vld [vmem:[%s2] sm:$0x1]
    %v142 = vld [vmem:[%s2 + $0x1] sm:$0x1]
    %v143 = vld [vmem:[%s2 + $0x2] sm:$0x1]
    %v144 = vld [vmem:[%s2 + $0x3] sm:$0x1]
    %v145 = vld [vmem:[%s2 + $0x4] sm:$0x1]
    %v146 = vld [vmem:[%s2 + $0x5] sm:$0x1]
    %v147 = vld [vmem:[%s2 + $0x6] sm:$0x1]
    %v148 = vld [vmem:[%s2 + $0x7] sm:$0x1]
    %v149 = vld [vmem:[%s2 + $0x8] sm:$0x1]
    %v150 = vld [vmem:[%s2 + $0x9] sm:$0x1]
    %v151 = vld [vmem:[%s2 + $0xa] sm:$0x1]
    %v152 = vld [vmem:[%s2 + $0xb] sm:$0x1]
    %v153 = vld [vmem:[%s2 + $0xc] sm:$0x1]
    %v154 = vld [vmem:[%s2 + $0xd] sm:$0x1]
    %v155 = vld [vmem:[%s2 + $0xe] sm:$0x1]
    %v156 = vld [vmem:[%s2 + $0xf] sm:$0x1]
    %v157 = vld [vmem:[%s2 + $0x10] sm:$0x1]
    %v158 = vld [vmem:[%s2 + $0x11] sm:$0x1]
    %v159 = vld [vmem:[%s2 + $0x12] sm:$0x1]
    %v160 = vld [vmem:[%s2 + $0x13] sm:$0x1]
    %v161 = vld [vmem:[%s2 + $0x14] sm:$0x1]
    %v162 = vld [vmem:[%s2 + $0x15] sm:$0x1]
    %v163 = vld [vmem:[%s2 + $0x16] sm:$0x1]
    %v164 = vld [vmem:[%s2 + $0x17] sm:$0x1]
    %v189 = vlaneseq
    %v190 = vshrl.u32 %v189, 7
    %v191 = vsub.s32 0, %v190
    %v192 = vrot.slane %v141, %v191
    %v193 = vlaneseq
    %v194 = vshrl.u32 %v193, 7
    %v195 = vsub.s32 0, %v194
    %v196 = vrot.slane %v142, %v195
    %v197 = vlaneseq
    %v198 = vshrl.u32 %v197, 7
    %v199 = vsub.s32 0, %v198
    %v200 = vrot.slane %v143, %v199
    %v201 = vlaneseq
    %v202 = vshrl.u32 %v201, 7
    %v203 = vsub.s32 0, %v202
    %v204 = vrot.slane %v144, %v203
    %v205 = vlaneseq
    %v206 = vshrl.u32 %v205, 7
    %v207 = vsub.s32 0, %v206
    %v208 = vrot.slane %v145, %v207
    %v209 = vlaneseq
    %v210 = vshrl.u32 %v209, 7
    %v211 = vsub.s32 0, %v210
    %v212 = vrot.slane %v146, %v211
    %v213 = vlaneseq
    %v214 = vshrl.u32 %v213, 7
    %v215 = vsub.s32 0, %v214
    %v216 = vrot.slane %v147, %v215
    %v217 = vlaneseq
    %v218 = vshrl.u32 %v217, 7
    %v219 = vsub.s32 0, %v218
    %v220 = vrot.slane %v148, %v219
    %v221 = vlaneseq
    %v222 = vshrl.u32 %v221, 7
    %v223 = vsub.s32 0, %v222
    %v224 = vrot.slane %v149, %v223
    %v225 = vlaneseq
    %v226 = vshrl.u32 %v225, 7
    %v227 = vsub.s32 0, %v226
    %v228 = vrot.slane %v150, %v227
    %v229 = vlaneseq
    %v230 = vshrl.u32 %v229, 7
    %v231 = vsub.s32 0, %v230
    %v232 = vrot.slane %v151, %v231
    %v233 = vlaneseq
    %v234 = vshrl.u32 %v233, 7
    %v235 = vsub.s32 0, %v234
    %v236 = vrot.slane %v152, %v235
    %v237 = vlaneseq
    %v238 = vshrl.u32 %v237, 7
    %v239 = vsub.s32 0, %v238
    %v240 = vrot.slane %v153, %v239
    %v241 = vlaneseq
    %v242 = vshrl.u32 %v241, 7
    %v243 = vsub.s32 0, %v242
    %v244 = vrot.slane %v154, %v243
    %v245 = vlaneseq
    %v246 = vshrl.u32 %v245, 7
    %v247 = vsub.s32 0, %v246
    %v248 = vrot.slane %v155, %v247
    %v249 = vlaneseq
    %v250 = vshrl.u32 %v249, 7
    %v251 = vsub.s32 0, %v250
    %v252 = vrot.slane %v156, %v251
    %v253 = vlaneseq
    %v254 = vshrl.u32 %v253, 7
    %v255 = vsub.s32 0, %v254
    %v256 = vrot.slane %v157, %v255
    %v257 = vlaneseq
    %v258 = vshrl.u32 %v257, 7
    %v259 = vsub.s32 0, %v258
    %v260 = vrot.slane %v158, %v259
    %v261 = vlaneseq
    %v262 = vshrl.u32 %v261, 7
    %v263 = vsub.s32 0, %v262
    %v264 = vrot.slane %v159, %v263
    %v265 = vlaneseq
    %v266 = vshrl.u32 %v265, 7
    %v267 = vsub.s32 0, %v266
    %v268 = vrot.slane %v160, %v267
    %v269 = vlaneseq
    %v270 = vshrl.u32 %v269, 7
    %v271 = vsub.s32 0, %v270
    %v272 = vrot.slane %v161, %v271
    %v273 = vlaneseq
    %v274 = vshrl.u32 %v273, 7
    %v275 = vsub.s32 0, %v274
    %v276 = vrot.slane %v162, %v275
    %v277 = vlaneseq
    %v278 = vshrl.u32 %v277, 7
    %v279 = vsub.s32 0, %v278
    %v280 = vrot.slane %v163, %v279
    %v281 = vlaneseq
    %v282 = vshrl.u32 %v281, 7
    %v283 = vsub.s32 0, %v282
    %v284 = vrot.slane %v164, %v283
    %vm309 = vcmask 261120
    %v311 = vsel %vm309, %v21, 0
    %313 = vmatprep.subr.mxu0 0.0
    %314 = vmatpush1.msra.mxu0 %v45
    %315 = vmatprep.subr.mxu0 0.0
    %316 = vmatpush1.msra.mxu0 %v46
    %317 = vmatprep.subr.mxu0 0.0
    %318 = vmatpush1.msra.mxu0 %v47
    %319 = vmatprep.subr.mxu0 0.0
    %320 = vmatpush1.msra.mxu0 %v48
    %321 = vmatprep.subr.mxu0 0.0
    %322 = vmatpush1.msra.mxu0 0.0
    %323 = vmatprep.subr.mxu0 0.0
    %324 = vmatpush1.msra.mxu0 0.0
    %325 = vmatprep.subr.mxu0 0.0
    %326 = vmatpush1.msra.mxu0 0.0
    %327 = vmatprep.subr.mxu0 0.0
    %328 = vmatpush1.msra.mxu0 0.0
    %329 = vmatprep.subr.mxu0 0.0
    %330 = vmatpush1.msra.mxu0 0.0
    %331 = vmatprep.subr.mxu0 0.0
    %332 = vmatpush1.msra.mxu0 0.0
    %333 = vmatprep.subr.mxu0 0.0
    %334 = vmatpush1.msra.mxu0 0.0
    %335 = vmatprep.subr.mxu0 0.0
    %336 = vmatpush1.msra.mxu0 0.0
    %337 = vmatprep.subr.mxu0 0.0
    %338 = vmatpush1.msra.mxu0 0.0
    %339 = vmatprep.subr.mxu0 0.0
    %340 = vmatpush1.msra.mxu0 0.0
    %341 = vmatprep.subr.mxu0 0.0
    %342 = vmatpush1.msra.mxu0 0.0
    %343 = vmatprep.subr.mxu0 0.0
    %344 = vmatpush1.msra.mxu0 0.0
    %345 = vmatprep.subr.mxu0 0.0
    %346 = vmatpush1.msra.mxu0 0.0
    %347 = vmatprep.subr.mxu0 0.0
    %348 = vmatpush1.msra.mxu0 0.0
    %349 = vmatprep.subr.mxu0 0.0
    %350 = vmatpush1.msra.mxu0 0.0
    %351 = vmatprep.subr.mxu0 0.0
    %352 = vmatpush1.msra.mxu0 0.0
    %353 = vmatprep.subr.mxu0 0.0
    %354 = vmatpush1.msra.mxu0 0.0
    %355 = vmatprep.subr.mxu0 0.0
    %356 = vmatpush1.msra.mxu0 0.0
    %357 = vmatprep.subr.mxu0 0.0
    %358 = vmatpush1.msra.mxu0 0.0
    %359 = vmatprep.subr.mxu0 0.0
    %360 = vmatpush1.msra.mxu0 0.0
    %361 = vmatprep.subr.mxu0 0.0
    %362 = vmatpush1.msra.mxu0 0.0
    %363 = vmatprep.subr.mxu0 0.0
    %364 = vmatpush1.msra.mxu0 0.0
    %365 = vmatprep.subr.mxu0 0.0
    %366 = vmatpush1.msra.mxu0 0.0
    %367 = vmatprep.subr.mxu0 0.0
    %368 = vmatpush1.msra.mxu0 0.0
    %369 = vmatprep.subr.mxu0 0.0
    %370 = vmatpush1.msra.mxu0 0.0
    %371 = vmatprep.subr.mxu0 0.0
    %372 = vmatpush1.msra.mxu0 0.0
    %373 = vmatprep.subr.mxu0 0.0
    %374 = vmatpush1.msra.mxu0 0.0
    %375 = vmatprep.subr.mxu0 0.0
    %376 = vmatpush1.msra.mxu0 0.0
    %377 = vmatprep.mubr.f32.mxu0 0.0
    %378 = vmatmul.mubr.f32.gmra.mrb[0].mxu0 %v311
    %v379 = vpop.f32.mrb[0].mxu0
    %v380 = vadd.f32 %v192, %v379
    %v381 = vpop.f32.mrb[0].mxu0
    %382 = vdwg.mxu0
    %v384 = vsel %vm309, %v22, 0
    %386 = vmatprep.subr.mxu0 0.0
    %387 = vmatpush1.msra.mxu0 %v49
    %388 = vmatprep.subr.mxu0 0.0
    %389 = vmatpush1.msra.mxu0 %v50
    %390 = vmatprep.subr.mxu0 0.0
    %391 = vmatpush1.msra.mxu0 %v51
    %392 = vmatprep.subr.mxu0 0.0
    %393 = vmatpush1.msra.mxu0 %v52
    %394 = vmatprep.subr.mxu0 0.0
    %395 = vmatpush1.msra.mxu0 0.0
    %396 = vmatprep.subr.mxu0 0.0
    %397 = vmatpush1.msra.mxu0 0.0
    %398 = vmatprep.subr.mxu0 0.0
    %399 = vmatpush1.msra.mxu0 0.0
    %400 = vmatprep.subr.mxu0 0.0
    %401 = vmatpush1.msra.mxu0 0.0
    %402 = vmatprep.subr.mxu0 0.0
    %403 = vmatpush1.msra.mxu0 0.0
    %404 = vmatprep.subr.mxu0 0.0
    %405 = vmatpush1.msra.mxu0 0.0
    %406 = vmatprep.subr.mxu0 0.0
    %407 = vmatpush1.msra.mxu0 0.0
    %408 = vmatprep.subr.mxu0 0.0
    %409 = vmatpush1.msra.mxu0 0.0
    %410 = vmatprep.subr.mxu0 0.0
    %411 = vmatpush1.msra.mxu0 0.0
    %412 = vmatprep.subr.mxu0 0.0
    %413 = vmatpush1.msra.mxu0 0.0
    %414 = vmatprep.subr.mxu0 0.0
    %415 = vmatpush1.msra.mxu0 0.0
    %416 = vmatprep.subr.mxu0 0.0
    %417 = vmatpush1.msra.mxu0 0.0
    %418 = vmatprep.subr.mxu0 0.0
    %419 = vmatpush1.msra.mxu0 0.0
    %420 = vmatprep.subr.mxu0 0.0
    %421 = vmatpush1.msra.mxu0 0.0
    %422 = vmatprep.subr.mxu0 0.0
    %423 = vmatpush1.msra.mxu0 0.0
    %424 = vmatprep.subr.mxu0 0.0
    %425 = vmatpush1.msra.mxu0 0.0
    %426 = vmatprep.subr.mxu0 0.0
    %427 = vmatpush1.msra.mxu0 0.0
    %428 = vmatprep.subr.mxu0 0.0
    %429 = vmatpush1.msra.mxu0 0.0
    %430 = vmatprep.subr.mxu0 0.0
    %431 = vmatpush1.msra.mxu0 0.0
    %432 = vmatprep.subr.mxu0 0.0
    %433 = vmatpush1.msra.mxu0 0.0
    %434 = vmatprep.subr.mxu0 0.0
    %435 = vmatpush1.msra.mxu0 0.0
    %436 = vmatprep.subr.mxu0 0.0
    %437 = vmatpush1.msra.mxu0 0.0
    %438 = vmatprep.subr.mxu0 0.0
    %439 = vmatpush1.msra.mxu0 0.0
    %440 = vmatprep.subr.mxu0 0.0
    %441 = vmatpush1.msra.mxu0 0.0
    %442 = vmatprep.subr.mxu0 0.0
    %443 = vmatpush1.msra.mxu0 0.0
    %444 = vmatprep.subr.mxu0 0.0
    %445 = vmatpush1.msra.mxu0 0.0
    %446 = vmatprep.subr.mxu0 0.0
    %447 = vmatpush1.msra.mxu0 0.0
    %448 = vmatprep.subr.mxu0 0.0
    %449 = vmatpush1.msra.mxu0 0.0
    %450 = vmatprep.mubr.f32.mxu0 0.0
    %451 = vmatmul.mubr.f32.gmra.mrb[0].mxu0 %v384
    %v452 = vpop.f32.mrb[0].mxu0
    %v453 = vadd.f32 %v196, %v452
    %v454 = vpop.f32.mrb[0].mxu0
    %455 = vdwg.mxu0
    %v457 = vsel %vm309, %v23, 0
    %459 = vmatprep.subr.mxu0 0.0
    %460 = vmatpush1.msra.mxu0 %v53
    %461 = vmatprep.subr.mxu0 0.0
    %462 = vmatpush1.msra.mxu0 %v54
    %463 = vmatprep.subr.mxu0 0.0
    %464 = vmatpush1.msra.mxu0 %v55
    %465 = vmatprep.subr.mxu0 0.0
    %466 = vmatpush1.msra.mxu0 %v56
    %467 = vmatprep.subr.mxu0 0.0
    %468 = vmatpush1.msra.mxu0 0.0
    %469 = vmatprep.subr.mxu0 0.0
    %470 = vmatpush1.msra.mxu0 0.0
    %471 = vmatprep.subr.mxu0 0.0
    %472 = vmatpush1.msra.mxu0 0.0
    %473 = vmatprep.subr.mxu0 0.0
    %474 = vmatpush1.msra.mxu0 0.0
    %475 = vmatprep.subr.mxu0 0.0
    %476 = vmatpush1.msra.mxu0 0.0
    %477 = vmatprep.subr.mxu0 0.0
    %478 = vmatpush1.msra.mxu0 0.0
    %479 = vmatprep.subr.mxu0 0.0
    %480 = vmatpush1.msra.mxu0 0.0
    %481 = vmatprep.subr.mxu0 0.0
    %482 = vmatpush1.msra.mxu0 0.0
    %483 = vmatprep.subr.mxu0 0.0
    %484 = vmatpush1.msra.mxu0 0.0
    %485 = vmatprep.subr.mxu0 0.0
    %486 = vmatpush1.msra.mxu0 0.0
    %487 = vmatprep.subr.mxu0 0.0
    %488 = vmatpush1.msra.mxu0 0.0
    %489 = vmatprep.subr.mxu0 0.0
    %490 = vmatpush1.msra.mxu0 0.0
    %491 = vmatprep.subr.mxu0 0.0
    %492 = vmatpush1.msra.mxu0 0.0
    %493 = vmatprep.subr.mxu0 0.0
    %494 = vmatpush1.msra.mxu0 0.0
    %495 = vmatprep.subr.mxu0 0.0
    %496 = vmatpush1.msra.mxu0 0.0
    %497 = vmatprep.subr.mxu0 0.0
    %498 = vmatpush1.msra.mxu0 0.0
    %499 = vmatprep.subr.mxu0 0.0
    %500 = vmatpush1.msra.mxu0 0.0
    %501 = vmatprep.subr.mxu0 0.0
    %502 = vmatpush1.msra.mxu0 0.0
    %503 = vmatprep.subr.mxu0 0.0
    %504 = vmatpush1.msra.mxu0 0.0
    %505 = vmatprep.subr.mxu0 0.0
    %506 = vmatpush1.msra.mxu0 0.0
    %507 = vmatprep.subr.mxu0 0.0
    %508 = vmatpush1.msra.mxu0 0.0
    %509 = vmatprep.subr.mxu0 0.0
    %510 = vmatpush1.msra.mxu0 0.0
    %511 = vmatprep.subr.mxu0 0.0
    %512 = vmatpush1.msra.mxu0 0.0
    %513 = vmatprep.subr.mxu0 0.0
    %514 = vmatpush1.msra.mxu0 0.0
    %515 = vmatprep.subr.mxu0 0.0
    %516 = vmatpush1.msra.mxu0 0.0
    %517 = vmatprep.subr.mxu0 0.0
    %518 = vmatpush1.msra.mxu0 0.0
    %519 = vmatprep.subr.mxu0 0.0
    %520 = vmatpush1.msra.mxu0 0.0
    %521 = vmatprep.subr.mxu0 0.0
    %522 = vmatpush1.msra.mxu0 0.0
    %523 = vmatprep.mubr.f32.mxu0 0.0
    %524 = vmatmul.mubr.f32.gmra.mrb[0].mxu0 %v457
    %v525 = vpop.f32.mrb[0].mxu0
    %v526 = vadd.f32 %v200, %v525
    %v527 = vpop.f32.mrb[0].mxu0
    %528 = vdwg.mxu0
    %v530 = vsel %vm309, %v24, 0
    %532 = vmatprep.subr.mxu0 0.0
    %533 = vmatpush1.msra.mxu0 %v57
    %534 = vmatprep.subr.mxu0 0.0
    %535 = vmatpush1.msra.mxu0 %v58
    %536 = vmatprep.subr.mxu0 0.0
    %537 = vmatpush1.msra.mxu0 %v59
    %538 = vmatprep.subr.mxu0 0.0
    %539 = vmatpush1.msra.mxu0 %v60
    %540 = vmatprep.subr.mxu0 0.0
    %541 = vmatpush1.msra.mxu0 0.0
    %542 = vmatprep.subr.mxu0 0.0
    %543 = vmatpush1.msra.mxu0 0.0
    %544 = vmatprep.subr.mxu0 0.0
    %545 = vmatpush1.msra.mxu0 0.0
    %546 = vmatprep.subr.mxu0 0.0
    %547 = vmatpush1.msra.mxu0 0.0
    %548 = vmatprep.subr.mxu0 0.0
    %549 = vmatpush1.msra.mxu0 0.0
    %550 = vmatprep.subr.mxu0 0.0
    %551 = vmatpush1.msra.mxu0 0.0
    %552 = vmatprep.subr.mxu0 0.0
    %553 = vmatpush1.msra.mxu0 0.0
    %554 = vmatprep.subr.mxu0 0.0
    %555 = vmatpush1.msra.mxu0 0.0
    %556 = vmatprep.subr.mxu0 0.0
    %557 = vmatpush1.msra.mxu0 0.0
    %558 = vmatprep.subr.mxu0 0.0
    %559 = vmatpush1.msra.mxu0 0.0
    %560 = vmatprep.subr.mxu0 0.0
    %561 = vmatpush1.msra.mxu0 0.0
    %562 = vmatprep.subr.mxu0 0.0
    %563 = vmatpush1.msra.mxu0 0.0
    %564 = vmatprep.subr.mxu0 0.0
    %565 = vmatpush1.msra.mxu0 0.0
    %566 = vmatprep.subr.mxu0 0.0
    %567 = vmatpush1.msra.mxu0 0.0
    %568 = vmatprep.subr.mxu0 0.0
    %569 = vmatpush1.msra.mxu0 0.0
    %570 = vmatprep.subr.mxu0 0.0
    %571 = vmatpush1.msra.mxu0 0.0
    %572 = vmatprep.subr.mxu0 0.0
    %573 = vmatpush1.msra.mxu0 0.0
    %574 = vmatprep.subr.mxu0 0.0
    %575 = vmatpush1.msra.mxu0 0.0
    %576 = vmatprep.subr.mxu0 0.0
    %577 = vmatpush1.msra.mxu0 0.0
    %578 = vmatprep.subr.mxu0 0.0
    %579 = vmatpush1.msra.mxu0 0.0
    %580 = vmatprep.subr.mxu0 0.0
    %581 = vmatpush1.msra.mxu0 0.0
    %582 = vmatprep.subr.mxu0 0.0
    %583 = vmatpush1.msra.mxu0 0.0
    %584 = vmatprep.subr.mxu0 0.0
    %585 = vmatpush1.msra.mxu0 0.0
    %586 = vmatprep.subr.mxu0 0.0
    %587 = vmatpush1.msra.mxu0 0.0
    %588 = vmatprep.subr.mxu0 0.0
    %589 = vmatpush1.msra.mxu0 0.0
    %590 = vmatprep.subr.mxu0 0.0
    %591 = vmatpush1.msra.mxu0 0.0
    %592 = vmatprep.subr.mxu0 0.0
    %593 = vmatpush1.msra.mxu0 0.0
    %594 = vmatprep.subr.mxu0 0.0
    %595 = vmatpush1.msra.mxu0 0.0
    %596 = vmatprep.mubr.f32.mxu0 0.0
    %597 = vmatmul.mubr.f32.gmra.mrb[0].mxu0 %v530
    %v598 = vpop.f32.mrb[0].mxu0
    %v599 = vadd.f32 %v204, %v598
    %v600 = vpop.f32.mrb[0].mxu0
    %601 = vdwg.mxu0
    %v603 = vsel %vm309, %v25, 0
    %605 = vmatprep.subr.mxu0 0.0
    %606 = vmatpush1.msra.mxu0 %v61
    %607 = vmatprep.subr.mxu0 0.0
    %608 = vmatpush1.msra.mxu0 %v62
    %609 = vmatprep.subr.mxu0 0.0
    %610 = vmatpush1.msra.mxu0 %v63
    %611 = vmatprep.subr.mxu0 0.0
    %612 = vmatpush1.msra.mxu0 %v64
    %613 = vmatprep.subr.mxu0 0.0
    %614 = vmatpush1.msra.mxu0 0.0
    %615 = vmatprep.subr.mxu0 0.0
    %616 = vmatpush1.msra.mxu0 0.0
    %617 = vmatprep.subr.mxu0 0.0
    %618 = vmatpush1.msra.mxu0 0.0
    %619 = vmatprep.subr.mxu0 0.0
    %620 = vmatpush1.msra.mxu0 0.0
    %621 = vmatprep.subr.mxu0 0.0
    %622 = vmatpush1.msra.mxu0 0.0
    %623 = vmatprep.subr.mxu0 0.0
    %624 = vmatpush1.msra.mxu0 0.0
    %625 = vmatprep.subr.mxu0 0.0
    %626 = vmatpush1.msra.mxu0 0.0
    %627 = vmatprep.subr.mxu0 0.0
    %628 = vmatpush1.msra.mxu0 0.0
    %629 = vmatprep.subr.mxu0 0.0
    %630 = vmatpush1.msra.mxu0 0.0
    %631 = vmatprep.subr.mxu0 0.0
    %632 = vmatpush1.msra.mxu0 0.0
    %633 = vmatprep.subr.mxu0 0.0
    %634 = vmatpush1.msra.mxu0 0.0
    %635 = vmatprep.subr.mxu0 0.0
    %636 = vmatpush1.msra.mxu0 0.0
    %637 = vmatprep.subr.mxu0 0.0
    %638 = vmatpush1.msra.mxu0 0.0
    %639 = vmatprep.subr.mxu0 0.0
    %640 = vmatpush1.msra.mxu0 0.0
    %641 = vmatprep.subr.mxu0 0.0
    %642 = vmatpush1.msra.mxu0 0.0
    %643 = vmatprep.subr.mxu0 0.0
    %644 = vmatpush1.msra.mxu0 0.0
    %645 = vmatprep.subr.mxu0 0.0
    %646 = vmatpush1.msra.mxu0 0.0
    %647 = vmatprep.subr.mxu0 0.0
    %648 = vmatpush1.msra.mxu0 0.0
    %649 = vmatprep.subr.mxu0 0.0
    %650 = vmatpush1.msra.mxu0 0.0
    %651 = vmatprep.subr.mxu0 0.0
    %652 = vmatpush1.msra.mxu0 0.0
    %653 = vmatprep.subr.mxu0 0.0
    %654 = vmatpush1.msra.mxu0 0.0
    %655 = vmatprep.subr.mxu0 0.0
    %656 = vmatpush1.msra.mxu0 0.0
    %657 = vmatprep.subr.mxu0 0.0
    %658 = vmatpush1.msra.mxu0 0.0
    %659 = vmatprep.subr.mxu0 0.0
    %660 = vmatpush1.msra.mxu0 0.0
    %661 = vmatprep.subr.mxu0 0.0
    %662 = vmatpush1.msra.mxu0 0.0
    %663 = vmatprep.subr.mxu0 0.0
    %664 = vmatpush1.msra.mxu0 0.0
    %665 = vmatprep.subr.mxu0 0.0
    %666 = vmatpush1.msra.mxu0 0.0
    %667 = vmatprep.subr.mxu0 0.0
    %668 = vmatpush1.msra.mxu0 0.0
    %669 = vmatprep.mubr.f32.mxu0 0.0
    %670 = vmatmul.mubr.f32.gmra.mrb[0].mxu0 %v603
    %v671 = vpop.f32.mrb[0].mxu0
    %v672 = vadd.f32 %v208, %v671
    %v673 = vpop.f32.mrb[0].mxu0
    %674 = vdwg.mxu0
    %v676 = vsel %vm309, %v26, 0
    %678 = vmatprep.subr.mxu0 0.0
    %679 = vmatpush1.msra.mxu0 %v65
    %680 = vmatprep.subr.mxu0 0.0
    %681 = vmatpush1.msra.mxu0 %v66
    %682 = vmatprep.subr.mxu0 0.0
    %683 = vmatpush1.msra.mxu0 %v67
    %684 = vmatprep.subr.mxu0 0.0
    %685 = vmatpush1.msra.mxu0 %v68
    %686 = vmatprep.subr.mxu0 0.0
    %687 = vmatpush1.msra.mxu0 0.0
    %688 = vmatprep.subr.mxu0 0.0
    %689 = vmatpush1.msra.mxu0 0.0
    %690 = vmatprep.subr.mxu0 0.0
    %691 = vmatpush1.msra.mxu0 0.0
    %692 = vmatprep.subr.mxu0 0.0
    %693 = vmatpush1.msra.mxu0 0.0
    %694 = vmatprep.subr.mxu0 0.0
    %695 = vmatpush1.msra.mxu0 0.0
    %696 = vmatprep.subr.mxu0 0.0
    %697 = vmatpush1.msra.mxu0 0.0
    %698 = vmatprep.subr.mxu0 0.0
    %699 = vmatpush1.msra.mxu0 0.0
    %700 = vmatprep.subr.mxu0 0.0
    %701 = vmatpush1.msra.mxu0 0.0
    %702 = vmatprep.subr.mxu0 0.0
    %703 = vmatpush1.msra.mxu0 0.0
    %704 = vmatprep.subr.mxu0 0.0
    %705 = vmatpush1.msra.mxu0 0.0
    %706 = vmatprep.subr.mxu0 0.0
    %707 = vmatpush1.msra.mxu0 0.0
    %708 = vmatprep.subr.mxu0 0.0
    %709 = vmatpush1.msra.mxu0 0.0
    %710 = vmatprep.subr.mxu0 0.0
    %711 = vmatpush1.msra.mxu0 0.0
    %712 = vmatprep.subr.mxu0 0.0
    %713 = vmatpush1.msra.mxu0 0.0
    %714 = vmatprep.subr.mxu0 0.0
    %715 = vmatpush1.msra.mxu0 0.0
    %716 = vmatprep.subr.mxu0 0.0
    %717 = vmatpush1.msra.mxu0 0.0
    %718 = vmatprep.subr.mxu0 0.0
    %719 = vmatpush1.msra.mxu0 0.0
    %720 = vmatprep.subr.mxu0 0.0
    %721 = vmatpush1.msra.mxu0 0.0
    %722 = vmatprep.subr.mxu0 0.0
    %723 = vmatpush1.msra.mxu0 0.0
    %724 = vmatprep.subr.mxu0 0.0
    %725 = vmatpush1.msra.mxu0 0.0
    %726 = vmatprep.subr.mxu0 0.0
    %727 = vmatpush1.msra.mxu0 0.0
    %728 = vmatprep.subr.mxu0 0.0
    %729 = vmatpush1.msra.mxu0 0.0
    %730 = vmatprep.subr.mxu0 0.0
    %731 = vmatpush1.msra.mxu0 0.0
    %732 = vmatprep.subr.mxu0 0.0
    %733 = vmatpush1.msra.mxu0 0.0
    %734 = vmatprep.subr.mxu0 0.0
    %735 = vmatpush1.msra.mxu0 0.0
    %736 = vmatprep.subr.mxu0 0.0
    %737 = vmatpush1.msra.mxu0 0.0
    %738 = vmatprep.subr.mxu0 0.0
    %739 = vmatpush1.msra.mxu0 0.0
    %740 = vmatprep.subr.mxu0 0.0
    %741 = vmatpush1.msra.mxu0 0.0
    %742 = vmatprep.mubr.f32.mxu0 0.0
    %743 = vmatmul.mubr.f32.gmra.mrb[0].mxu0 %v676
    %v744 = vpop.f32.mrb[0].mxu0
    %v745 = vadd.f32 %v212, %v744
    %v746 = vpop.f32.mrb[0].mxu0
    %747 = vdwg.mxu0
    %v749 = vsel %vm309, %v27, 0
    %751 = vmatprep.subr.mxu0 0.0
    %752 = vmatpush1.msra.mxu0 %v69
    %753 = vmatprep.subr.mxu0 0.0
    %754 = vmatpush1.msra.mxu0 %v70
    %755 = vmatprep.subr.mxu0 0.0
    %756 = vmatpush1.msra.mxu0 %v71
    %757 = vmatprep.subr.mxu0 0.0
    %758 = vmatpush1.msra.mxu0 %v72
    %759 = vmatprep.subr.mxu0 0.0
    %760 = vmatpush1.msra.mxu0 0.0
    %761 = vmatprep.subr.mxu0 0.0
    %762 = vmatpush1.msra.mxu0 0.0
    %763 = vmatprep.subr.mxu0 0.0
    %764 = vmatpush1.msra.mxu0 0.0
    %765 = vmatprep.subr.mxu0 0.0
    %766 = vmatpush1.msra.mxu0 0.0
    %767 = vmatprep.subr.mxu0 0.0
    %768 = vmatpush1.msra.mxu0 0.0
    %769 = vmatprep.subr.mxu0 0.0
    %770 = vmatpush1.msra.mxu0 0.0
    %771 = vmatprep.subr.mxu0 0.0
    %772 = vmatpush1.msra.mxu0 0.0
    %773 = vmatprep.subr.mxu0 0.0
    %774 = vmatpush1.msra.mxu0 0.0
    %775 = vmatprep.subr.mxu0 0.0
    %776 = vmatpush1.msra.mxu0 0.0
    %777 = vmatprep.subr.mxu0 0.0
    %778 = vmatpush1.msra.mxu0 0.0
    %779 = vmatprep.subr.mxu0 0.0
    %780 = vmatpush1.msra.mxu0 0.0
    %781 = vmatprep.subr.mxu0 0.0
    %782 = vmatpush1.msra.mxu0 0.0
    %783 = vmatprep.subr.mxu0 0.0
    %784 = vmatpush1.msra.mxu0 0.0
    %785 = vmatprep.subr.mxu0 0.0
    %786 = vmatpush1.msra.mxu0 0.0
    %787 = vmatprep.subr.mxu0 0.0
    %788 = vmatpush1.msra.mxu0 0.0
    %789 = vmatprep.subr.mxu0 0.0
    %790 = vmatpush1.msra.mxu0 0.0
    %791 = vmatprep.subr.mxu0 0.0
    %792 = vmatpush1.msra.mxu0 0.0
    %793 = vmatprep.subr.mxu0 0.0
    %794 = vmatpush1.msra.mxu0 0.0
    %795 = vmatprep.subr.mxu0 0.0
    %796 = vmatpush1.msra.mxu0 0.0
    %797 = vmatprep.subr.mxu0 0.0
    %798 = vmatpush1.msra.mxu0 0.0
    %799 = vmatprep.subr.mxu0 0.0
    %800 = vmatpush1.msra.mxu0 0.0
    %801 = vmatprep.subr.mxu0 0.0
    %802 = vmatpush1.msra.mxu0 0.0
    %803 = vmatprep.subr.mxu0 0.0
    %804 = vmatpush1.msra.mxu0 0.0
    %805 = vmatprep.subr.mxu0 0.0
    %806 = vmatpush1.msra.mxu0 0.0
    %807 = vmatprep.subr.mxu0 0.0
    %808 = vmatpush1.msra.mxu0 0.0
    %809 = vmatprep.subr.mxu0 0.0
    %810 = vmatpush1.msra.mxu0 0.0
    %811 = vmatprep.subr.mxu0 0.0
    %812 = vmatpush1.msra.mxu0 0.0
    %813 = vmatprep.subr.mxu0 0.0
    %814 = vmatpush1.msra.mxu0 0.0
    %815 = vmatprep.mubr.f32.mxu0 0.0
    %816 = vmatmul.mubr.f32.gmra.mrb[0].mxu0 %v749
    %v817 = vpop.f32.mrb[0].mxu0
    %v818 = vadd.f32 %v216, %v817
    %v819 = vpop.f32.mrb[0].mxu0
    %820 = vdwg.mxu0
    %v822 = vsel %vm309, %v28, 0
    %824 = vmatprep.subr.mxu0 0.0
    %825 = vmatpush1.msra.mxu0 %v73
    %826 = vmatprep.subr.mxu0 0.0
    %827 = vmatpush1.msra.mxu0 %v74
    %828 = vmatprep.subr.mxu0 0.0
    %829 = vmatpush1.msra.mxu0 %v75
    %830 = vmatprep.subr.mxu0 0.0
    %831 = vmatpush1.msra.mxu0 %v76
    %832 = vmatprep.subr.mxu0 0.0
    %833 = vmatpush1.msra.mxu0 0.0
    %834 = vmatprep.subr.mxu0 0.0
    %835 = vmatpush1.msra.mxu0 0.0
    %836 = vmatprep.subr.mxu0 0.0
    %837 = vmatpush1.msra.mxu0 0.0
    %838 = vmatprep.subr.mxu0 0.0
    %839 = vmatpush1.msra.mxu0 0.0
    %840 = vmatprep.subr.mxu0 0.0
    %841 = vmatpush1.msra.mxu0 0.0
    %842 = vmatprep.subr.mxu0 0.0
    %843 = vmatpush1.msra.mxu0 0.0
    %844 = vmatprep.subr.mxu0 0.0
    %845 = vmatpush1.msra.mxu0 0.0
    %846 = vmatprep.subr.mxu0 0.0
    %847 = vmatpush1.msra.mxu0 0.0
    %848 = vmatprep.subr.mxu0 0.0
    %849 = vmatpush1.msra.mxu0 0.0
    %850 = vmatprep.subr.mxu0 0.0
    %851 = vmatpush1.msra.mxu0 0.0
    %852 = vmatprep.subr.mxu0 0.0
    %853 = vmatpush1.msra.mxu0 0.0
    %854 = vmatprep.subr.mxu0 0.0
    %855 = vmatpush1.msra.mxu0 0.0
    %856 = vmatprep.subr.mxu0 0.0
    %857 = vmatpush1.msra.mxu0 0.0
    %858 = vmatprep.subr.mxu0 0.0
    %859 = vmatpush1.msra.mxu0 0.0
    %860 = vmatprep.subr.mxu0 0.0
    %861 = vmatpush1.msra.mxu0 0.0
    %862 = vmatprep.subr.mxu0 0.0
    %863 = vmatpush1.msra.mxu0 0.0
    %864 = vmatprep.subr.mxu0 0.0
    %865 = vmatpush1.msra.mxu0 0.0
    %866 = vmatprep.subr.mxu0 0.0
    %867 = vmatpush1.msra.mxu0 0.0
    %868 = vmatprep.subr.mxu0 0.0
    %869 = vmatpush1.msra.mxu0 0.0
    %870 = vmatprep.subr.mxu0 0.0
    %871 = vmatpush1.msra.mxu0 0.0
    %872 = vmatprep.subr.mxu0 0.0
    %873 = vmatpush1.msra.mxu0 0.0
    %874 = vmatprep.subr.mxu0 0.0
    %875 = vmatpush1.msra.mxu0 0.0
    %876 = vmatprep.subr.mxu0 0.0
    %877 = vmatpush1.msra.mxu0 0.0
    %878 = vmatprep.subr.mxu0 0.0
    %879 = vmatpush1.msra.mxu0 0.0
    %880 = vmatprep.subr.mxu0 0.0
    %881 = vmatpush1.msra.mxu0 0.0
    %882 = vmatprep.subr.mxu0 0.0
    %883 = vmatpush1.msra.mxu0 0.0
    %884 = vmatprep.subr.mxu0 0.0
    %885 = vmatpush1.msra.mxu0 0.0
    %886 = vmatprep.subr.mxu0 0.0
    %887 = vmatpush1.msra.mxu0 0.0
    %888 = vmatprep.mubr.f32.mxu0 0.0
    %889 = vmatmul.mubr.f32.gmra.mrb[0].mxu0 %v822
    %v890 = vpop.f32.mrb[0].mxu0
    %v891 = vadd.f32 %v220, %v890
    %v892 = vpop.f32.mrb[0].mxu0
    %893 = vdwg.mxu0
    %v895 = vsel %vm309, %v29, 0
    %897 = vmatprep.subr.mxu0 0.0
    %898 = vmatpush1.msra.mxu0 %v77
    %899 = vmatprep.subr.mxu0 0.0
    %900 = vmatpush1.msra.mxu0 %v78
    %901 = vmatprep.subr.mxu0 0.0
    %902 = vmatpush1.msra.mxu0 %v79
    %903 = vmatprep.subr.mxu0 0.0
    %904 = vmatpush1.msra.mxu0 %v80
    %905 = vmatprep.subr.mxu0 0.0
    %906 = vmatpush1.msra.mxu0 0.0
    %907 = vmatprep.subr.mxu0 0.0
    %908 = vmatpush1.msra.mxu0 0.0
    %909 = vmatprep.subr.mxu0 0.0
    %910 = vmatpush1.msra.mxu0 0.0
    %911 = vmatprep.subr.mxu0 0.0
    %912 = vmatpush1.msra.mxu0 0.0
    %913 = vmatprep.subr.mxu0 0.0
    %914 = vmatpush1.msra.mxu0 0.0
    %915 = vmatprep.subr.mxu0 0.0
    %916 = vmatpush1.msra.mxu0 0.0
    %917 = vmatprep.subr.mxu0 0.0
    %918 = vmatpush1.msra.mxu0 0.0
    %919 = vmatprep.subr.mxu0 0.0
    %920 = vmatpush1.msra.mxu0 0.0
    %921 = vmatprep.subr.mxu0 0.0
    %922 = vmatpush1.msra.mxu0 0.0
    %923 = vmatprep.subr.mxu0 0.0
    %924 = vmatpush1.msra.mxu0 0.0
    %925 = vmatprep.subr.mxu0 0.0
    %926 = vmatpush1.msra.mxu0 0.0
    %927 = vmatprep.subr.mxu0 0.0
    %928 = vmatpush1.msra.mxu0 0.0
    %929 = vmatprep.subr.mxu0 0.0
    %930 = vmatpush1.msra.mxu0 0.0
    %931 = vmatprep.subr.mxu0 0.0
    %932 = vmatpush1.msra.mxu0 0.0
    %933 = vmatprep.subr.mxu0 0.0
    %934 = vmatpush1.msra.mxu0 0.0
    %935 = vmatprep.subr.mxu0 0.0
    %936 = vmatpush1.msra.mxu0 0.0
    %937 = vmatprep.subr.mxu0 0.0
    %938 = vmatpush1.msra.mxu0 0.0
    %939 = vmatprep.subr.mxu0 0.0
    %940 = vmatpush1.msra.mxu0 0.0
    %941 = vmatprep.subr.mxu0 0.0
    %942 = vmatpush1.msra.mxu0 0.0
    %943 = vmatprep.subr.mxu0 0.0
    %944 = vmatpush1.msra.mxu0 0.0
    %945 = vmatprep.subr.mxu0 0.0
    %946 = vmatpush1.msra.mxu0 0.0
    %947 = vmatprep.subr.mxu0 0.0
    %948 = vmatpush1.msra.mxu0 0.0
    %949 = vmatprep.subr.mxu0 0.0
    %950 = vmatpush1.msra.mxu0 0.0
    %951 = vmatprep.subr.mxu0 0.0
    %952 = vmatpush1.msra.mxu0 0.0
    %953 = vmatprep.subr.mxu0 0.0
    %954 = vmatpush1.msra.mxu0 0.0
    %955 = vmatprep.subr.mxu0 0.0
    %956 = vmatpush1.msra.mxu0 0.0
    %957 = vmatprep.subr.mxu0 0.0
    %958 = vmatpush1.msra.mxu0 0.0
    %959 = vmatprep.subr.mxu0 0.0
    %960 = vmatpush1.msra.mxu0 0.0
    %961 = vmatprep.mubr.f32.mxu0 0.0
    %962 = vmatmul.mubr.f32.gmra.mrb[0].mxu0 %v895
    %v963 = vpop.f32.mrb[0].mxu0
    %v964 = vadd.f32 %v224, %v963
    %v965 = vpop.f32.mrb[0].mxu0
    %966 = vdwg.mxu0
    %v968 = vsel %vm309, %v30, 0
    %970 = vmatprep.subr.mxu0 0.0
    %971 = vmatpush1.msra.mxu0 %v81
    %972 = vmatprep.subr.mxu0 0.0
    %973 = vmatpush1.msra.mxu0 %v82
    %974 = vmatprep.subr.mxu0 0.0
    %975 = vmatpush1.msra.mxu0 %v83
    %976 = vmatprep.subr.mxu0 0.0
    %977 = vmatpush1.msra.mxu0 %v84
    %978 = vmatprep.subr.mxu0 0.0
    %979 = vmatpush1.msra.mxu0 0.0
    %980 = vmatprep.subr.mxu0 0.0
    %981 = vmatpush1.msra.mxu0 0.0
    %982 = vmatprep.subr.mxu0 0.0
    %983 = vmatpush1.msra.mxu0 0.0
    %984 = vmatprep.subr.mxu0 0.0
    %985 = vmatpush1.msra.mxu0 0.0
    %986 = vmatprep.subr.mxu0 0.0
    %987 = vmatpush1.msra.mxu0 0.0
    %988 = vmatprep.subr.mxu0 0.0
    %989 = vmatpush1.msra.mxu0 0.0
    %990 = vmatprep.subr.mxu0 0.0
    %991 = vmatpush1.msra.mxu0 0.0
    %992 = vmatprep.subr.mxu0 0.0
    %993 = vmatpush1.msra.mxu0 0.0
    %994 = vmatprep.subr.mxu0 0.0
    %995 = vmatpush1.msra.mxu0 0.0
    %996 = vmatprep.subr.mxu0 0.0
    %997 = vmatpush1.msra.mxu0 0.0
    %998 = vmatprep.subr.mxu0 0.0
    %999 = vmatpush1.msra.mxu0 0.0
    %1000 = vmatprep.subr.mxu0 0.0
    %1001 = vmatpush1.msra.mxu0 0.0
    %1002 = vmatprep.subr.mxu0 0.0
    %1003 = vmatpush1.msra.mxu0 0.0
    %1004 = vmatprep.subr.mxu0 0.0
    %1005 = vmatpush1.msra.mxu0 0.0
    %1006 = vmatprep.subr.mxu0 0.0
    %1007 = vmatpush1.msra.mxu0 0.0
    %1008 = vmatprep.subr.mxu0 0.0
    %1009 = vmatpush1.msra.mxu0 0.0
    %1010 = vmatprep.subr.mxu0 0.0
    %1011 = vmatpush1.msra.mxu0 0.0
    %1012 = vmatprep.subr.mxu0 0.0
    %1013 = vmatpush1.msra.mxu0 0.0
    %1014 = vmatprep.subr.mxu0 0.0
    %1015 = vmatpush1.msra.mxu0 0.0
    %1016 = vmatprep.subr.mxu0 0.0
    %1017 = vmatpush1.msra.mxu0 0.0
    %1018 = vmatprep.subr.mxu0 0.0
    %1019 = vmatpush1.msra.mxu0 0.0
    %1020 = vmatprep.subr.mxu0 0.0
    %1021 = vmatpush1.msra.mxu0 0.0
    %1022 = vmatprep.subr.mxu0 0.0
    %1023 = vmatpush1.msra.mxu0 0.0
    %1024 = vmatprep.subr.mxu0 0.0
    %1025 = vmatpush1.msra.mxu0 0.0
    %1026 = vmatprep.subr.mxu0 0.0
    %1027 = vmatpush1.msra.mxu0 0.0
    %1028 = vmatprep.subr.mxu0 0.0
    %1029 = vmatpush1.msra.mxu0 0.0
    %1030 = vmatprep.subr.mxu0 0.0
    %1031 = vmatpush1.msra.mxu0 0.0
    %1032 = vmatprep.subr.mxu0 0.0
    %1033 = vmatpush1.msra.mxu0 0.0
    %1034 = vmatprep.mubr.f32.mxu0 0.0
    %1035 = vmatmul.mubr.f32.gmra.mrb[0].mxu0 %v968
    %v1036 = vpop.f32.mrb[0].mxu0
    %v1037 = vadd.f32 %v228, %v1036
    %v1038 = vpop.f32.mrb[0].mxu0
    %1039 = vdwg.mxu0
    %v1041 = vsel %vm309, %v31, 0
    %1043 = vmatprep.subr.mxu0 0.0
    %1044 = vmatpush1.msra.mxu0 %v85
    %1045 = vmatprep.subr.mxu0 0.0
    %1046 = vmatpush1.msra.mxu0 %v86
    %1047 = vmatprep.subr.mxu0 0.0
    %1048 = vmatpush1.msra.mxu0 %v87
    %1049 = vmatprep.subr.mxu0 0.0
    %1050 = vmatpush1.msra.mxu0 %v88
    %1051 = vmatprep.subr.mxu0 0.0
    %1052 = vmatpush1.msra.mxu0 0.0
    %1053 = vmatprep.subr.mxu0 0.0
    %1054 = vmatpush1.msra.mxu0 0.0
    %1055 = vmatprep.subr.mxu0 0.0
    %1056 = vmatpush1.msra.mxu0 0.0
    %1057 = vmatprep.subr.mxu0 0.0
    %1058 = vmatpush1.msra.mxu0 0.0
    %1059 = vmatprep.subr.mxu0 0.0
    %1060 = vmatpush1.msra.mxu0 0.0
    %1061 = vmatprep.subr.mxu0 0.0
    %1062 = vmatpush1.msra.mxu0 0.0
    %1063 = vmatprep.subr.mxu0 0.0
    %1064 = vmatpush1.msra.mxu0 0.0
    %1065 = vmatprep.subr.mxu0 0.0
    %1066 = vmatpush1.msra.mxu0 0.0
    %1067 = vmatprep.subr.mxu0 0.0
    %1068 = vmatpush1.msra.mxu0 0.0
    %1069 = vmatprep.subr.mxu0 0.0
    %1070 = vmatpush1.msra.mxu0 0.0
    %1071 = vmatprep.subr.mxu0 0.0
    %1072 = vmatpush1.msra.mxu0 0.0
    %1073 = vmatprep.subr.mxu0 0.0
    %1074 = vmatpush1.msra.mxu0 0.0
    %1075 = vmatprep.subr.mxu0 0.0
    %1076 = vmatpush1.msra.mxu0 0.0
    %1077 = vmatprep.subr.mxu0 0.0
    %1078 = vmatpush1.msra.mxu0 0.0
    %1079 = vmatprep.subr.mxu0 0.0
    %1080 = vmatpush1.msra.mxu0 0.0
    %1081 = vmatprep.subr.mxu0 0.0
    %1082 = vmatpush1.msra.mxu0 0.0
    %1083 = vmatprep.subr.mxu0 0.0
    %1084 = vmatpush1.msra.mxu0 0.0
    %1085 = vmatprep.subr.mxu0 0.0
    %1086 = vmatpush1.msra.mxu0 0.0
    %1087 = vmatprep.subr.mxu0 0.0
    %1088 = vmatpush1.msra.mxu0 0.0
    %1089 = vmatprep.subr.mxu0 0.0
    %1090 = vmatpush1.msra.mxu0 0.0
    %1091 = vmatprep.subr.mxu0 0.0
    %1092 = vmatpush1.msra.mxu0 0.0
    %1093 = vmatprep.subr.mxu0 0.0
    %1094 = vmatpush1.msra.mxu0 0.0
    %1095 = vmatprep.subr.mxu0 0.0
    %1096 = vmatpush1.msra.mxu0 0.0
    %1097 = vmatprep.subr.mxu0 0.0
    %1098 = vmatpush1.msra.mxu0 0.0
    %1099 = vmatprep.subr.mxu0 0.0
    %1100 = vmatpush1.msra.mxu0 0.0
    %1101 = vmatprep.subr.mxu0 0.0
    %1102 = vmatpush1.msra.mxu0 0.0
    %1103 = vmatprep.subr.mxu0 0.0
    %1104 = vmatpush1.msra.mxu0 0.0
    %1105 = vmatprep.subr.mxu0 0.0
    %1106 = vmatpush1.msra.mxu0 0.0
    %1107 = vmatprep.mubr.f32.mxu0 0.0
    %1108 = vmatmul.mubr.f32.gmra.mrb[0].mxu0 %v1041
    %v1109 = vpop.f32.mrb[0].mxu0
    %v1110 = vadd.f32 %v232, %v1109
    %v1111 = vpop.f32.mrb[0].mxu0
    %1112 = vdwg.mxu0
    %v1114 = vsel %vm309, %v32, 0
    %1116 = vmatprep.subr.mxu0 0.0
    %1117 = vmatpush1.msra.mxu0 %v89
    %1118 = vmatprep.subr.mxu0 0.0
    %1119 = vmatpush1.msra.mxu0 %v90
    %1120 = vmatprep.subr.mxu0 0.0
    %1121 = vmatpush1.msra.mxu0 %v91
    %1122 = vmatprep.subr.mxu0 0.0
    %1123 = vmatpush1.msra.mxu0 %v92
    %1124 = vmatprep.subr.mxu0 0.0
    %1125 = vmatpush1.msra.mxu0 0.0
    %1126 = vmatprep.subr.mxu0 0.0
    %1127 = vmatpush1.msra.mxu0 0.0
    %1128 = vmatprep.subr.mxu0 0.0
    %1129 = vmatpush1.msra.mxu0 0.0
    %1130 = vmatprep.subr.mxu0 0.0
    %1131 = vmatpush1.msra.mxu0 0.0
    %1132 = vmatprep.subr.mxu0 0.0
    %1133 = vmatpush1.msra.mxu0 0.0
    %1134 = vmatprep.subr.mxu0 0.0
    %1135 = vmatpush1.msra.mxu0 0.0
    %1136 = vmatprep.subr.mxu0 0.0
    %1137 = vmatpush1.msra.mxu0 0.0
    %1138 = vmatprep.subr.mxu0 0.0
    %1139 = vmatpush1.msra.mxu0 0.0
    %1140 = vmatprep.subr.mxu0 0.0
    %1141 = vmatpush1.msra.mxu0 0.0
    %1142 = vmatprep.subr.mxu0 0.0
    %1143 = vmatpush1.msra.mxu0 0.0
    %1144 = vmatprep.subr.mxu0 0.0
    %1145 = vmatpush1.msra.mxu0 0.0
    %1146 = vmatprep.subr.mxu0 0.0
    %1147 = vmatpush1.msra.mxu0 0.0
    %1148 = vmatprep.subr.mxu0 0.0
    %1149 = vmatpush1.msra.mxu0 0.0
    %1150 = vmatprep.subr.mxu0 0.0
    %1151 = vmatpush1.msra.mxu0 0.0
    %1152 = vmatprep.subr.mxu0 0.0
    %1153 = vmatpush1.msra.mxu0 0.0
    %1154 = vmatprep.subr.mxu0 0.0
    %1155 = vmatpush1.msra.mxu0 0.0
    %1156 = vmatprep.subr.mxu0 0.0
    %1157 = vmatpush1.msra.mxu0 0.0
    %1158 = vmatprep.subr.mxu0 0.0
    %1159 = vmatpush1.msra.mxu0 0.0
    %1160 = vmatprep.subr.mxu0 0.0
    %1161 = vmatpush1.msra.mxu0 0.0
    %1162 = vmatprep.subr.mxu0 0.0
    %1163 = vmatpush1.msra.mxu0 0.0
    %1164 = vmatprep.subr.mxu0 0.0
    %1165 = vmatpush1.msra.mxu0 0.0
    %1166 = vmatprep.subr.mxu0 0.0
    %1167 = vmatpush1.msra.mxu0 0.0
    %1168 = vmatprep.subr.mxu0 0.0
    %1169 = vmatpush1.msra.mxu0 0.0
    %1170 = vmatprep.subr.mxu0 0.0
    %1171 = vmatpush1.msra.mxu0 0.0
    %1172 = vmatprep.subr.mxu0 0.0
    %1173 = vmatpush1.msra.mxu0 0.0
    %1174 = vmatprep.subr.mxu0 0.0
    %1175 = vmatpush1.msra.mxu0 0.0
    %1176 = vmatprep.subr.mxu0 0.0
    %1177 = vmatpush1.msra.mxu0 0.0
    %1178 = vmatprep.subr.mxu0 0.0
    %1179 = vmatpush1.msra.mxu0 0.0
    %1180 = vmatprep.mubr.f32.mxu0 0.0
    %1181 = vmatmul.mubr.f32.gmra.mrb[0].mxu0 %v1114
    %v1182 = vpop.f32.mrb[0].mxu0
    %v1183 = vadd.f32 %v236, %v1182
    %v1184 = vpop.f32.mrb[0].mxu0
    %1185 = vdwg.mxu0
    %v1187 = vsel %vm309, %v33, 0
    %1189 = vmatprep.subr.mxu0 0.0
    %1190 = vmatpush1.msra.mxu0 %v93
    %1191 = vmatprep.subr.mxu0 0.0
    %1192 = vmatpush1.msra.mxu0 %v94
    %1193 = vmatprep.subr.mxu0 0.0
    %1194 = vmatpush1.msra.mxu0 %v95
    %1195 = vmatprep.subr.mxu0 0.0
    %1196 = vmatpush1.msra.mxu0 %v96
    %1197 = vmatprep.subr.mxu0 0.0
    %1198 = vmatpush1.msra.mxu0 0.0
    %1199 = vmatprep.subr.mxu0 0.0
    %1200 = vmatpush1.msra.mxu0 0.0
    %1201 = vmatprep.subr.mxu0 0.0
    %1202 = vmatpush1.msra.mxu0 0.0
    %1203 = vmatprep.subr.mxu0 0.0
    %1204 = vmatpush1.msra.mxu0 0.0
    %1205 = vmatprep.subr.mxu0 0.0
    %1206 = vmatpush1.msra.mxu0 0.0
    %1207 = vmatprep.subr.mxu0 0.0
    %1208 = vmatpush1.msra.mxu0 0.0
    %1209 = vmatprep.subr.mxu0 0.0
    %1210 = vmatpush1.msra.mxu0 0.0
    %1211 = vmatprep.subr.mxu0 0.0
    %1212 = vmatpush1.msra.mxu0 0.0
    %1213 = vmatprep.subr.mxu0 0.0
    %1214 = vmatpush1.msra.mxu0 0.0
    %1215 = vmatprep.subr.mxu0 0.0
    %1216 = vmatpush1.msra.mxu0 0.0
    %1217 = vmatprep.subr.mxu0 0.0
    %1218 = vmatpush1.msra.mxu0 0.0
    %1219 = vmatprep.subr.mxu0 0.0
    %1220 = vmatpush1.msra.mxu0 0.0
    %1221 = vmatprep.subr.mxu0 0.0
    %1222 = vmatpush1.msra.mxu0 0.0
    %1223 = vmatprep.subr.mxu0 0.0
    %1224 = vmatpush1.msra.mxu0 0.0
    %1225 = vmatprep.subr.mxu0 0.0
    %1226 = vmatpush1.msra.mxu0 0.0
    %1227 = vmatprep.subr.mxu0 0.0
    %1228 = vmatpush1.msra.mxu0 0.0
    %1229 = vmatprep.subr.mxu0 0.0
    %1230 = vmatpush1.msra.mxu0 0.0
    %1231 = vmatprep.subr.mxu0 0.0
    %1232 = vmatpush1.msra.mxu0 0.0
    %1233 = vmatprep.subr.mxu0 0.0
    %1234 = vmatpush1.msra.mxu0 0.0
    %1235 = vmatprep.subr.mxu0 0.0
    %1236 = vmatpush1.msra.mxu0 0.0
    %1237 = vmatprep.subr.mxu0 0.0
    %1238 = vmatpush1.msra.mxu0 0.0
    %1239 = vmatprep.subr.mxu0 0.0
    %1240 = vmatpush1.msra.mxu0 0.0
    %1241 = vmatprep.subr.mxu0 0.0
    %1242 = vmatpush1.msra.mxu0 0.0
    %1243 = vmatprep.subr.mxu0 0.0
    %1244 = vmatpush1.msra.mxu0 0.0
    %1245 = vmatprep.subr.mxu0 0.0
    %1246 = vmatpush1.msra.mxu0 0.0
    %1247 = vmatprep.subr.mxu0 0.0
    %1248 = vmatpush1.msra.mxu0 0.0
    %1249 = vmatprep.subr.mxu0 0.0
    %1250 = vmatpush1.msra.mxu0 0.0
    %1251 = vmatprep.subr.mxu0 0.0
    %1252 = vmatpush1.msra.mxu0 0.0
    %1253 = vmatprep.mubr.f32.mxu0 0.0
    %1254 = vmatmul.mubr.f32.gmra.mrb[0].mxu0 %v1187
    %v1255 = vpop.f32.mrb[0].mxu0
    %v1256 = vadd.f32 %v240, %v1255
    %v1257 = vpop.f32.mrb[0].mxu0
    %1258 = vdwg.mxu0
    %v1260 = vsel %vm309, %v34, 0
    %1262 = vmatprep.subr.mxu0 0.0
    %1263 = vmatpush1.msra.mxu0 %v97
    %1264 = vmatprep.subr.mxu0 0.0
    %1265 = vmatpush1.msra.mxu0 %v98
    %1266 = vmatprep.subr.mxu0 0.0
    %1267 = vmatpush1.msra.mxu0 %v99
    %1268 = vmatprep.subr.mxu0 0.0
    %1269 = vmatpush1.msra.mxu0 %v100
    %1270 = vmatprep.subr.mxu0 0.0
    %1271 = vmatpush1.msra.mxu0 0.0
    %1272 = vmatprep.subr.mxu0 0.0
    %1273 = vmatpush1.msra.mxu0 0.0
    %1274 = vmatprep.subr.mxu0 0.0
    %1275 = vmatpush1.msra.mxu0 0.0
    %1276 = vmatprep.subr.mxu0 0.0
    %1277 = vmatpush1.msra.mxu0 0.0
    %1278 = vmatprep.subr.mxu0 0.0
    %1279 = vmatpush1.msra.mxu0 0.0
    %1280 = vmatprep.subr.mxu0 0.0
    %1281 = vmatpush1.msra.mxu0 0.0
    %1282 = vmatprep.subr.mxu0 0.0
    %1283 = vmatpush1.msra.mxu0 0.0
    %1284 = vmatprep.subr.mxu0 0.0
    %1285 = vmatpush1.msra.mxu0 0.0
    %1286 = vmatprep.subr.mxu0 0.0
    %1287 = vmatpush1.msra.mxu0 0.0
    %1288 = vmatprep.subr.mxu0 0.0
    %1289 = vmatpush1.msra.mxu0 0.0
    %1290 = vmatprep.subr.mxu0 0.0
    %1291 = vmatpush1.msra.mxu0 0.0
    %1292 = vmatprep.subr.mxu0 0.0
    %1293 = vmatpush1.msra.mxu0 0.0
    %1294 = vmatprep.subr.mxu0 0.0
    %1295 = vmatpush1.msra.mxu0 0.0
    %1296 = vmatprep.subr.mxu0 0.0
    %1297 = vmatpush1.msra.mxu0 0.0
    %1298 = vmatprep.subr.mxu0 0.0
    %1299 = vmatpush1.msra.mxu0 0.0
    %1300 = vmatprep.subr.mxu0 0.0
    %1301 = vmatpush1.msra.mxu0 0.0
    %1302 = vmatprep.subr.mxu0 0.0
    %1303 = vmatpush1.msra.mxu0 0.0
    %1304 = vmatprep.subr.mxu0 0.0
    %1305 = vmatpush1.msra.mxu0 0.0
    %1306 = vmatprep.subr.mxu0 0.0
    %1307 = vmatpush1.msra.mxu0 0.0
    %1308 = vmatprep.subr.mxu0 0.0
    %1309 = vmatpush1.msra.mxu0 0.0
    %1310 = vmatprep.subr.mxu0 0.0
    %1311 = vmatpush1.msra.mxu0 0.0
    %1312 = vmatprep.subr.mxu0 0.0
    %1313 = vmatpush1.msra.mxu0 0.0
    %1314 = vmatprep.subr.mxu0 0.0
    %1315 = vmatpush1.msra.mxu0 0.0
    %1316 = vmatprep.subr.mxu0 0.0
    %1317 = vmatpush1.msra.mxu0 0.0
    %1318 = vmatprep.subr.mxu0 0.0
    %1319 = vmatpush1.msra.mxu0 0.0
    %1320 = vmatprep.subr.mxu0 0.0
    %1321 = vmatpush1.msra.mxu0 0.0
    %1322 = vmatprep.subr.mxu0 0.0
    %1323 = vmatpush1.msra.mxu0 0.0
    %1324 = vmatprep.subr.mxu0 0.0
    %1325 = vmatpush1.msra.mxu0 0.0
    %1326 = vmatprep.mubr.f32.mxu0 0.0
    %1327 = vmatmul.mubr.f32.gmra.mrb[0].mxu0 %v1260
    %v1328 = vpop.f32.mrb[0].mxu0
    %v1329 = vadd.f32 %v244, %v1328
    %v1330 = vpop.f32.mrb[0].mxu0
    %1331 = vdwg.mxu0
    %v1333 = vsel %vm309, %v35, 0
    %1335 = vmatprep.subr.mxu0 0.0
    %1336 = vmatpush1.msra.mxu0 %v101
    %1337 = vmatprep.subr.mxu0 0.0
    %1338 = vmatpush1.msra.mxu0 %v102
    %1339 = vmatprep.subr.mxu0 0.0
    %1340 = vmatpush1.msra.mxu0 %v103
    %1341 = vmatprep.subr.mxu0 0.0
    %1342 = vmatpush1.msra.mxu0 %v104
    %1343 = vmatprep.subr.mxu0 0.0
    %1344 = vmatpush1.msra.mxu0 0.0
    %1345 = vmatprep.subr.mxu0 0.0
    %1346 = vmatpush1.msra.mxu0 0.0
    %1347 = vmatprep.subr.mxu0 0.0
    %1348 = vmatpush1.msra.mxu0 0.0
    %1349 = vmatprep.subr.mxu0 0.0
    %1350 = vmatpush1.msra.mxu0 0.0
    %1351 = vmatprep.subr.mxu0 0.0
    %1352 = vmatpush1.msra.mxu0 0.0
    %1353 = vmatprep.subr.mxu0 0.0
    %1354 = vmatpush1.msra.mxu0 0.0
    %1355 = vmatprep.subr.mxu0 0.0
    %1356 = vmatpush1.msra.mxu0 0.0
    %1357 = vmatprep.subr.mxu0 0.0
    %1358 = vmatpush1.msra.mxu0 0.0
    %1359 = vmatprep.subr.mxu0 0.0
    %1360 = vmatpush1.msra.mxu0 0.0
    %1361 = vmatprep.subr.mxu0 0.0
    %1362 = vmatpush1.msra.mxu0 0.0
    %1363 = vmatprep.subr.mxu0 0.0
    %1364 = vmatpush1.msra.mxu0 0.0
    %1365 = vmatprep.subr.mxu0 0.0
    %1366 = vmatpush1.msra.mxu0 0.0
    %1367 = vmatprep.subr.mxu0 0.0
    %1368 = vmatpush1.msra.mxu0 0.0
    %1369 = vmatprep.subr.mxu0 0.0
    %1370 = vmatpush1.msra.mxu0 0.0
    %1371 = vmatprep.subr.mxu0 0.0
    %1372 = vmatpush1.msra.mxu0 0.0
    %1373 = vmatprep.subr.mxu0 0.0
    %1374 = vmatpush1.msra.mxu0 0.0
    %1375 = vmatprep.subr.mxu0 0.0
    %1376 = vmatpush1.msra.mxu0 0.0
    %1377 = vmatprep.subr.mxu0 0.0
    %1378 = vmatpush1.msra.mxu0 0.0
    %1379 = vmatprep.subr.mxu0 0.0
    %1380 = vmatpush1.msra.mxu0 0.0
    %1381 = vmatprep.subr.mxu0 0.0
    %1382 = vmatpush1.msra.mxu0 0.0
    %1383 = vmatprep.subr.mxu0 0.0
    %1384 = vmatpush1.msra.mxu0 0.0
    %1385 = vmatprep.subr.mxu0 0.0
    %1386 = vmatpush1.msra.mxu0 0.0
    %1387 = vmatprep.subr.mxu0 0.0
    %1388 = vmatpush1.msra.mxu0 0.0
    %1389 = vmatprep.subr.mxu0 0.0
    %1390 = vmatpush1.msra.mxu0 0.0
    %1391 = vmatprep.subr.mxu0 0.0
    %1392 = vmatpush1.msra.mxu0 0.0
    %1393 = vmatprep.subr.mxu0 0.0
    %1394 = vmatpush1.msra.mxu0 0.0
    %1395 = vmatprep.subr.mxu0 0.0
    %1396 = vmatpush1.msra.mxu0 0.0
    %1397 = vmatprep.subr.mxu0 0.0
    %1398 = vmatpush1.msra.mxu0 0.0
    %1399 = vmatprep.mubr.f32.mxu0 0.0
    %1400 = vmatmul.mubr.f32.gmra.mrb[0].mxu0 %v1333
    %v1401 = vpop.f32.mrb[0].mxu0
    %v1402 = vadd.f32 %v248, %v1401
    %v1403 = vpop.f32.mrb[0].mxu0
    %1404 = vdwg.mxu0
    %v1406 = vsel %vm309, %v36, 0
    %1408 = vmatprep.subr.mxu0 0.0
    %1409 = vmatpush1.msra.mxu0 %v105
    %1410 = vmatprep.subr.mxu0 0.0
    %1411 = vmatpush1.msra.mxu0 %v106
    %1412 = vmatprep.subr.mxu0 0.0
    %1413 = vmatpush1.msra.mxu0 %v107
    %1414 = vmatprep.subr.mxu0 0.0
    %1415 = vmatpush1.msra.mxu0 %v108
    %1416 = vmatprep.subr.mxu0 0.0
    %1417 = vmatpush1.msra.mxu0 0.0
    %1418 = vmatprep.subr.mxu0 0.0
    %1419 = vmatpush1.msra.mxu0 0.0
    %1420 = vmatprep.subr.mxu0 0.0
    %1421 = vmatpush1.msra.mxu0 0.0
    %1422 = vmatprep.subr.mxu0 0.0
    %1423 = vmatpush1.msra.mxu0 0.0
    %1424 = vmatprep.subr.mxu0 0.0
    %1425 = vmatpush1.msra.mxu0 0.0
    %1426 = vmatprep.subr.mxu0 0.0
    %1427 = vmatpush1.msra.mxu0 0.0
    %1428 = vmatprep.subr.mxu0 0.0
    %1429 = vmatpush1.msra.mxu0 0.0
    %1430 = vmatprep.subr.mxu0 0.0
    %1431 = vmatpush1.msra.mxu0 0.0
    %1432 = vmatprep.subr.mxu0 0.0
    %1433 = vmatpush1.msra.mxu0 0.0
    %1434 = vmatprep.subr.mxu0 0.0
    %1435 = vmatpush1.msra.mxu0 0.0
    %1436 = vmatprep.subr.mxu0 0.0
    %1437 = vmatpush1.msra.mxu0 0.0
    %1438 = vmatprep.subr.mxu0 0.0
    %1439 = vmatpush1.msra.mxu0 0.0
    %1440 = vmatprep.subr.mxu0 0.0
    %1441 = vmatpush1.msra.mxu0 0.0
    %1442 = vmatprep.subr.mxu0 0.0
    %1443 = vmatpush1.msra.mxu0 0.0
    %1444 = vmatprep.subr.mxu0 0.0
    %1445 = vmatpush1.msra.mxu0 0.0
    %1446 = vmatprep.subr.mxu0 0.0
    %1447 = vmatpush1.msra.mxu0 0.0
    %1448 = vmatprep.subr.mxu0 0.0
    %1449 = vmatpush1.msra.mxu0 0.0
    %1450 = vmatprep.subr.mxu0 0.0
    %1451 = vmatpush1.msra.mxu0 0.0
    %1452 = vmatprep.subr.mxu0 0.0
    %1453 = vmatpush1.msra.mxu0 0.0
    %1454 = vmatprep.subr.mxu0 0.0
    %1455 = vmatpush1.msra.mxu0 0.0
    %1456 = vmatprep.subr.mxu0 0.0
    %1457 = vmatpush1.msra.mxu0 0.0
    %1458 = vmatprep.subr.mxu0 0.0
    %1459 = vmatpush1.msra.mxu0 0.0
    %1460 = vmatprep.subr.mxu0 0.0
    %1461 = vmatpush1.msra.mxu0 0.0
    %1462 = vmatprep.subr.mxu0 0.0
    %1463 = vmatpush1.msra.mxu0 0.0
    %1464 = vmatprep.subr.mxu0 0.0
    %1465 = vmatpush1.msra.mxu0 0.0
    %1466 = vmatprep.subr.mxu0 0.0
    %1467 = vmatpush1.msra.mxu0 0.0
    %1468 = vmatprep.subr.mxu0 0.0
    %1469 = vmatpush1.msra.mxu0 0.0
    %1470 = vmatprep.subr.mxu0 0.0
    %1471 = vmatpush1.msra.mxu0 0.0
    %1472 = vmatprep.mubr.f32.mxu0 0.0
    %1473 = vmatmul.mubr.f32.gmra.mrb[0].mxu0 %v1406
    %v1474 = vpop.f32.mrb[0].mxu0
    %v1475 = vadd.f32 %v252, %v1474
    %v1476 = vpop.f32.mrb[0].mxu0
    %1477 = vdwg.mxu0
    %v1479 = vsel %vm309, %v37, 0
    %1481 = vmatprep.subr.mxu0 0.0
    %1482 = vmatpush1.msra.mxu0 %v109
    %1483 = vmatprep.subr.mxu0 0.0
    %1484 = vmatpush1.msra.mxu0 %v110
    %1485 = vmatprep.subr.mxu0 0.0
    %1486 = vmatpush1.msra.mxu0 %v111
    %1487 = vmatprep.subr.mxu0 0.0
    %1488 = vmatpush1.msra.mxu0 %v112
    %1489 = vmatprep.subr.mxu0 0.0
    %1490 = vmatpush1.msra.mxu0 0.0
    %1491 = vmatprep.subr.mxu0 0.0
    %1492 = vmatpush1.msra.mxu0 0.0
    %1493 = vmatprep.subr.mxu0 0.0
    %1494 = vmatpush1.msra.mxu0 0.0
    %1495 = vmatprep.subr.mxu0 0.0
    %1496 = vmatpush1.msra.mxu0 0.0
    %1497 = vmatprep.subr.mxu0 0.0
    %1498 = vmatpush1.msra.mxu0 0.0
    %1499 = vmatprep.subr.mxu0 0.0
    %1500 = vmatpush1.msra.mxu0 0.0
    %1501 = vmatprep.subr.mxu0 0.0
    %1502 = vmatpush1.msra.mxu0 0.0
    %1503 = vmatprep.subr.mxu0 0.0
    %1504 = vmatpush1.msra.mxu0 0.0
    %1505 = vmatprep.subr.mxu0 0.0
    %1506 = vmatpush1.msra.mxu0 0.0
    %1507 = vmatprep.subr.mxu0 0.0
    %1508 = vmatpush1.msra.mxu0 0.0
    %1509 = vmatprep.subr.mxu0 0.0
    %1510 = vmatpush1.msra.mxu0 0.0
    %1511 = vmatprep.subr.mxu0 0.0
    %1512 = vmatpush1.msra.mxu0 0.0
    %1513 = vmatprep.subr.mxu0 0.0
    %1514 = vmatpush1.msra.mxu0 0.0
    %1515 = vmatprep.subr.mxu0 0.0
    %1516 = vmatpush1.msra.mxu0 0.0
    %1517 = vmatprep.subr.mxu0 0.0
    %1518 = vmatpush1.msra.mxu0 0.0
    %1519 = vmatprep.subr.mxu0 0.0
    %1520 = vmatpush1.msra.mxu0 0.0
    %1521 = vmatprep.subr.mxu0 0.0
    %1522 = vmatpush1.msra.mxu0 0.0
    %1523 = vmatprep.subr.mxu0 0.0
    %1524 = vmatpush1.msra.mxu0 0.0
    %1525 = vmatprep.subr.mxu0 0.0
    %1526 = vmatpush1.msra.mxu0 0.0
    %1527 = vmatprep.subr.mxu0 0.0
    %1528 = vmatpush1.msra.mxu0 0.0
    %1529 = vmatprep.subr.mxu0 0.0
    %1530 = vmatpush1.msra.mxu0 0.0
    %1531 = vmatprep.subr.mxu0 0.0
    %1532 = vmatpush1.msra.mxu0 0.0
    %1533 = vmatprep.subr.mxu0 0.0
    %1534 = vmatpush1.msra.mxu0 0.0
    %1535 = vmatprep.subr.mxu0 0.0
    %1536 = vmatpush1.msra.mxu0 0.0
    %1537 = vmatprep.subr.mxu0 0.0
    %1538 = vmatpush1.msra.mxu0 0.0
    %1539 = vmatprep.subr.mxu0 0.0
    %1540 = vmatpush1.msra.mxu0 0.0
    %1541 = vmatprep.subr.mxu0 0.0
    %1542 = vmatpush1.msra.mxu0 0.0
    %1543 = vmatprep.subr.mxu0 0.0
    %1544 = vmatpush1.msra.mxu0 0.0
    %1545 = vmatprep.mubr.f32.mxu0 0.0
    %1546 = vmatmul.mubr.f32.gmra.mrb[0].mxu0 %v1479
    %v1547 = vpop.f32.mrb[0].mxu0
    %v1548 = vadd.f32 %v256, %v1547
    %v1549 = vpop.f32.mrb[0].mxu0
    %1550 = vdwg.mxu0
    %v1552 = vsel %vm309, %v38, 0
    %1554 = vmatprep.subr.mxu0 0.0
    %1555 = vmatpush1.msra.mxu0 %v113
    %1556 = vmatprep.subr.mxu0 0.0
    %1557 = vmatpush1.msra.mxu0 %v114
    %1558 = vmatprep.subr.mxu0 0.0
    %1559 = vmatpush1.msra.mxu0 %v115
    %1560 = vmatprep.subr.mxu0 0.0
    %1561 = vmatpush1.msra.mxu0 %v116
    %1562 = vmatprep.subr.mxu0 0.0
    %1563 = vmatpush1.msra.mxu0 0.0
    %1564 = vmatprep.subr.mxu0 0.0
    %1565 = vmatpush1.msra.mxu0 0.0
    %1566 = vmatprep.subr.mxu0 0.0
    %1567 = vmatpush1.msra.mxu0 0.0
    %1568 = vmatprep.subr.mxu0 0.0
    %1569 = vmatpush1.msra.mxu0 0.0
    %1570 = vmatprep.subr.mxu0 0.0
    %1571 = vmatpush1.msra.mxu0 0.0
    %1572 = vmatprep.subr.mxu0 0.0
    %1573 = vmatpush1.msra.mxu0 0.0
    %1574 = vmatprep.subr.mxu0 0.0
    %1575 = vmatpush1.msra.mxu0 0.0
    %1576 = vmatprep.subr.mxu0 0.0
    %1577 = vmatpush1.msra.mxu0 0.0
    %1578 = vmatprep.subr.mxu0 0.0
    %1579 = vmatpush1.msra.mxu0 0.0
    %1580 = vmatprep.subr.mxu0 0.0
    %1581 = vmatpush1.msra.mxu0 0.0
    %1582 = vmatprep.subr.mxu0 0.0
    %1583 = vmatpush1.msra.mxu0 0.0
    %1584 = vmatprep.subr.mxu0 0.0
    %1585 = vmatpush1.msra.mxu0 0.0
    %1586 = vmatprep.subr.mxu0 0.0
    %1587 = vmatpush1.msra.mxu0 0.0
    %1588 = vmatprep.subr.mxu0 0.0
    %1589 = vmatpush1.msra.mxu0 0.0
    %1590 = vmatprep.subr.mxu0 0.0
    %1591 = vmatpush1.msra.mxu0 0.0
    %1592 = vmatprep.subr.mxu0 0.0
    %1593 = vmatpush1.msra.mxu0 0.0
    %1594 = vmatprep.subr.mxu0 0.0
    %1595 = vmatpush1.msra.mxu0 0.0
    %1596 = vmatprep.subr.mxu0 0.0
    %1597 = vmatpush1.msra.mxu0 0.0
    %1598 = vmatprep.subr.mxu0 0.0
    %1599 = vmatpush1.msra.mxu0 0.0
    %1600 = vmatprep.subr.mxu0 0.0
    %1601 = vmatpush1.msra.mxu0 0.0
    %1602 = vmatprep.subr.mxu0 0.0
    %1603 = vmatpush1.msra.mxu0 0.0
    %1604 = vmatprep.subr.mxu0 0.0
    %1605 = vmatpush1.msra.mxu0 0.0
    %1606 = vmatprep.subr.mxu0 0.0
    %1607 = vmatpush1.msra.mxu0 0.0
    %1608 = vmatprep.subr.mxu0 0.0
    %1609 = vmatpush1.msra.mxu0 0.0
    %1610 = vmatprep.subr.mxu0 0.0
    %1611 = vmatpush1.msra.mxu0 0.0
    %1612 = vmatprep.subr.mxu0 0.0
    %1613 = vmatpush1.msra.mxu0 0.0
    %1614 = vmatprep.subr.mxu0 0.0
    %1615 = vmatpush1.msra.mxu0 0.0
    %1616 = vmatprep.subr.mxu0 0.0
    %1617 = vmatpush1.msra.mxu0 0.0
    %1618 = vmatprep.mubr.f32.mxu0 0.0
    %1619 = vmatmul.mubr.f32.gmra.mrb[0].mxu0 %v1552
    %v1620 = vpop.f32.mrb[0].mxu0
    %v1621 = vadd.f32 %v260, %v1620
    %v1622 = vpop.f32.mrb[0].mxu0
    %1623 = vdwg.mxu0
    %v1625 = vsel %vm309, %v39, 0
    %1627 = vmatprep.subr.mxu0 0.0
    %1628 = vmatpush1.msra.mxu0 %v117
    %1629 = vmatprep.subr.mxu0 0.0
    %1630 = vmatpush1.msra.mxu0 %v118
    %1631 = vmatprep.subr.mxu0 0.0
    %1632 = vmatpush1.msra.mxu0 %v119
    %1633 = vmatprep.subr.mxu0 0.0
    %1634 = vmatpush1.msra.mxu0 %v120
    %1635 = vmatprep.subr.mxu0 0.0
    %1636 = vmatpush1.msra.mxu0 0.0
    %1637 = vmatprep.subr.mxu0 0.0
    %1638 = vmatpush1.msra.mxu0 0.0
    %1639 = vmatprep.subr.mxu0 0.0
    %1640 = vmatpush1.msra.mxu0 0.0
    %1641 = vmatprep.subr.mxu0 0.0
    %1642 = vmatpush1.msra.mxu0 0.0
    %1643 = vmatprep.subr.mxu0 0.0
    %1644 = vmatpush1.msra.mxu0 0.0
    %1645 = vmatprep.subr.mxu0 0.0
    %1646 = vmatpush1.msra.mxu0 0.0
    %1647 = vmatprep.subr.mxu0 0.0
    %1648 = vmatpush1.msra.mxu0 0.0
    %1649 = vmatprep.subr.mxu0 0.0
    %1650 = vmatpush1.msra.mxu0 0.0
    %1651 = vmatprep.subr.mxu0 0.0
    %1652 = vmatpush1.msra.mxu0 0.0
    %1653 = vmatprep.subr.mxu0 0.0
    %1654 = vmatpush1.msra.mxu0 0.0
    %1655 = vmatprep.subr.mxu0 0.0
    %1656 = vmatpush1.msra.mxu0 0.0
    %1657 = vmatprep.subr.mxu0 0.0
    %1658 = vmatpush1.msra.mxu0 0.0
    %1659 = vmatprep.subr.mxu0 0.0
    %1660 = vmatpush1.msra.mxu0 0.0
    %1661 = vmatprep.subr.mxu0 0.0
    %1662 = vmatpush1.msra.mxu0 0.0
    %1663 = vmatprep.subr.mxu0 0.0
    %1664 = vmatpush1.msra.mxu0 0.0
    %1665 = vmatprep.subr.mxu0 0.0
    %1666 = vmatpush1.msra.mxu0 0.0
    %1667 = vmatprep.subr.mxu0 0.0
    %1668 = vmatpush1.msra.mxu0 0.0
    %1669 = vmatprep.subr.mxu0 0.0
    %1670 = vmatpush1.msra.mxu0 0.0
    %1671 = vmatprep.subr.mxu0 0.0
    %1672 = vmatpush1.msra.mxu0 0.0
    %1673 = vmatprep.subr.mxu0 0.0
    %1674 = vmatpush1.msra.mxu0 0.0
    %1675 = vmatprep.subr.mxu0 0.0
    %1676 = vmatpush1.msra.mxu0 0.0
    %1677 = vmatprep.subr.mxu0 0.0
    %1678 = vmatpush1.msra.mxu0 0.0
    %1679 = vmatprep.subr.mxu0 0.0
    %1680 = vmatpush1.msra.mxu0 0.0
    %1681 = vmatprep.subr.mxu0 0.0
    %1682 = vmatpush1.msra.mxu0 0.0
    %1683 = vmatprep.subr.mxu0 0.0
    %1684 = vmatpush1.msra.mxu0 0.0
    %1685 = vmatprep.subr.mxu0 0.0
    %1686 = vmatpush1.msra.mxu0 0.0
    %1687 = vmatprep.subr.mxu0 0.0
    %1688 = vmatpush1.msra.mxu0 0.0
    %1689 = vmatprep.subr.mxu0 0.0
    %1690 = vmatpush1.msra.mxu0 0.0
    %1691 = vmatprep.mubr.f32.mxu0 0.0
    %1692 = vmatmul.mubr.f32.gmra.mrb[0].mxu0 %v1625
    %v1693 = vpop.f32.mrb[0].mxu0
    %v1694 = vadd.f32 %v264, %v1693
    %v1695 = vpop.f32.mrb[0].mxu0
    %1696 = vdwg.mxu0
    %v1698 = vsel %vm309, %v40, 0
    %1700 = vmatprep.subr.mxu0 0.0
    %1701 = vmatpush1.msra.mxu0 %v121
    %1702 = vmatprep.subr.mxu0 0.0
    %1703 = vmatpush1.msra.mxu0 %v122
    %1704 = vmatprep.subr.mxu0 0.0
    %1705 = vmatpush1.msra.mxu0 %v123
    %1706 = vmatprep.subr.mxu0 0.0
    %1707 = vmatpush1.msra.mxu0 %v124
    %1708 = vmatprep.subr.mxu0 0.0
    %1709 = vmatpush1.msra.mxu0 0.0
    %1710 = vmatprep.subr.mxu0 0.0
    %1711 = vmatpush1.msra.mxu0 0.0
    %1712 = vmatprep.subr.mxu0 0.0
    %1713 = vmatpush1.msra.mxu0 0.0
    %1714 = vmatprep.subr.mxu0 0.0
    %1715 = vmatpush1.msra.mxu0 0.0
    %1716 = vmatprep.subr.mxu0 0.0
    %1717 = vmatpush1.msra.mxu0 0.0
    %1718 = vmatprep.subr.mxu0 0.0
    %1719 = vmatpush1.msra.mxu0 0.0
    %1720 = vmatprep.subr.mxu0 0.0
    %1721 = vmatpush1.msra.mxu0 0.0
    %1722 = vmatprep.subr.mxu0 0.0
    %1723 = vmatpush1.msra.mxu0 0.0
    %1724 = vmatprep.subr.mxu0 0.0
    %1725 = vmatpush1.msra.mxu0 0.0
    %1726 = vmatprep.subr.mxu0 0.0
    %1727 = vmatpush1.msra.mxu0 0.0
    %1728 = vmatprep.subr.mxu0 0.0
    %1729 = vmatpush1.msra.mxu0 0.0
    %1730 = vmatprep.subr.mxu0 0.0
    %1731 = vmatpush1.msra.mxu0 0.0
    %1732 = vmatprep.subr.mxu0 0.0
    %1733 = vmatpush1.msra.mxu0 0.0
    %1734 = vmatprep.subr.mxu0 0.0
    %1735 = vmatpush1.msra.mxu0 0.0
    %1736 = vmatprep.subr.mxu0 0.0
    %1737 = vmatpush1.msra.mxu0 0.0
    %1738 = vmatprep.subr.mxu0 0.0
    %1739 = vmatpush1.msra.mxu0 0.0
    %1740 = vmatprep.subr.mxu0 0.0
    %1741 = vmatpush1.msra.mxu0 0.0
    %1742 = vmatprep.subr.mxu0 0.0
    %1743 = vmatpush1.msra.mxu0 0.0
    %1744 = vmatprep.subr.mxu0 0.0
    %1745 = vmatpush1.msra.mxu0 0.0
    %1746 = vmatprep.subr.mxu0 0.0
    %1747 = vmatpush1.msra.mxu0 0.0
    %1748 = vmatprep.subr.mxu0 0.0
    %1749 = vmatpush1.msra.mxu0 0.0
    %1750 = vmatprep.subr.mxu0 0.0
    %1751 = vmatpush1.msra.mxu0 0.0
    %1752 = vmatprep.subr.mxu0 0.0
    %1753 = vmatpush1.msra.mxu0 0.0
    %1754 = vmatprep.subr.mxu0 0.0
    %1755 = vmatpush1.msra.mxu0 0.0
    %1756 = vmatprep.subr.mxu0 0.0
    %1757 = vmatpush1.msra.mxu0 0.0
    %1758 = vmatprep.subr.mxu0 0.0
    %1759 = vmatpush1.msra.mxu0 0.0
    %1760 = vmatprep.subr.mxu0 0.0
    %1761 = vmatpush1.msra.mxu0 0.0
    %1762 = vmatprep.subr.mxu0 0.0
    %1763 = vmatpush1.msra.mxu0 0.0
    %1764 = vmatprep.mubr.f32.mxu0 0.0
    %1765 = vmatmul.mubr.f32.gmra.mrb[0].mxu0 %v1698
    %v1766 = vpop.f32.mrb[0].mxu0
    %v1767 = vadd.f32 %v268, %v1766
    %v1768 = vpop.f32.mrb[0].mxu0
    %1769 = vdwg.mxu0
    %v1771 = vsel %vm309, %v41, 0
    %1773 = vmatprep.subr.mxu0 0.0
    %1774 = vmatpush1.msra.mxu0 %v125
    %1775 = vmatprep.subr.mxu0 0.0
    %1776 = vmatpush1.msra.mxu0 %v126
    %1777 = vmatprep.subr.mxu0 0.0
    %1778 = vmatpush1.msra.mxu0 %v127
    %1779 = vmatprep.subr.mxu0 0.0
    %1780 = vmatpush1.msra.mxu0 %v128
    %1781 = vmatprep.subr.mxu0 0.0
    %1782 = vmatpush1.msra.mxu0 0.0
    %1783 = vmatprep.subr.mxu0 0.0
    %1784 = vmatpush1.msra.mxu0 0.0
    %1785 = vmatprep.subr.mxu0 0.0
    %1786 = vmatpush1.msra.mxu0 0.0
    %1787 = vmatprep.subr.mxu0 0.0
    %1788 = vmatpush1.msra.mxu0 0.0
    %1789 = vmatprep.subr.mxu0 0.0
    %1790 = vmatpush1.msra.mxu0 0.0
    %1791 = vmatprep.subr.mxu0 0.0
    %1792 = vmatpush1.msra.mxu0 0.0
    %1793 = vmatprep.subr.mxu0 0.0
    %1794 = vmatpush1.msra.mxu0 0.0
    %1795 = vmatprep.subr.mxu0 0.0
    %1796 = vmatpush1.msra.mxu0 0.0
    %1797 = vmatprep.subr.mxu0 0.0
    %1798 = vmatpush1.msra.mxu0 0.0
    %1799 = vmatprep.subr.mxu0 0.0
    %1800 = vmatpush1.msra.mxu0 0.0
    %1801 = vmatprep.subr.mxu0 0.0
    %1802 = vmatpush1.msra.mxu0 0.0
    %1803 = vmatprep.subr.mxu0 0.0
    %1804 = vmatpush1.msra.mxu0 0.0
    %1805 = vmatprep.subr.mxu0 0.0
    %1806 = vmatpush1.msra.mxu0 0.0
    %1807 = vmatprep.subr.mxu0 0.0
    %1808 = vmatpush1.msra.mxu0 0.0
    %1809 = vmatprep.subr.mxu0 0.0
    %1810 = vmatpush1.msra.mxu0 0.0
    %1811 = vmatprep.subr.mxu0 0.0
    %1812 = vmatpush1.msra.mxu0 0.0
    %1813 = vmatprep.subr.mxu0 0.0
    %1814 = vmatpush1.msra.mxu0 0.0
    %1815 = vmatprep.subr.mxu0 0.0
    %1816 = vmatpush1.msra.mxu0 0.0
    %1817 = vmatprep.subr.mxu0 0.0
    %1818 = vmatpush1.msra.mxu0 0.0
    %1819 = vmatprep.subr.mxu0 0.0
    %1820 = vmatpush1.msra.mxu0 0.0
    %1821 = vmatprep.subr.mxu0 0.0
    %1822 = vmatpush1.msra.mxu0 0.0
    %1823 = vmatprep.subr.mxu0 0.0
    %1824 = vmatpush1.msra.mxu0 0.0
    %1825 = vmatprep.subr.mxu0 0.0
    %1826 = vmatpush1.msra.mxu0 0.0
    %1827 = vmatprep.subr.mxu0 0.0
    %1828 = vmatpush1.msra.mxu0 0.0
    %1829 = vmatprep.subr.mxu0 0.0
    %1830 = vmatpush1.msra.mxu0 0.0
    %1831 = vmatprep.subr.mxu0 0.0
    %1832 = vmatpush1.msra.mxu0 0.0
    %1833 = vmatprep.subr.mxu0 0.0
    %1834 = vmatpush1.msra.mxu0 0.0
    %1835 = vmatprep.subr.mxu0 0.0
    %1836 = vmatpush1.msra.mxu0 0.0
    %1837 = vmatprep.mubr.f32.mxu0 0.0
    %1838 = vmatmul.mubr.f32.gmra.mrb[0].mxu0 %v1771
    %v1839 = vpop.f32.mrb[0].mxu0
    %v1840 = vadd.f32 %v272, %v1839
    %v1841 = vpop.f32.mrb[0].mxu0
    %1842 = vdwg.mxu0
    %v1844 = vsel %vm309, %v42, 0
    %1846 = vmatprep.subr.mxu0 0.0
    %1847 = vmatpush1.msra.mxu0 %v129
    %1848 = vmatprep.subr.mxu0 0.0
    %1849 = vmatpush1.msra.mxu0 %v130
    %1850 = vmatprep.subr.mxu0 0.0
    %1851 = vmatpush1.msra.mxu0 %v131
    %1852 = vmatprep.subr.mxu0 0.0
    %1853 = vmatpush1.msra.mxu0 %v132
    %1854 = vmatprep.subr.mxu0 0.0
    %1855 = vmatpush1.msra.mxu0 0.0
    %1856 = vmatprep.subr.mxu0 0.0
    %1857 = vmatpush1.msra.mxu0 0.0
    %1858 = vmatprep.subr.mxu0 0.0
    %1859 = vmatpush1.msra.mxu0 0.0
    %1860 = vmatprep.subr.mxu0 0.0
    %1861 = vmatpush1.msra.mxu0 0.0
    %1862 = vmatprep.subr.mxu0 0.0
    %1863 = vmatpush1.msra.mxu0 0.0
    %1864 = vmatprep.subr.mxu0 0.0
    %1865 = vmatpush1.msra.mxu0 0.0
    %1866 = vmatprep.subr.mxu0 0.0
    %1867 = vmatpush1.msra.mxu0 0.0
    %1868 = vmatprep.subr.mxu0 0.0
    %1869 = vmatpush1.msra.mxu0 0.0
    %1870 = vmatprep.subr.mxu0 0.0
    %1871 = vmatpush1.msra.mxu0 0.0
    %1872 = vmatprep.subr.mxu0 0.0
    %1873 = vmatpush1.msra.mxu0 0.0
    %1874 = vmatprep.subr.mxu0 0.0
    %1875 = vmatpush1.msra.mxu0 0.0
    %1876 = vmatprep.subr.mxu0 0.0
    %1877 = vmatpush1.msra.mxu0 0.0
    %1878 = vmatprep.subr.mxu0 0.0
    %1879 = vmatpush1.msra.mxu0 0.0
    %1880 = vmatprep.subr.mxu0 0.0
    %1881 = vmatpush1.msra.mxu0 0.0
    %1882 = vmatprep.subr.mxu0 0.0
    %1883 = vmatpush1.msra.mxu0 0.0
    %1884 = vmatprep.subr.mxu0 0.0
    %1885 = vmatpush1.msra.mxu0 0.0
    %1886 = vmatprep.subr.mxu0 0.0
    %1887 = vmatpush1.msra.mxu0 0.0
    %1888 = vmatprep.subr.mxu0 0.0
    %1889 = vmatpush1.msra.mxu0 0.0
    %1890 = vmatprep.subr.mxu0 0.0
    %1891 = vmatpush1.msra.mxu0 0.0
    %1892 = vmatprep.subr.mxu0 0.0
    %1893 = vmatpush1.msra.mxu0 0.0
    %1894 = vmatprep.subr.mxu0 0.0
    %1895 = vmatpush1.msra.mxu0 0.0
    %1896 = vmatprep.subr.mxu0 0.0
    %1897 = vmatpush1.msra.mxu0 0.0
    %1898 = vmatprep.subr.mxu0 0.0
    %1899 = vmatpush1.msra.mxu0 0.0
    %1900 = vmatprep.subr.mxu0 0.0
    %1901 = vmatpush1.msra.mxu0 0.0
    %1902 = vmatprep.subr.mxu0 0.0
    %1903 = vmatpush1.msra.mxu0 0.0
    %1904 = vmatprep.subr.mxu0 0.0
    %1905 = vmatpush1.msra.mxu0 0.0
    %1906 = vmatprep.subr.mxu0 0.0
    %1907 = vmatpush1.msra.mxu0 0.0
    %1908 = vmatprep.subr.mxu0 0.0
    %1909 = vmatpush1.msra.mxu0 0.0
    %1910 = vmatprep.mubr.f32.mxu0 0.0
    %1911 = vmatmul.mubr.f32.gmra.mrb[0].mxu0 %v1844
    %v1912 = vpop.f32.mrb[0].mxu0
    %v1913 = vadd.f32 %v276, %v1912
    %v1914 = vpop.f32.mrb[0].mxu0
    %1915 = vdwg.mxu0
    %v1917 = vsel %vm309, %v43, 0
    %1919 = vmatprep.subr.mxu0 0.0
    %1920 = vmatpush1.msra.mxu0 %v133
    %1921 = vmatprep.subr.mxu0 0.0
    %1922 = vmatpush1.msra.mxu0 %v134
    %1923 = vmatprep.subr.mxu0 0.0
    %1924 = vmatpush1.msra.mxu0 %v135
    %1925 = vmatprep.subr.mxu0 0.0
    %1926 = vmatpush1.msra.mxu0 %v136
    %1927 = vmatprep.subr.mxu0 0.0
    %1928 = vmatpush1.msra.mxu0 0.0
    %1929 = vmatprep.subr.mxu0 0.0
    %1930 = vmatpush1.msra.mxu0 0.0
    %1931 = vmatprep.subr.mxu0 0.0
    %1932 = vmatpush1.msra.mxu0 0.0
    %1933 = vmatprep.subr.mxu0 0.0
    %1934 = vmatpush1.msra.mxu0 0.0
    %1935 = vmatprep.subr.mxu0 0.0
    %1936 = vmatpush1.msra.mxu0 0.0
    %1937 = vmatprep.subr.mxu0 0.0
    %1938 = vmatpush1.msra.mxu0 0.0
    %1939 = vmatprep.subr.mxu0 0.0
    %1940 = vmatpush1.msra.mxu0 0.0
    %1941 = vmatprep.subr.mxu0 0.0
    %1942 = vmatpush1.msra.mxu0 0.0
    %1943 = vmatprep.subr.mxu0 0.0
    %1944 = vmatpush1.msra.mxu0 0.0
    %1945 = vmatprep.subr.mxu0 0.0
    %1946 = vmatpush1.msra.mxu0 0.0
    %1947 = vmatprep.subr.mxu0 0.0
    %1948 = vmatpush1.msra.mxu0 0.0
    %1949 = vmatprep.subr.mxu0 0.0
    %1950 = vmatpush1.msra.mxu0 0.0
    %1951 = vmatprep.subr.mxu0 0.0
    %1952 = vmatpush1.msra.mxu0 0.0
    %1953 = vmatprep.subr.mxu0 0.0
    %1954 = vmatpush1.msra.mxu0 0.0
    %1955 = vmatprep.subr.mxu0 0.0
    %1956 = vmatpush1.msra.mxu0 0.0
    %1957 = vmatprep.subr.mxu0 0.0
    %1958 = vmatpush1.msra.mxu0 0.0
    %1959 = vmatprep.subr.mxu0 0.0
    %1960 = vmatpush1.msra.mxu0 0.0
    %1961 = vmatprep.subr.mxu0 0.0
    %1962 = vmatpush1.msra.mxu0 0.0
    %1963 = vmatprep.subr.mxu0 0.0
    %1964 = vmatpush1.msra.mxu0 0.0
    %1965 = vmatprep.subr.mxu0 0.0
    %1966 = vmatpush1.msra.mxu0 0.0
    %1967 = vmatprep.subr.mxu0 0.0
    %1968 = vmatpush1.msra.mxu0 0.0
    %1969 = vmatprep.subr.mxu0 0.0
    %1970 = vmatpush1.msra.mxu0 0.0
    %1971 = vmatprep.subr.mxu0 0.0
    %1972 = vmatpush1.msra.mxu0 0.0
    %1973 = vmatprep.subr.mxu0 0.0
    %1974 = vmatpush1.msra.mxu0 0.0
    %1975 = vmatprep.subr.mxu0 0.0
    %1976 = vmatpush1.msra.mxu0 0.0
    %1977 = vmatprep.subr.mxu0 0.0
    %1978 = vmatpush1.msra.mxu0 0.0
    %1979 = vmatprep.subr.mxu0 0.0
    %1980 = vmatpush1.msra.mxu0 0.0
    %1981 = vmatprep.subr.mxu0 0.0
    %1982 = vmatpush1.msra.mxu0 0.0
    %1983 = vmatprep.mubr.f32.mxu0 0.0
    %1984 = vmatmul.mubr.f32.gmra.mrb[0].mxu0 %v1917
    %v1985 = vpop.f32.mrb[0].mxu0
    %v1986 = vadd.f32 %v280, %v1985
    %v1987 = vpop.f32.mrb[0].mxu0
    %1988 = vdwg.mxu0
    %v1990 = vsel %vm309, %v44, 0
    %1992 = vmatprep.subr.mxu0 0.0
    %1993 = vmatpush1.msra.mxu0 %v137
    %1994 = vmatprep.subr.mxu0 0.0
    %1995 = vmatpush1.msra.mxu0 %v138
    %1996 = vmatprep.subr.mxu0 0.0
    %1997 = vmatpush1.msra.mxu0 %v139
    %1998 = vmatprep.subr.mxu0 0.0
    %1999 = vmatpush1.msra.mxu0 %v140
    %2000 = vmatprep.subr.mxu0 0.0
    %2001 = vmatpush1.msra.mxu0 0.0
    %2002 = vmatprep.subr.mxu0 0.0
    %2003 = vmatpush1.msra.mxu0 0.0
    %2004 = vmatprep.subr.mxu0 0.0
    %2005 = vmatpush1.msra.mxu0 0.0
    %2006 = vmatprep.subr.mxu0 0.0
    %2007 = vmatpush1.msra.mxu0 0.0
    %2008 = vmatprep.subr.mxu0 0.0
    %2009 = vmatpush1.msra.mxu0 0.0
    %2010 = vmatprep.subr.mxu0 0.0
    %2011 = vmatpush1.msra.mxu0 0.0
    %2012 = vmatprep.subr.mxu0 0.0
    %2013 = vmatpush1.msra.mxu0 0.0
    %2014 = vmatprep.subr.mxu0 0.0
    %2015 = vmatpush1.msra.mxu0 0.0
    %2016 = vmatprep.subr.mxu0 0.0
    %2017 = vmatpush1.msra.mxu0 0.0
    %2018 = vmatprep.subr.mxu0 0.0
    %2019 = vmatpush1.msra.mxu0 0.0
    %2020 = vmatprep.subr.mxu0 0.0
    %2021 = vmatpush1.msra.mxu0 0.0
    %2022 = vmatprep.subr.mxu0 0.0
    %2023 = vmatpush1.msra.mxu0 0.0
    %2024 = vmatprep.subr.mxu0 0.0
    %2025 = vmatpush1.msra.mxu0 0.0
    %2026 = vmatprep.subr.mxu0 0.0
    %2027 = vmatpush1.msra.mxu0 0.0
    %2028 = vmatprep.subr.mxu0 0.0
    %2029 = vmatpush1.msra.mxu0 0.0
    %2030 = vmatprep.subr.mxu0 0.0
    %2031 = vmatpush1.msra.mxu0 0.0
    %2032 = vmatprep.subr.mxu0 0.0
    %2033 = vmatpush1.msra.mxu0 0.0
    %2034 = vmatprep.subr.mxu0 0.0
    %2035 = vmatpush1.msra.mxu0 0.0
    %2036 = vmatprep.subr.mxu0 0.0
    %2037 = vmatpush1.msra.mxu0 0.0
    %2038 = vmatprep.subr.mxu0 0.0
    %2039 = vmatpush1.msra.mxu0 0.0
    %2040 = vmatprep.subr.mxu0 0.0
    %2041 = vmatpush1.msra.mxu0 0.0
    %2042 = vmatprep.subr.mxu0 0.0
    %2043 = vmatpush1.msra.mxu0 0.0
    %2044 = vmatprep.subr.mxu0 0.0
    %2045 = vmatpush1.msra.mxu0 0.0
    %2046 = vmatprep.subr.mxu0 0.0
    %2047 = vmatpush1.msra.mxu0 0.0
    %2048 = vmatprep.subr.mxu0 0.0
    %2049 = vmatpush1.msra.mxu0 0.0
    %2050 = vmatprep.subr.mxu0 0.0
    %2051 = vmatpush1.msra.mxu0 0.0
    %2052 = vmatprep.subr.mxu0 0.0
    %2053 = vmatpush1.msra.mxu0 0.0
    %2054 = vmatprep.subr.mxu0 0.0
    %2055 = vmatpush1.msra.mxu0 0.0
    %2056 = vmatprep.mubr.f32.mxu0 0.0
    %2057 = vmatmul.mubr.f32.gmra.mrb[0].mxu0 %v1990
    %v2058 = vpop.f32.mrb[0].mxu0
    %v2059 = vadd.f32 %v284, %v2058
    %v2060 = vpop.f32.mrb[0].mxu0
    %2061 = vdwg.mxu0
    %vm2062 = vcmask 64512
    %v2064 = vsel %vm2062, %v380, 0
    %v2067 = vsel %vm2062, %v964, 0
    %2069 = vmatprep.subr.mxu0 0.0
    %2070 = vmatpush1.xpose.msra.mxu0 %v2067
    %2071 = vmatprep.subr.mxu0 0.0
    %2072 = vmatpush1.xpose.msra.mxu0 0.0
    %2073 = vmatprep.subr.mxu0 0.0
    %2074 = vmatpush1.xpose.msra.mxu0 0.0
    %2075 = vmatprep.subr.mxu0 0.0
    %2076 = vmatpush1.xpose.msra.mxu0 0.0
    %2077 = vmatprep.subr.mxu0 0.0
    %2078 = vmatpush1.xpose.msra.mxu0 0.0
    %2079 = vmatprep.subr.mxu0 0.0
    %2080 = vmatpush1.xpose.msra.mxu0 0.0
    %2081 = vmatprep.subr.mxu0 0.0
    %2082 = vmatpush1.xpose.msra.mxu0 0.0
    %2083 = vmatprep.subr.mxu0 0.0
    %2084 = vmatpush1.xpose.msra.mxu0 0.0
    %2085 = vmatprep.subr.mxu0 0.0
    %2086 = vmatpush1.xpose.msra.mxu0 0.0
    %2087 = vmatprep.subr.mxu0 0.0
    %2088 = vmatpush1.xpose.msra.mxu0 0.0
    %2089 = vmatprep.subr.mxu0 0.0
    %2090 = vmatpush1.xpose.msra.mxu0 0.0
    %2091 = vmatprep.subr.mxu0 0.0
    %2092 = vmatpush1.xpose.msra.mxu0 0.0
    %2093 = vmatprep.subr.mxu0 0.0
    %2094 = vmatpush1.xpose.msra.mxu0 0.0
    %2095 = vmatprep.subr.mxu0 0.0
    %2096 = vmatpush1.xpose.msra.mxu0 0.0
    %2097 = vmatprep.subr.mxu0 0.0
    %2098 = vmatpush1.xpose.msra.mxu0 0.0
    %2099 = vmatprep.subr.mxu0 0.0
    %2100 = vmatpush1.xpose.msra.mxu0 0.0
    %2101 = vmatprep.subr.mxu0 0.0
    %2102 = vmatpush1.xpose.msra.mxu0 0.0
    %2103 = vmatprep.subr.mxu0 0.0
    %2104 = vmatpush1.xpose.msra.mxu0 0.0
    %2105 = vmatprep.subr.mxu0 0.0
    %2106 = vmatpush1.xpose.msra.mxu0 0.0
    %2107 = vmatprep.subr.mxu0 0.0
    %2108 = vmatpush1.xpose.msra.mxu0 0.0
    %2109 = vmatprep.subr.mxu0 0.0
    %2110 = vmatpush1.xpose.msra.mxu0 0.0
    %2111 = vmatprep.subr.mxu0 0.0
    %2112 = vmatpush1.xpose.msra.mxu0 0.0
    %2113 = vmatprep.subr.mxu0 0.0
    %2114 = vmatpush1.xpose.msra.mxu0 0.0
    %2115 = vmatprep.subr.mxu0 0.0
    %2116 = vmatpush1.xpose.msra.mxu0 0.0
    %2117 = vmatprep.subr.mxu0 0.0
    %2118 = vmatpush1.xpose.msra.mxu0 0.0
    %2119 = vmatprep.subr.mxu0 0.0
    %2120 = vmatpush1.xpose.msra.mxu0 0.0
    %2121 = vmatprep.subr.mxu0 0.0
    %2122 = vmatpush1.xpose.msra.mxu0 0.0
    %2123 = vmatprep.subr.mxu0 0.0
    %2124 = vmatpush1.xpose.msra.mxu0 0.0
    %2125 = vmatprep.subr.mxu0 0.0
    %2126 = vmatpush1.xpose.msra.mxu0 0.0
    %2127 = vmatprep.subr.mxu0 0.0
    %2128 = vmatpush1.xpose.msra.mxu0 0.0
    %2129 = vmatprep.subr.mxu0 0.0
    %2130 = vmatpush1.xpose.msra.mxu0 0.0
    %2131 = vmatprep.subr.mxu0 0.0
    %2132 = vmatpush1.xpose.msra.mxu0 0.0
    %2133 = vmatprep.mubr.f32.mxu0 0.0
    %2134 = vmatmul.mubr.f32.gmra.mrb[0].mxu0 %v2064
    %v2135 = vpop.f32.mrb[0].mxu0
    %v2136 = vadd.f32 0.0, %v2135
    %v2137 = vpop.f32.mrb[0].mxu0
    %2138 = vdwg.mxu0
    %v2140 = vsel %vm2062, %v453, 0
    %v2143 = vsel %vm2062, %v1037, 0
    %2145 = vmatprep.subr.mxu0 0.0
    %2146 = vmatpush1.xpose.msra.mxu0 %v2143
    %2147 = vmatprep.subr.mxu0 0.0
    %2148 = vmatpush1.xpose.msra.mxu0 0.0
    %2149 = vmatprep.subr.mxu0 0.0
    %2150 = vmatpush1.xpose.msra.mxu0 0.0
    %2151 = vmatprep.subr.mxu0 0.0
    %2152 = vmatpush1.xpose.msra.mxu0 0.0
    %2153 = vmatprep.subr.mxu0 0.0
    %2154 = vmatpush1.xpose.msra.mxu0 0.0
    %2155 = vmatprep.subr.mxu0 0.0
    %2156 = vmatpush1.xpose.msra.mxu0 0.0
    %2157 = vmatprep.subr.mxu0 0.0
    %2158 = vmatpush1.xpose.msra.mxu0 0.0
    %2159 = vmatprep.subr.mxu0 0.0
    %2160 = vmatpush1.xpose.msra.mxu0 0.0
    %2161 = vmatprep.subr.mxu0 0.0
    %2162 = vmatpush1.xpose.msra.mxu0 0.0
    %2163 = vmatprep.subr.mxu0 0.0
    %2164 = vmatpush1.xpose.msra.mxu0 0.0
    %2165 = vmatprep.subr.mxu0 0.0
    %2166 = vmatpush1.xpose.msra.mxu0 0.0
    %2167 = vmatprep.subr.mxu0 0.0
    %2168 = vmatpush1.xpose.msra.mxu0 0.0
    %2169 = vmatprep.subr.mxu0 0.0
    %2170 = vmatpush1.xpose.msra.mxu0 0.0
    %2171 = vmatprep.subr.mxu0 0.0
    %2172 = vmatpush1.xpose.msra.mxu0 0.0
    %2173 = vmatprep.subr.mxu0 0.0
    %2174 = vmatpush1.xpose.msra.mxu0 0.0
    %2175 = vmatprep.subr.mxu0 0.0
    %2176 = vmatpush1.xpose.msra.mxu0 0.0
    %2177 = vmatprep.subr.mxu0 0.0
    %2178 = vmatpush1.xpose.msra.mxu0 0.0
    %2179 = vmatprep.subr.mxu0 0.0
    %2180 = vmatpush1.xpose.msra.mxu0 0.0
    %2181 = vmatprep.subr.mxu0 0.0
    %2182 = vmatpush1.xpose.msra.mxu0 0.0
    %2183 = vmatprep.subr.mxu0 0.0
    %2184 = vmatpush1.xpose.msra.mxu0 0.0
    %2185 = vmatprep.subr.mxu0 0.0
    %2186 = vmatpush1.xpose.msra.mxu0 0.0
    %2187 = vmatprep.subr.mxu0 0.0
    %2188 = vmatpush1.xpose.msra.mxu0 0.0
    %2189 = vmatprep.subr.mxu0 0.0
    %2190 = vmatpush1.xpose.msra.mxu0 0.0
    %2191 = vmatprep.subr.mxu0 0.0
    %2192 = vmatpush1.xpose.msra.mxu0 0.0
    %2193 = vmatprep.subr.mxu0 0.0
    %2194 = vmatpush1.xpose.msra.mxu0 0.0
    %2195 = vmatprep.subr.mxu0 0.0
    %2196 = vmatpush1.xpose.msra.mxu0 0.0
    %2197 = vmatprep.subr.mxu0 0.0
    %2198 = vmatpush1.xpose.msra.mxu0 0.0
    %2199 = vmatprep.subr.mxu0 0.0
    %2200 = vmatpush1.xpose.msra.mxu0 0.0
    %2201 = vmatprep.subr.mxu0 0.0
    %2202 = vmatpush1.xpose.msra.mxu0 0.0
    %2203 = vmatprep.subr.mxu0 0.0
    %2204 = vmatpush1.xpose.msra.mxu0 0.0
    %2205 = vmatprep.subr.mxu0 0.0
    %2206 = vmatpush1.xpose.msra.mxu0 0.0
    %2207 = vmatprep.subr.mxu0 0.0
    %2208 = vmatpush1.xpose.msra.mxu0 0.0
    %2209 = vmatprep.mubr.f32.mxu0 0.0
    %2210 = vmatmul.mubr.f32.gmra.mrb[0].mxu0 %v2140
    %v2211 = vpop.f32.mrb[0].mxu0
    %v2212 = vadd.f32 0.0, %v2211
    %v2213 = vpop.f32.mrb[0].mxu0
    %2214 = vdwg.mxu0
    %v2216 = vsel %vm2062, %v526, 0
    %v2219 = vsel %vm2062, %v1110, 0
    %2221 = vmatprep.subr.mxu0 0.0
    %2222 = vmatpush1.xpose.msra.mxu0 %v2219
    %2223 = vmatprep.subr.mxu0 0.0
    %2224 = vmatpush1.xpose.msra.mxu0 0.0
    %2225 = vmatprep.subr.mxu0 0.0
    %2226 = vmatpush1.xpose.msra.mxu0 0.0
    %2227 = vmatprep.subr.mxu0 0.0
    %2228 = vmatpush1.xpose.msra.mxu0 0.0
    %2229 = vmatprep.subr.mxu0 0.0
    %2230 = vmatpush1.xpose.msra.mxu0 0.0
    %2231 = vmatprep.subr.mxu0 0.0
    %2232 = vmatpush1.xpose.msra.mxu0 0.0
    %2233 = vmatprep.subr.mxu0 0.0
    %2234 = vmatpush1.xpose.msra.mxu0 0.0
    %2235 = vmatprep.subr.mxu0 0.0
    %2236 = vmatpush1.xpose.msra.mxu0 0.0
    %2237 = vmatprep.subr.mxu0 0.0
    %2238 = vmatpush1.xpose.msra.mxu0 0.0
    %2239 = vmatprep.subr.mxu0 0.0
    %2240 = vmatpush1.xpose.msra.mxu0 0.0
    %2241 = vmatprep.subr.mxu0 0.0
    %2242 = vmatpush1.xpose.msra.mxu0 0.0
    %2243 = vmatprep.subr.mxu0 0.0
    %2244 = vmatpush1.xpose.msra.mxu0 0.0
    %2245 = vmatprep.subr.mxu0 0.0
    %2246 = vmatpush1.xpose.msra.mxu0 0.0
    %2247 = vmatprep.subr.mxu0 0.0
    %2248 = vmatpush1.xpose.msra.mxu0 0.0
    %2249 = vmatprep.subr.mxu0 0.0
    %2250 = vmatpush1.xpose.msra.mxu0 0.0
    %2251 = vmatprep.subr.mxu0 0.0
    %2252 = vmatpush1.xpose.msra.mxu0 0.0
    %2253 = vmatprep.subr.mxu0 0.0
    %2254 = vmatpush1.xpose.msra.mxu0 0.0
    %2255 = vmatprep.subr.mxu0 0.0
    %2256 = vmatpush1.xpose.msra.mxu0 0.0
    %2257 = vmatprep.subr.mxu0 0.0
    %2258 = vmatpush1.xpose.msra.mxu0 0.0
    %2259 = vmatprep.subr.mxu0 0.0
    %2260 = vmatpush1.xpose.msra.mxu0 0.0
    %2261 = vmatprep.subr.mxu0 0.0
    %2262 = vmatpush1.xpose.msra.mxu0 0.0
    %2263 = vmatprep.subr.mxu0 0.0
    %2264 = vmatpush1.xpose.msra.mxu0 0.0
    %2265 = vmatprep.subr.mxu0 0.0
    %2266 = vmatpush1.xpose.msra.mxu0 0.0
    %2267 = vmatprep.subr.mxu0 0.0
    %2268 = vmatpush1.xpose.msra.mxu0 0.0
    %2269 = vmatprep.subr.mxu0 0.0
    %2270 = vmatpush1.xpose.msra.mxu0 0.0
    %2271 = vmatprep.subr.mxu0 0.0
    %2272 = vmatpush1.xpose.msra.mxu0 0.0
    %2273 = vmatprep.subr.mxu0 0.0
    %2274 = vmatpush1.xpose.msra.mxu0 0.0
    %2275 = vmatprep.subr.mxu0 0.0
    %2276 = vmatpush1.xpose.msra.mxu0 0.0
    %2277 = vmatprep.subr.mxu0 0.0
    %2278 = vmatpush1.xpose.msra.mxu0 0.0
    %2279 = vmatprep.subr.mxu0 0.0
    %2280 = vmatpush1.xpose.msra.mxu0 0.0
    %2281 = vmatprep.subr.mxu0 0.0
    %2282 = vmatpush1.xpose.msra.mxu0 0.0
    %2283 = vmatprep.subr.mxu0 0.0
    %2284 = vmatpush1.xpose.msra.mxu0 0.0
    %2285 = vmatprep.mubr.f32.mxu0 0.0
    %2286 = vmatmul.mubr.f32.gmra.mrb[0].mxu0 %v2216
    %v2287 = vpop.f32.mrb[0].mxu0
    %v2288 = vadd.f32 0.0, %v2287
    %v2289 = vpop.f32.mrb[0].mxu0
    %2290 = vdwg.mxu0
    %v2292 = vsel %vm2062, %v599, 0
    %v2295 = vsel %vm2062, %v1183, 0
    %2297 = vmatprep.subr.mxu0 0.0
    %2298 = vmatpush1.xpose.msra.mxu0 %v2295
    %2299 = vmatprep.subr.mxu0 0.0
    %2300 = vmatpush1.xpose.msra.mxu0 0.0
    %2301 = vmatprep.subr.mxu0 0.0
    %2302 = vmatpush1.xpose.msra.mxu0 0.0
    %2303 = vmatprep.subr.mxu0 0.0
    %2304 = vmatpush1.xpose.msra.mxu0 0.0
    %2305 = vmatprep.subr.mxu0 0.0
    %2306 = vmatpush1.xpose.msra.mxu0 0.0
    %2307 = vmatprep.subr.mxu0 0.0
    %2308 = vmatpush1.xpose.msra.mxu0 0.0
    %2309 = vmatprep.subr.mxu0 0.0
    %2310 = vmatpush1.xpose.msra.mxu0 0.0
    %2311 = vmatprep.subr.mxu0 0.0
    %2312 = vmatpush1.xpose.msra.mxu0 0.0
    %2313 = vmatprep.subr.mxu0 0.0
    %2314 = vmatpush1.xpose.msra.mxu0 0.0
    %2315 = vmatprep.subr.mxu0 0.0
    %2316 = vmatpush1.xpose.msra.mxu0 0.0
    %2317 = vmatprep.subr.mxu0 0.0
    %2318 = vmatpush1.xpose.msra.mxu0 0.0
    %2319 = vmatprep.subr.mxu0 0.0
    %2320 = vmatpush1.xpose.msra.mxu0 0.0
    %2321 = vmatprep.subr.mxu0 0.0
    %2322 = vmatpush1.xpose.msra.mxu0 0.0
    %2323 = vmatprep.subr.mxu0 0.0
    %2324 = vmatpush1.xpose.msra.mxu0 0.0
    %2325 = vmatprep.subr.mxu0 0.0
    %2326 = vmatpush1.xpose.msra.mxu0 0.0
    %2327 = vmatprep.subr.mxu0 0.0
    %2328 = vmatpush1.xpose.msra.mxu0 0.0
    %2329 = vmatprep.subr.mxu0 0.0
    %2330 = vmatpush1.xpose.msra.mxu0 0.0
    %2331 = vmatprep.subr.mxu0 0.0
    %2332 = vmatpush1.xpose.msra.mxu0 0.0
    %2333 = vmatprep.subr.mxu0 0.0
    %2334 = vmatpush1.xpose.msra.mxu0 0.0
    %2335 = vmatprep.subr.mxu0 0.0
    %2336 = vmatpush1.xpose.msra.mxu0 0.0
    %2337 = vmatprep.subr.mxu0 0.0
    %2338 = vmatpush1.xpose.msra.mxu0 0.0
    %2339 = vmatprep.subr.mxu0 0.0
    %2340 = vmatpush1.xpose.msra.mxu0 0.0
    %2341 = vmatprep.subr.mxu0 0.0
    %2342 = vmatpush1.xpose.msra.mxu0 0.0
    %2343 = vmatprep.subr.mxu0 0.0
    %2344 = vmatpush1.xpose.msra.mxu0 0.0
    %2345 = vmatprep.subr.mxu0 0.0
    %2346 = vmatpush1.xpose.msra.mxu0 0.0
    %2347 = vmatprep.subr.mxu0 0.0
    %2348 = vmatpush1.xpose.msra.mxu0 0.0
    %2349 = vmatprep.subr.mxu0 0.0
    %2350 = vmatpush1.xpose.msra.mxu0 0.0
    %2351 = vmatprep.subr.mxu0 0.0
    %2352 = vmatpush1.xpose.msra.mxu0 0.0
    %2353 = vmatprep.subr.mxu0 0.0
    %2354 = vmatpush1.xpose.msra.mxu0 0.0
    %2355 = vmatprep.subr.mxu0 0.0
    %2356 = vmatpush1.xpose.msra.mxu0 0.0
    %2357 = vmatprep.subr.mxu0 0.0
    %2358 = vmatpush1.xpose.msra.mxu0 0.0
    %2359 = vmatprep.subr.mxu0 0.0
    %2360 = vmatpush1.xpose.msra.mxu0 0.0
    %2361 = vmatprep.mubr.f32.mxu0 0.0
    %2362 = vmatmul.mubr.f32.gmra.mrb[0].mxu0 %v2292
    %v2363 = vpop.f32.mrb[0].mxu0
    %v2364 = vadd.f32 0.0, %v2363
    %v2365 = vpop.f32.mrb[0].mxu0
    %2366 = vdwg.mxu0
    %v2368 = vsel %vm2062, %v672, 0
    %v2371 = vsel %vm2062, %v1256, 0
    %2373 = vmatprep.subr.mxu0 0.0
    %2374 = vmatpush1.xpose.msra.mxu0 %v2371
    %2375 = vmatprep.subr.mxu0 0.0
    %2376 = vmatpush1.xpose.msra.mxu0 0.0
    %2377 = vmatprep.subr.mxu0 0.0
    %2378 = vmatpush1.xpose.msra.mxu0 0.0
    %2379 = vmatprep.subr.mxu0 0.0
    %2380 = vmatpush1.xpose.msra.mxu0 0.0
    %2381 = vmatprep.subr.mxu0 0.0
    %2382 = vmatpush1.xpose.msra.mxu0 0.0
    %2383 = vmatprep.subr.mxu0 0.0
    %2384 = vmatpush1.xpose.msra.mxu0 0.0
    %2385 = vmatprep.subr.mxu0 0.0
    %2386 = vmatpush1.xpose.msra.mxu0 0.0
    %2387 = vmatprep.subr.mxu0 0.0
    %2388 = vmatpush1.xpose.msra.mxu0 0.0
    %2389 = vmatprep.subr.mxu0 0.0
    %2390 = vmatpush1.xpose.msra.mxu0 0.0
    %2391 = vmatprep.subr.mxu0 0.0
    %2392 = vmatpush1.xpose.msra.mxu0 0.0
    %2393 = vmatprep.subr.mxu0 0.0
    %2394 = vmatpush1.xpose.msra.mxu0 0.0
    %2395 = vmatprep.subr.mxu0 0.0
    %2396 = vmatpush1.xpose.msra.mxu0 0.0
    %2397 = vmatprep.subr.mxu0 0.0
    %2398 = vmatpush1.xpose.msra.mxu0 0.0
    %2399 = vmatprep.subr.mxu0 0.0
    %2400 = vmatpush1.xpose.msra.mxu0 0.0
    %2401 = vmatprep.subr.mxu0 0.0
    %2402 = vmatpush1.xpose.msra.mxu0 0.0
    %2403 = vmatprep.subr.mxu0 0.0
    %2404 = vmatpush1.xpose.msra.mxu0 0.0
    %2405 = vmatprep.subr.mxu0 0.0
    %2406 = vmatpush1.xpose.msra.mxu0 0.0
    %2407 = vmatprep.subr.mxu0 0.0
    %2408 = vmatpush1.xpose.msra.mxu0 0.0
    %2409 = vmatprep.subr.mxu0 0.0
    %2410 = vmatpush1.xpose.msra.mxu0 0.0
    %2411 = vmatprep.subr.mxu0 0.0
    %2412 = vmatpush1.xpose.msra.mxu0 0.0
    %2413 = vmatprep.subr.mxu0 0.0
    %2414 = vmatpush1.xpose.msra.mxu0 0.0
    %2415 = vmatprep.subr.mxu0 0.0
    %2416 = vmatpush1.xpose.msra.mxu0 0.0
    %2417 = vmatprep.subr.mxu0 0.0
    %2418 = vmatpush1.xpose.msra.mxu0 0.0
    %2419 = vmatprep.subr.mxu0 0.0
    %2420 = vmatpush1.xpose.msra.mxu0 0.0
    %2421 = vmatprep.subr.mxu0 0.0
    %2422 = vmatpush1.xpose.msra.mxu0 0.0
    %2423 = vmatprep.subr.mxu0 0.0
    %2424 = vmatpush1.xpose.msra.mxu0 0.0
    %2425 = vmatprep.subr.mxu0 0.0
    %2426 = vmatpush1.xpose.msra.mxu0 0.0
    %2427 = vmatprep.subr.mxu0 0.0
    %2428 = vmatpush1.xpose.msra.mxu0 0.0
    %2429 = vmatprep.subr.mxu0 0.0
    %2430 = vmatpush1.xpose.msra.mxu0 0.0
    %2431 = vmatprep.subr.mxu0 0.0
    %2432 = vmatpush1.xpose.msra.mxu0 0.0
    %2433 = vmatprep.subr.mxu0 0.0
    %2434 = vmatpush1.xpose.msra.mxu0 0.0
    %2435 = vmatprep.subr.mxu0 0.0
    %2436 = vmatpush1.xpose.msra.mxu0 0.0
    %2437 = vmatprep.mubr.f32.mxu0 0.0
    %2438 = vmatmul.mubr.f32.gmra.mrb[0].mxu0 %v2368
    %v2439 = vpop.f32.mrb[0].mxu0
    %v2440 = vadd.f32 0.0, %v2439
    %v2441 = vpop.f32.mrb[0].mxu0
    %2442 = vdwg.mxu0
    %v2444 = vsel %vm2062, %v745, 0
    %v2447 = vsel %vm2062, %v1329, 0
    %2449 = vmatprep.subr.mxu0 0.0
    %2450 = vmatpush1.xpose.msra.mxu0 %v2447
    %2451 = vmatprep.subr.mxu0 0.0
    %2452 = vmatpush1.xpose.msra.mxu0 0.0
    %2453 = vmatprep.subr.mxu0 0.0
    %2454 = vmatpush1.xpose.msra.mxu0 0.0
    %2455 = vmatprep.subr.mxu0 0.0
    %2456 = vmatpush1.xpose.msra.mxu0 0.0
    %2457 = vmatprep.subr.mxu0 0.0
    %2458 = vmatpush1.xpose.msra.mxu0 0.0
    %2459 = vmatprep.subr.mxu0 0.0
    %2460 = vmatpush1.xpose.msra.mxu0 0.0
    %2461 = vmatprep.subr.mxu0 0.0
    %2462 = vmatpush1.xpose.msra.mxu0 0.0
    %2463 = vmatprep.subr.mxu0 0.0
    %2464 = vmatpush1.xpose.msra.mxu0 0.0
    %2465 = vmatprep.subr.mxu0 0.0
    %2466 = vmatpush1.xpose.msra.mxu0 0.0
    %2467 = vmatprep.subr.mxu0 0.0
    %2468 = vmatpush1.xpose.msra.mxu0 0.0
    %2469 = vmatprep.subr.mxu0 0.0
    %2470 = vmatpush1.xpose.msra.mxu0 0.0
    %2471 = vmatprep.subr.mxu0 0.0
    %2472 = vmatpush1.xpose.msra.mxu0 0.0
    %2473 = vmatprep.subr.mxu0 0.0
    %2474 = vmatpush1.xpose.msra.mxu0 0.0
    %2475 = vmatprep.subr.mxu0 0.0
    %2476 = vmatpush1.xpose.msra.mxu0 0.0
    %2477 = vmatprep.subr.mxu0 0.0
    %2478 = vmatpush1.xpose.msra.mxu0 0.0
    %2479 = vmatprep.subr.mxu0 0.0
    %2480 = vmatpush1.xpose.msra.mxu0 0.0
    %2481 = vmatprep.subr.mxu0 0.0
    %2482 = vmatpush1.xpose.msra.mxu0 0.0
    %2483 = vmatprep.subr.mxu0 0.0
    %2484 = vmatpush1.xpose.msra.mxu0 0.0
    %2485 = vmatprep.subr.mxu0 0.0
    %2486 = vmatpush1.xpose.msra.mxu0 0.0
    %2487 = vmatprep.subr.mxu0 0.0
    %2488 = vmatpush1.xpose.msra.mxu0 0.0
    %2489 = vmatprep.subr.mxu0 0.0
    %2490 = vmatpush1.xpose.msra.mxu0 0.0
    %2491 = vmatprep.subr.mxu0 0.0
    %2492 = vmatpush1.xpose.msra.mxu0 0.0
    %2493 = vmatprep.subr.mxu0 0.0
    %2494 = vmatpush1.xpose.msra.mxu0 0.0
    %2495 = vmatprep.subr.mxu0 0.0
    %2496 = vmatpush1.xpose.msra.mxu0 0.0
    %2497 = vmatprep.subr.mxu0 0.0
    %2498 = vmatpush1.xpose.msra.mxu0 0.0
    %2499 = vmatprep.subr.mxu0 0.0
    %2500 = vmatpush1.xpose.msra.mxu0 0.0
    %2501 = vmatprep.subr.mxu0 0.0
    %2502 = vmatpush1.xpose.msra.mxu0 0.0
    %2503 = vmatprep.subr.mxu0 0.0
    %2504 = vmatpush1.xpose.msra.mxu0 0.0
    %2505 = vmatprep.subr.mxu0 0.0
    %2506 = vmatpush1.xpose.msra.mxu0 0.0
    %2507 = vmatprep.subr.mxu0 0.0
    %2508 = vmatpush1.xpose.msra.mxu0 0.0
    %2509 = vmatprep.subr.mxu0 0.0
    %2510 = vmatpush1.xpose.msra.mxu0 0.0
    %2511 = vmatprep.subr.mxu0 0.0
    %2512 = vmatpush1.xpose.msra.mxu0 0.0
    %2513 = vmatprep.mubr.f32.mxu0 0.0
    %2514 = vmatmul.mubr.f32.gmra.mrb[0].mxu0 %v2444
    %v2515 = vpop.f32.mrb[0].mxu0
    %v2516 = vadd.f32 0.0, %v2515
    %v2517 = vpop.f32.mrb[0].mxu0
    %2518 = vdwg.mxu0
    %v2520 = vsel %vm2062, %v818, 0
    %v2523 = vsel %vm2062, %v1402, 0
    %2525 = vmatprep.subr.mxu0 0.0
    %2526 = vmatpush1.xpose.msra.mxu0 %v2523
    %2527 = vmatprep.subr.mxu0 0.0
    %2528 = vmatpush1.xpose.msra.mxu0 0.0
    %2529 = vmatprep.subr.mxu0 0.0
    %2530 = vmatpush1.xpose.msra.mxu0 0.0
    %2531 = vmatprep.subr.mxu0 0.0
    %2532 = vmatpush1.xpose.msra.mxu0 0.0
    %2533 = vmatprep.subr.mxu0 0.0
    %2534 = vmatpush1.xpose.msra.mxu0 0.0
    %2535 = vmatprep.subr.mxu0 0.0
    %2536 = vmatpush1.xpose.msra.mxu0 0.0
    %2537 = vmatprep.subr.mxu0 0.0
    %2538 = vmatpush1.xpose.msra.mxu0 0.0
    %2539 = vmatprep.subr.mxu0 0.0
    %2540 = vmatpush1.xpose.msra.mxu0 0.0
    %2541 = vmatprep.subr.mxu0 0.0
    %2542 = vmatpush1.xpose.msra.mxu0 0.0
    %2543 = vmatprep.subr.mxu0 0.0
    %2544 = vmatpush1.xpose.msra.mxu0 0.0
    %2545 = vmatprep.subr.mxu0 0.0
    %2546 = vmatpush1.xpose.msra.mxu0 0.0
    %2547 = vmatprep.subr.mxu0 0.0
    %2548 = vmatpush1.xpose.msra.mxu0 0.0
    %2549 = vmatprep.subr.mxu0 0.0
    %2550 = vmatpush1.xpose.msra.mxu0 0.0
    %2551 = vmatprep.subr.mxu0 0.0
    %2552 = vmatpush1.xpose.msra.mxu0 0.0
    %2553 = vmatprep.subr.mxu0 0.0
    %2554 = vmatpush1.xpose.msra.mxu0 0.0
    %2555 = vmatprep.subr.mxu0 0.0
    %2556 = vmatpush1.xpose.msra.mxu0 0.0
    %2557 = vmatprep.subr.mxu0 0.0
    %2558 = vmatpush1.xpose.msra.mxu0 0.0
    %2559 = vmatprep.subr.mxu0 0.0
    %2560 = vmatpush1.xpose.msra.mxu0 0.0
    %2561 = vmatprep.subr.mxu0 0.0
    %2562 = vmatpush1.xpose.msra.mxu0 0.0
    %2563 = vmatprep.subr.mxu0 0.0
    %2564 = vmatpush1.xpose.msra.mxu0 0.0
    %2565 = vmatprep.subr.mxu0 0.0
    %2566 = vmatpush1.xpose.msra.mxu0 0.0
    %2567 = vmatprep.subr.mxu0 0.0
    %2568 = vmatpush1.xpose.msra.mxu0 0.0
    %2569 = vmatprep.subr.mxu0 0.0
    %2570 = vmatpush1.xpose.msra.mxu0 0.0
    %2571 = vmatprep.subr.mxu0 0.0
    %2572 = vmatpush1.xpose.msra.mxu0 0.0
    %2573 = vmatprep.subr.mxu0 0.0
    %2574 = vmatpush1.xpose.msra.mxu0 0.0
    %2575 = vmatprep.subr.mxu0 0.0
    %2576 = vmatpush1.xpose.msra.mxu0 0.0
    %2577 = vmatprep.subr.mxu0 0.0
    %2578 = vmatpush1.xpose.msra.mxu0 0.0
    %2579 = vmatprep.subr.mxu0 0.0
    %2580 = vmatpush1.xpose.msra.mxu0 0.0
    %2581 = vmatprep.subr.mxu0 0.0
    %2582 = vmatpush1.xpose.msra.mxu0 0.0
    %2583 = vmatprep.subr.mxu0 0.0
    %2584 = vmatpush1.xpose.msra.mxu0 0.0
    %2585 = vmatprep.subr.mxu0 0.0
    %2586 = vmatpush1.xpose.msra.mxu0 0.0
    %2587 = vmatprep.subr.mxu0 0.0
    %2588 = vmatpush1.xpose.msra.mxu0 0.0
    %2589 = vmatprep.mubr.f32.mxu0 0.0
    %2590 = vmatmul.mubr.f32.gmra.mrb[0].mxu0 %v2520
    %v2591 = vpop.f32.mrb[0].mxu0
    %v2592 = vadd.f32 0.0, %v2591
    %v2593 = vpop.f32.mrb[0].mxu0
    %2594 = vdwg.mxu0
    %v2596 = vsel %vm2062, %v891, 0
    %v2599 = vsel %vm2062, %v1475, 0
    %2601 = vmatprep.subr.mxu0 0.0
    %2602 = vmatpush1.xpose.msra.mxu0 %v2599
    %2603 = vmatprep.subr.mxu0 0.0
    %2604 = vmatpush1.xpose.msra.mxu0 0.0
    %2605 = vmatprep.subr.mxu0 0.0
    %2606 = vmatpush1.xpose.msra.mxu0 0.0
    %2607 = vmatprep.subr.mxu0 0.0
    %2608 = vmatpush1.xpose.msra.mxu0 0.0
    %2609 = vmatprep.subr.mxu0 0.0
    %2610 = vmatpush1.xpose.msra.mxu0 0.0
    %2611 = vmatprep.subr.mxu0 0.0
    %2612 = vmatpush1.xpose.msra.mxu0 0.0
    %2613 = vmatprep.subr.mxu0 0.0
    %2614 = vmatpush1.xpose.msra.mxu0 0.0
    %2615 = vmatprep.subr.mxu0 0.0
    %2616 = vmatpush1.xpose.msra.mxu0 0.0
    %2617 = vmatprep.subr.mxu0 0.0
    %2618 = vmatpush1.xpose.msra.mxu0 0.0
    %2619 = vmatprep.subr.mxu0 0.0
    %2620 = vmatpush1.xpose.msra.mxu0 0.0
    %2621 = vmatprep.subr.mxu0 0.0
    %2622 = vmatpush1.xpose.msra.mxu0 0.0
    %2623 = vmatprep.subr.mxu0 0.0
    %2624 = vmatpush1.xpose.msra.mxu0 0.0
    %2625 = vmatprep.subr.mxu0 0.0
    %2626 = vmatpush1.xpose.msra.mxu0 0.0
    %2627 = vmatprep.subr.mxu0 0.0
    %2628 = vmatpush1.xpose.msra.mxu0 0.0
    %2629 = vmatprep.subr.mxu0 0.0
    %2630 = vmatpush1.xpose.msra.mxu0 0.0
    %2631 = vmatprep.subr.mxu0 0.0
    %2632 = vmatpush1.xpose.msra.mxu0 0.0
    %2633 = vmatprep.subr.mxu0 0.0
    %2634 = vmatpush1.xpose.msra.mxu0 0.0
    %2635 = vmatprep.subr.mxu0 0.0
    %2636 = vmatpush1.xpose.msra.mxu0 0.0
    %2637 = vmatprep.subr.mxu0 0.0
    %2638 = vmatpush1.xpose.msra.mxu0 0.0
    %2639 = vmatprep.subr.mxu0 0.0
    %2640 = vmatpush1.xpose.msra.mxu0 0.0
    %2641 = vmatprep.subr.mxu0 0.0
    %2642 = vmatpush1.xpose.msra.mxu0 0.0
    %2643 = vmatprep.subr.mxu0 0.0
    %2644 = vmatpush1.xpose.msra.mxu0 0.0
    %2645 = vmatprep.subr.mxu0 0.0
    %2646 = vmatpush1.xpose.msra.mxu0 0.0
    %2647 = vmatprep.subr.mxu0 0.0
    %2648 = vmatpush1.xpose.msra.mxu0 0.0
    %2649 = vmatprep.subr.mxu0 0.0
    %2650 = vmatpush1.xpose.msra.mxu0 0.0
    %2651 = vmatprep.subr.mxu0 0.0
    %2652 = vmatpush1.xpose.msra.mxu0 0.0
    %2653 = vmatprep.subr.mxu0 0.0
    %2654 = vmatpush1.xpose.msra.mxu0 0.0
    %2655 = vmatprep.subr.mxu0 0.0
    %2656 = vmatpush1.xpose.msra.mxu0 0.0
    %2657 = vmatprep.subr.mxu0 0.0
    %2658 = vmatpush1.xpose.msra.mxu0 0.0
    %2659 = vmatprep.subr.mxu0 0.0
    %2660 = vmatpush1.xpose.msra.mxu0 0.0
    %2661 = vmatprep.subr.mxu0 0.0
    %2662 = vmatpush1.xpose.msra.mxu0 0.0
    %2663 = vmatprep.subr.mxu0 0.0
    %2664 = vmatpush1.xpose.msra.mxu0 0.0
    %2665 = vmatprep.mubr.f32.mxu0 0.0
    %2666 = vmatmul.mubr.f32.gmra.mrb[0].mxu0 %v2596
    %v2667 = vpop.f32.mrb[0].mxu0
    %v2668 = vadd.f32 0.0, %v2667
    %v2669 = vpop.f32.mrb[0].mxu0
    %2670 = vdwg.mxu0
    %v2671 = vmul.f32 %v2136, 0.35355338
    %v2672 = vmul.f32 %v2212, 0.35355338
    %v2673 = vmul.f32 %v2288, 0.35355338
    %v2674 = vmul.f32 %v2364, 0.35355338
    %v2675 = vmul.f32 %v2440, 0.35355338
    %v2676 = vmul.f32 %v2516, 0.35355338
    %v2677 = vmul.f32 %v2592, 0.35355338
    %v2678 = vmul.f32 %v2668, 0.35355338
    %v2679 = vsel %vm2062, %v2671, -inf
    %2680 = vmax.xlane.f32.xlu0 %v2679
    %v2681 = vpop.xlane.xlu0 %2680
    %v2682 = vsel %vm2062, %v2672, -inf
    %2683 = vmax.xlane.f32.xlu0 %v2682
    %v2684 = vpop.xlane.xlu0 %2683
    %v2685 = vsel %vm2062, %v2673, -inf
    %2686 = vmax.xlane.f32.xlu0 %v2685
    %v2687 = vpop.xlane.xlu0 %2686
    %v2688 = vsel %vm2062, %v2674, -inf
    %2689 = vmax.xlane.f32.xlu0 %v2688
    %v2690 = vpop.xlane.xlu0 %2689
    %v2691 = vsel %vm2062, %v2675, -inf
    %2692 = vmax.xlane.f32.xlu0 %v2691
    %v2693 = vpop.xlane.xlu0 %2692
    %v2694 = vsel %vm2062, %v2676, -inf
    %2695 = vmax.xlane.f32.xlu0 %v2694
    %v2696 = vpop.xlane.xlu0 %2695
    %v2697 = vsel %vm2062, %v2677, -inf
    %2698 = vmax.xlane.f32.xlu0 %v2697
    %v2699 = vpop.xlane.xlu0 %2698
    %v2700 = vsel %vm2062, %v2678, -inf
    %2701 = vmax.xlane.f32.xlu0 %v2700
    %v2702 = vpop.xlane.xlu0 %2701
    %v2703 = vsub.f32 %v2671, %v2681
    %v2704 = vsub.f32 %v2672, %v2684
    %v2705 = vsub.f32 %v2673, %v2687
    %v2706 = vsub.f32 %v2674, %v2690
    %v2707 = vsub.f32 %v2675, %v2693
    %v2708 = vsub.f32 %v2676, %v2696
    %v2709 = vsub.f32 %v2677, %v2699
    %v2710 = vsub.f32 %v2678, %v2702
    %v2711 = vmul.f32 %v2703, 1.442695
    %v2712 = vpow.pop %v2711
    %v2713 = vmul.f32 %v2704, 1.442695
    %v2714 = vpow.pop %v2713
    %v2715 = vmul.f32 %v2705, 1.442695
    %v2716 = vpow.pop %v2715
    %v2717 = vmul.f32 %v2706, 1.442695
    %v2718 = vpow.pop %v2717
    %v2719 = vmul.f32 %v2707, 1.442695
    %v2720 = vpow.pop %v2719
    %v2721 = vmul.f32 %v2708, 1.442695
    %v2722 = vpow.pop %v2721
    %v2723 = vmul.f32 %v2709, 1.442695
    %v2724 = vpow.pop %v2723
    %v2725 = vmul.f32 %v2710, 1.442695
    %v2726 = vpow.pop %v2725
    %v2727 = vsel %vm2062, %v2712, 0.0
    %2728 = vadd.xlane.f32.xlu0 %v2727
    %v2729 = vpop.xlane.xlu0 %2728
    %v2730 = vsel %vm2062, %v2714, 0.0
    %2731 = vadd.xlane.f32.xlu0 %v2730
    %v2732 = vpop.xlane.xlu0 %2731
    %v2733 = vsel %vm2062, %v2716, 0.0
    %2734 = vadd.xlane.f32.xlu0 %v2733
    %v2735 = vpop.xlane.xlu0 %2734
    %v2736 = vsel %vm2062, %v2718, 0.0
    %2737 = vadd.xlane.f32.xlu0 %v2736
    %v2738 = vpop.xlane.xlu0 %2737
    %v2739 = vsel %vm2062, %v2720, 0.0
    %2740 = vadd.xlane.f32.xlu0 %v2739
    %v2741 = vpop.xlane.xlu0 %2740
    %v2742 = vsel %vm2062, %v2722, 0.0
    %2743 = vadd.xlane.f32.xlu0 %v2742
    %v2744 = vpop.xlane.xlu0 %2743
    %v2745 = vsel %vm2062, %v2724, 0.0
    %2746 = vadd.xlane.f32.xlu0 %v2745
    %v2747 = vpop.xlane.xlu0 %2746
    %v2748 = vsel %vm2062, %v2726, 0.0
    %2749 = vadd.xlane.f32.xlu0 %v2748
    %v2750 = vpop.xlane.xlu0 %2749
    %v2751 = vrcp.pop %v2729
    %v2752 = vrcp.pop %v2732
    %v2753 = vrcp.pop %v2735
    %v2754 = vrcp.pop %v2738
    %v2755 = vrcp.pop %v2741
    %v2756 = vrcp.pop %v2744
    %v2757 = vrcp.pop %v2747
    %v2758 = vrcp.pop %v2750
    %v2759 = vmul.f32 %v2712, %v2751
    %v2760 = vmul.f32 %v2714, %v2752
    %v2761 = vmul.f32 %v2716, %v2753
    %v2762 = vmul.f32 %v2718, %v2754
    %v2763 = vmul.f32 %v2720, %v2755
    %v2764 = vmul.f32 %v2722, %v2756
    %v2765 = vmul.f32 %v2724, %v2757
    %v2766 = vmul.f32 %v2726, %v2758
    %v2768 = vsel %vm2062, %v2759, 0
    %2770 = vmatprep.subr.mxu0 0.0
    %2771 = vmatpush1.msra.mxu0 %v1548
    %2772 = vmatprep.subr.mxu0 0.0
    %2773 = vmatpush1.msra.mxu0 0.0
    %2774 = vmatprep.subr.mxu0 0.0
    %2775 = vmatpush1.msra.mxu0 0.0
    %2776 = vmatprep.subr.mxu0 0.0
    %2777 = vmatpush1.msra.mxu0 0.0
    %2778 = vmatprep.subr.mxu0 0.0
    %2779 = vmatpush1.msra.mxu0 0.0
    %2780 = vmatprep.subr.mxu0 0.0
    %2781 = vmatpush1.msra.mxu0 0.0
    %2782 = vmatprep.subr.mxu0 0.0
    %2783 = vmatpush1.msra.mxu0 0.0
    %2784 = vmatprep.subr.mxu0 0.0
    %2785 = vmatpush1.msra.mxu0 0.0
    %2786 = vmatprep.subr.mxu0 0.0
    %2787 = vmatpush1.msra.mxu0 0.0
    %2788 = vmatprep.subr.mxu0 0.0
    %2789 = vmatpush1.msra.mxu0 0.0
    %2790 = vmatprep.subr.mxu0 0.0
    %2791 = vmatpush1.msra.mxu0 0.0
    %2792 = vmatprep.subr.mxu0 0.0
    %2793 = vmatpush1.msra.mxu0 0.0
    %2794 = vmatprep.subr.mxu0 0.0
    %2795 = vmatpush1.msra.mxu0 0.0
    %2796 = vmatprep.subr.mxu0 0.0
    %2797 = vmatpush1.msra.mxu0 0.0
    %2798 = vmatprep.subr.mxu0 0.0
    %2799 = vmatpush1.msra.mxu0 0.0
    %2800 = vmatprep.subr.mxu0 0.0
    %2801 = vmatpush1.msra.mxu0 0.0
    %2802 = vmatprep.subr.mxu0 0.0
    %2803 = vmatpush1.msra.mxu0 0.0
    %2804 = vmatprep.subr.mxu0 0.0
    %2805 = vmatpush1.msra.mxu0 0.0
    %2806 = vmatprep.subr.mxu0 0.0
    %2807 = vmatpush1.msra.mxu0 0.0
    %2808 = vmatprep.subr.mxu0 0.0
    %2809 = vmatpush1.msra.mxu0 0.0
    %2810 = vmatprep.subr.mxu0 0.0
    %2811 = vmatpush1.msra.mxu0 0.0
    %2812 = vmatprep.subr.mxu0 0.0
    %2813 = vmatpush1.msra.mxu0 0.0
    %2814 = vmatprep.subr.mxu0 0.0
    %2815 = vmatpush1.msra.mxu0 0.0
    %2816 = vmatprep.subr.mxu0 0.0
    %2817 = vmatpush1.msra.mxu0 0.0
    %2818 = vmatprep.subr.mxu0 0.0
    %2819 = vmatpush1.msra.mxu0 0.0
    %2820 = vmatprep.subr.mxu0 0.0
    %2821 = vmatpush1.msra.mxu0 0.0
    %2822 = vmatprep.subr.mxu0 0.0
    %2823 = vmatpush1.msra.mxu0 0.0
    %2824 = vmatprep.subr.mxu0 0.0
    %2825 = vmatpush1.msra.mxu0 0.0
    %2826 = vmatprep.subr.mxu0 0.0
    %2827 = vmatpush1.msra.mxu0 0.0
    %2828 = vmatprep.subr.mxu0 0.0
    %2829 = vmatpush1.msra.mxu0 0.0
    %2830 = vmatprep.subr.mxu0 0.0
    %2831 = vmatpush1.msra.mxu0 0.0
    %2832 = vmatprep.subr.mxu0 0.0
    %2833 = vmatpush1.msra.mxu0 0.0
    %2834 = vmatprep.mubr.f32.mxu0 0.0
    %2835 = vmatmul.mubr.f32.gmra.mrb[0].mxu0 %v2768
    %v2836 = vpop.f32.mrb[0].mxu0
    %v2837 = vadd.f32 0.0, %v2836
    %v2838 = vpop.f32.mrb[0].mxu0
    %2839 = vdwg.mxu0
    %v2841 = vsel %vm2062, %v2760, 0
    %2843 = vmatprep.subr.mxu0 0.0
    %2844 = vmatpush1.msra.mxu0 %v1621
    %2845 = vmatprep.subr.mxu0 0.0
    %2846 = vmatpush1.msra.mxu0 0.0
    %2847 = vmatprep.subr.mxu0 0.0
    %2848 = vmatpush1.msra.mxu0 0.0
    %2849 = vmatprep.subr.mxu0 0.0
    %2850 = vmatpush1.msra.mxu0 0.0
    %2851 = vmatprep.subr.mxu0 0.0
    %2852 = vmatpush1.msra.mxu0 0.0
    %2853 = vmatprep.subr.mxu0 0.0
    %2854 = vmatpush1.msra.mxu0 0.0
    %2855 = vmatprep.subr.mxu0 0.0
    %2856 = vmatpush1.msra.mxu0 0.0
    %2857 = vmatprep.subr.mxu0 0.0
    %2858 = vmatpush1.msra.mxu0 0.0
    %2859 = vmatprep.subr.mxu0 0.0
    %2860 = vmatpush1.msra.mxu0 0.0
    %2861 = vmatprep.subr.mxu0 0.0
    %2862 = vmatpush1.msra.mxu0 0.0
    %2863 = vmatprep.subr.mxu0 0.0
    %2864 = vmatpush1.msra.mxu0 0.0
    %2865 = vmatprep.subr.mxu0 0.0
    %2866 = vmatpush1.msra.mxu0 0.0
    %2867 = vmatprep.subr.mxu0 0.0
    %2868 = vmatpush1.msra.mxu0 0.0
    %2869 = vmatprep.subr.mxu0 0.0
    %2870 = vmatpush1.msra.mxu0 0.0
    %2871 = vmatprep.subr.mxu0 0.0
    %2872 = vmatpush1.msra.mxu0 0.0
    %2873 = vmatprep.subr.mxu0 0.0
    %2874 = vmatpush1.msra.mxu0 0.0
    %2875 = vmatprep.subr.mxu0 0.0
    %2876 = vmatpush1.msra.mxu0 0.0
    %2877 = vmatprep.subr.mxu0 0.0
    %2878 = vmatpush1.msra.mxu0 0.0
    %2879 = vmatprep.subr.mxu0 0.0
    %2880 = vmatpush1.msra.mxu0 0.0
    %2881 = vmatprep.subr.mxu0 0.0
    %2882 = vmatpush1.msra.mxu0 0.0
    %2883 = vmatprep.subr.mxu0 0.0
    %2884 = vmatpush1.msra.mxu0 0.0
    %2885 = vmatprep.subr.mxu0 0.0
    %2886 = vmatpush1.msra.mxu0 0.0
    %2887 = vmatprep.subr.mxu0 0.0
    %2888 = vmatpush1.msra.mxu0 0.0
    %2889 = vmatprep.subr.mxu0 0.0
    %2890 = vmatpush1.msra.mxu0 0.0
    %2891 = vmatprep.subr.mxu0 0.0
    %2892 = vmatpush1.msra.mxu0 0.0
    %2893 = vmatprep.subr.mxu0 0.0
    %2894 = vmatpush1.msra.mxu0 0.0
    %2895 = vmatprep.subr.mxu0 0.0
    %2896 = vmatpush1.msra.mxu0 0.0
    %2897 = vmatprep.subr.mxu0 0.0
    %2898 = vmatpush1.msra.mxu0 0.0
    %2899 = vmatprep.subr.mxu0 0.0
    %2900 = vmatpush1.msra.mxu0 0.0
    %2901 = vmatprep.subr.mxu0 0.0
    %2902 = vmatpush1.msra.mxu0 0.0
    %2903 = vmatprep.subr.mxu0 0.0
    %2904 = vmatpush1.msra.mxu0 0.0
    %2905 = vmatprep.subr.mxu0 0.0
    %2906 = vmatpush1.msra.mxu0 0.0
    %2907 = vmatprep.mubr.f32.mxu0 0.0
    %2908 = vmatmul.mubr.f32.gmra.mrb[0].mxu0 %v2841
    %v2909 = vpop.f32.mrb[0].mxu0
    %v2910 = vadd.f32 0.0, %v2909
    %v2911 = vpop.f32.mrb[0].mxu0
    %2912 = vdwg.mxu0
    %v2914 = vsel %vm2062, %v2761, 0
    %2916 = vmatprep.subr.mxu0 0.0
    %2917 = vmatpush1.msra.mxu0 %v1694
    %2918 = vmatprep.subr.mxu0 0.0
    %2919 = vmatpush1.msra.mxu0 0.0
    %2920 = vmatprep.subr.mxu0 0.0
    %2921 = vmatpush1.msra.mxu0 0.0
    %2922 = vmatprep.subr.mxu0 0.0
    %2923 = vmatpush1.msra.mxu0 0.0
    %2924 = vmatprep.subr.mxu0 0.0
    %2925 = vmatpush1.msra.mxu0 0.0
    %2926 = vmatprep.subr.mxu0 0.0
    %2927 = vmatpush1.msra.mxu0 0.0
    %2928 = vmatprep.subr.mxu0 0.0
    %2929 = vmatpush1.msra.mxu0 0.0
    %2930 = vmatprep.subr.mxu0 0.0
    %2931 = vmatpush1.msra.mxu0 0.0
    %2932 = vmatprep.subr.mxu0 0.0
    %2933 = vmatpush1.msra.mxu0 0.0
    %2934 = vmatprep.subr.mxu0 0.0
    %2935 = vmatpush1.msra.mxu0 0.0
    %2936 = vmatprep.subr.mxu0 0.0
    %2937 = vmatpush1.msra.mxu0 0.0
    %2938 = vmatprep.subr.mxu0 0.0
    %2939 = vmatpush1.msra.mxu0 0.0
    %2940 = vmatprep.subr.mxu0 0.0
    %2941 = vmatpush1.msra.mxu0 0.0
    %2942 = vmatprep.subr.mxu0 0.0
    %2943 = vmatpush1.msra.mxu0 0.0
    %2944 = vmatprep.subr.mxu0 0.0
    %2945 = vmatpush1.msra.mxu0 0.0
    %2946 = vmatprep.subr.mxu0 0.0
    %2947 = vmatpush1.msra.mxu0 0.0
    %2948 = vmatprep.subr.mxu0 0.0
    %2949 = vmatpush1.msra.mxu0 0.0
    %2950 = vmatprep.subr.mxu0 0.0
    %2951 = vmatpush1.msra.mxu0 0.0
    %2952 = vmatprep.subr.mxu0 0.0
    %2953 = vmatpush1.msra.mxu0 0.0
    %2954 = vmatprep.subr.mxu0 0.0
    %2955 = vmatpush1.msra.mxu0 0.0
    %2956 = vmatprep.subr.mxu0 0.0
    %2957 = vmatpush1.msra.mxu0 0.0
    %2958 = vmatprep.subr.mxu0 0.0
    %2959 = vmatpush1.msra.mxu0 0.0
    %2960 = vmatprep.subr.mxu0 0.0
    %2961 = vmatpush1.msra.mxu0 0.0
    %2962 = vmatprep.subr.mxu0 0.0
    %2963 = vmatpush1.msra.mxu0 0.0
    %2964 = vmatprep.subr.mxu0 0.0
    %2965 = vmatpush1.msra.mxu0 0.0
    %2966 = vmatprep.subr.mxu0 0.0
    %2967 = vmatpush1.msra.mxu0 0.0
    %2968 = vmatprep.subr.mxu0 0.0
    %2969 = vmatpush1.msra.mxu0 0.0
    %2970 = vmatprep.subr.mxu0 0.0
    %2971 = vmatpush1.msra.mxu0 0.0
    %2972 = vmatprep.subr.mxu0 0.0
    %2973 = vmatpush1.msra.mxu0 0.0
    %2974 = vmatprep.subr.mxu0 0.0
    %2975 = vmatpush1.msra.mxu0 0.0
    %2976 = vmatprep.subr.mxu0 0.0
    %2977 = vmatpush1.msra.mxu0 0.0
    %2978 = vmatprep.subr.mxu0 0.0
    %2979 = vmatpush1.msra.mxu0 0.0
    %2980 = vmatprep.mubr.f32.mxu0 0.0
    %2981 = vmatmul.mubr.f32.gmra.mrb[0].mxu0 %v2914
    %v2982 = vpop.f32.mrb[0].mxu0
    %v2983 = vadd.f32 0.0, %v2982
    %v2984 = vpop.f32.mrb[0].mxu0
    %2985 = vdwg.mxu0
    %v2987 = vsel %vm2062, %v2762, 0
    %2989 = vmatprep.subr.mxu0 0.0
    %2990 = vmatpush1.msra.mxu0 %v1767
    %2991 = vmatprep.subr.mxu0 0.0
    %2992 = vmatpush1.msra.mxu0 0.0
    %2993 = vmatprep.subr.mxu0 0.0
    %2994 = vmatpush1.msra.mxu0 0.0
    %2995 = vmatprep.subr.mxu0 0.0
    %2996 = vmatpush1.msra.mxu0 0.0
    %2997 = vmatprep.subr.mxu0 0.0
    %2998 = vmatpush1.msra.mxu0 0.0
    %2999 = vmatprep.subr.mxu0 0.0
    %3000 = vmatpush1.msra.mxu0 0.0
    %3001 = vmatprep.subr.mxu0 0.0
    %3002 = vmatpush1.msra.mxu0 0.0
    %3003 = vmatprep.subr.mxu0 0.0
    %3004 = vmatpush1.msra.mxu0 0.0
    %3005 = vmatprep.subr.mxu0 0.0
    %3006 = vmatpush1.msra.mxu0 0.0
    %3007 = vmatprep.subr.mxu0 0.0
    %3008 = vmatpush1.msra.mxu0 0.0
    %3009 = vmatprep.subr.mxu0 0.0
    %3010 = vmatpush1.msra.mxu0 0.0
    %3011 = vmatprep.subr.mxu0 0.0
    %3012 = vmatpush1.msra.mxu0 0.0
    %3013 = vmatprep.subr.mxu0 0.0
    %3014 = vmatpush1.msra.mxu0 0.0
    %3015 = vmatprep.subr.mxu0 0.0
    %3016 = vmatpush1.msra.mxu0 0.0
    %3017 = vmatprep.subr.mxu0 0.0
    %3018 = vmatpush1.msra.mxu0 0.0
    %3019 = vmatprep.subr.mxu0 0.0
    %3020 = vmatpush1.msra.mxu0 0.0
    %3021 = vmatprep.subr.mxu0 0.0
    %3022 = vmatpush1.msra.mxu0 0.0
    %3023 = vmatprep.subr.mxu0 0.0
    %3024 = vmatpush1.msra.mxu0 0.0
    %3025 = vmatprep.subr.mxu0 0.0
    %3026 = vmatpush1.msra.mxu0 0.0
    %3027 = vmatprep.subr.mxu0 0.0
    %3028 = vmatpush1.msra.mxu0 0.0
    %3029 = vmatprep.subr.mxu0 0.0
    %3030 = vmatpush1.msra.mxu0 0.0
    %3031 = vmatprep.subr.mxu0 0.0
    %3032 = vmatpush1.msra.mxu0 0.0
    %3033 = vmatprep.subr.mxu0 0.0
    %3034 = vmatpush1.msra.mxu0 0.0
    %3035 = vmatprep.subr.mxu0 0.0
    %3036 = vmatpush1.msra.mxu0 0.0
    %3037 = vmatprep.subr.mxu0 0.0
    %3038 = vmatpush1.msra.mxu0 0.0
    %3039 = vmatprep.subr.mxu0 0.0
    %3040 = vmatpush1.msra.mxu0 0.0
    %3041 = vmatprep.subr.mxu0 0.0
    %3042 = vmatpush1.msra.mxu0 0.0
    %3043 = vmatprep.subr.mxu0 0.0
    %3044 = vmatpush1.msra.mxu0 0.0
    %3045 = vmatprep.subr.mxu0 0.0
    %3046 = vmatpush1.msra.mxu0 0.0
    %3047 = vmatprep.subr.mxu0 0.0
    %3048 = vmatpush1.msra.mxu0 0.0
    %3049 = vmatprep.subr.mxu0 0.0
    %3050 = vmatpush1.msra.mxu0 0.0
    %3051 = vmatprep.subr.mxu0 0.0
    %3052 = vmatpush1.msra.mxu0 0.0
    %3053 = vmatprep.mubr.f32.mxu0 0.0
    %3054 = vmatmul.mubr.f32.gmra.mrb[0].mxu0 %v2987
    %v3055 = vpop.f32.mrb[0].mxu0
    %v3056 = vadd.f32 0.0, %v3055
    %v3057 = vpop.f32.mrb[0].mxu0
    %3058 = vdwg.mxu0
    %v3060 = vsel %vm2062, %v2763, 0
    %3062 = vmatprep.subr.mxu0 0.0
    %3063 = vmatpush1.msra.mxu0 %v1840
    %3064 = vmatprep.subr.mxu0 0.0
    %3065 = vmatpush1.msra.mxu0 0.0
    %3066 = vmatprep.subr.mxu0 0.0
    %3067 = vmatpush1.msra.mxu0 0.0
    %3068 = vmatprep.subr.mxu0 0.0
    %3069 = vmatpush1.msra.mxu0 0.0
    %3070 = vmatprep.subr.mxu0 0.0
    %3071 = vmatpush1.msra.mxu0 0.0
    %3072 = vmatprep.subr.mxu0 0.0
    %3073 = vmatpush1.msra.mxu0 0.0
    %3074 = vmatprep.subr.mxu0 0.0
    %3075 = vmatpush1.msra.mxu0 0.0
    %3076 = vmatprep.subr.mxu0 0.0
    %3077 = vmatpush1.msra.mxu0 0.0
    %3078 = vmatprep.subr.mxu0 0.0
    %3079 = vmatpush1.msra.mxu0 0.0
    %3080 = vmatprep.subr.mxu0 0.0
    %3081 = vmatpush1.msra.mxu0 0.0
    %3082 = vmatprep.subr.mxu0 0.0
    %3083 = vmatpush1.msra.mxu0 0.0
    %3084 = vmatprep.subr.mxu0 0.0
    %3085 = vmatpush1.msra.mxu0 0.0
    %3086 = vmatprep.subr.mxu0 0.0
    %3087 = vmatpush1.msra.mxu0 0.0
    %3088 = vmatprep.subr.mxu0 0.0
    %3089 = vmatpush1.msra.mxu0 0.0
    %3090 = vmatprep.subr.mxu0 0.0
    %3091 = vmatpush1.msra.mxu0 0.0
    %3092 = vmatprep.subr.mxu0 0.0
    %3093 = vmatpush1.msra.mxu0 0.0
    %3094 = vmatprep.subr.mxu0 0.0
    %3095 = vmatpush1.msra.mxu0 0.0
    %3096 = vmatprep.subr.mxu0 0.0
    %3097 = vmatpush1.msra.mxu0 0.0
    %3098 = vmatprep.subr.mxu0 0.0
    %3099 = vmatpush1.msra.mxu0 0.0
    %3100 = vmatprep.subr.mxu0 0.0
    %3101 = vmatpush1.msra.mxu0 0.0
    %3102 = vmatprep.subr.mxu0 0.0
    %3103 = vmatpush1.msra.mxu0 0.0
    %3104 = vmatprep.subr.mxu0 0.0
    %3105 = vmatpush1.msra.mxu0 0.0
    %3106 = vmatprep.subr.mxu0 0.0
    %3107 = vmatpush1.msra.mxu0 0.0
    %3108 = vmatprep.subr.mxu0 0.0
    %3109 = vmatpush1.msra.mxu0 0.0
    %3110 = vmatprep.subr.mxu0 0.0
    %3111 = vmatpush1.msra.mxu0 0.0
    %3112 = vmatprep.subr.mxu0 0.0
    %3113 = vmatpush1.msra.mxu0 0.0
    %3114 = vmatprep.subr.mxu0 0.0
    %3115 = vmatpush1.msra.mxu0 0.0
    %3116 = vmatprep.subr.mxu0 0.0
    %3117 = vmatpush1.msra.mxu0 0.0
    %3118 = vmatprep.subr.mxu0 0.0
    %3119 = vmatpush1.msra.mxu0 0.0
    %3120 = vmatprep.subr.mxu0 0.0
    %3121 = vmatpush1.msra.mxu0 0.0
    %3122 = vmatprep.subr.mxu0 0.0
    %3123 = vmatpush1.msra.mxu0 0.0
    %3124 = vmatprep.subr.mxu0 0.0
    %3125 = vmatpush1.msra.mxu0 0.0
    %3126 = vmatprep.mubr.f32.mxu0 0.0
    %3127 = vmatmul.mubr.f32.gmra.mrb[0].mxu0 %v3060
    %v3128 = vpop.f32.mrb[0].mxu0
    %v3129 = vadd.f32 0.0, %v3128
    %v3130 = vpop.f32.mrb[0].mxu0
    %3131 = vdwg.mxu0
    %v3133 = vsel %vm2062, %v2764, 0
    %3135 = vmatprep.subr.mxu0 0.0
    %3136 = vmatpush1.msra.mxu0 %v1913
    %3137 = vmatprep.subr.mxu0 0.0
    %3138 = vmatpush1.msra.mxu0 0.0
    %3139 = vmatprep.subr.mxu0 0.0
    %3140 = vmatpush1.msra.mxu0 0.0
    %3141 = vmatprep.subr.mxu0 0.0
    %3142 = vmatpush1.msra.mxu0 0.0
    %3143 = vmatprep.subr.mxu0 0.0
    %3144 = vmatpush1.msra.mxu0 0.0
    %3145 = vmatprep.subr.mxu0 0.0
    %3146 = vmatpush1.msra.mxu0 0.0
    %3147 = vmatprep.subr.mxu0 0.0
    %3148 = vmatpush1.msra.mxu0 0.0
    %3149 = vmatprep.subr.mxu0 0.0
    %3150 = vmatpush1.msra.mxu0 0.0
    %3151 = vmatprep.subr.mxu0 0.0
    %3152 = vmatpush1.msra.mxu0 0.0
    %3153 = vmatprep.subr.mxu0 0.0
    %3154 = vmatpush1.msra.mxu0 0.0
    %3155 = vmatprep.subr.mxu0 0.0
    %3156 = vmatpush1.msra.mxu0 0.0
    %3157 = vmatprep.subr.mxu0 0.0
    %3158 = vmatpush1.msra.mxu0 0.0
    %3159 = vmatprep.subr.mxu0 0.0
    %3160 = vmatpush1.msra.mxu0 0.0
    %3161 = vmatprep.subr.mxu0 0.0
    %3162 = vmatpush1.msra.mxu0 0.0
    %3163 = vmatprep.subr.mxu0 0.0
    %3164 = vmatpush1.msra.mxu0 0.0
    %3165 = vmatprep.subr.mxu0 0.0
    %3166 = vmatpush1.msra.mxu0 0.0
    %3167 = vmatprep.subr.mxu0 0.0
    %3168 = vmatpush1.msra.mxu0 0.0
    %3169 = vmatprep.subr.mxu0 0.0
    %3170 = vmatpush1.msra.mxu0 0.0
    %3171 = vmatprep.subr.mxu0 0.0
    %3172 = vmatpush1.msra.mxu0 0.0
    %3173 = vmatprep.subr.mxu0 0.0
    %3174 = vmatpush1.msra.mxu0 0.0
    %3175 = vmatprep.subr.mxu0 0.0
    %3176 = vmatpush1.msra.mxu0 0.0
    %3177 = vmatprep.subr.mxu0 0.0
    %3178 = vmatpush1.msra.mxu0 0.0
    %3179 = vmatprep.subr.mxu0 0.0
    %3180 = vmatpush1.msra.mxu0 0.0
    %3181 = vmatprep.subr.mxu0 0.0
    %3182 = vmatpush1.msra.mxu0 0.0
    %3183 = vmatprep.subr.mxu0 0.0
    %3184 = vmatpush1.msra.mxu0 0.0
    %3185 = vmatprep.subr.mxu0 0.0
    %3186 = vmatpush1.msra.mxu0 0.0
    %3187 = vmatprep.subr.mxu0 0.0
    %3188 = vmatpush1.msra.mxu0 0.0
    %3189 = vmatprep.subr.mxu0 0.0
    %3190 = vmatpush1.msra.mxu0 0.0
    %3191 = vmatprep.subr.mxu0 0.0
    %3192 = vmatpush1.msra.mxu0 0.0
    %3193 = vmatprep.subr.mxu0 0.0
    %3194 = vmatpush1.msra.mxu0 0.0
    %3195 = vmatprep.subr.mxu0 0.0
    %3196 = vmatpush1.msra.mxu0 0.0
    %3197 = vmatprep.subr.mxu0 0.0
    %3198 = vmatpush1.msra.mxu0 0.0
    %3199 = vmatprep.mubr.f32.mxu0 0.0
    %3200 = vmatmul.mubr.f32.gmra.mrb[0].mxu0 %v3133
    %v3201 = vpop.f32.mrb[0].mxu0
    %v3202 = vadd.f32 0.0, %v3201
    %v3203 = vpop.f32.mrb[0].mxu0
    %3204 = vdwg.mxu0
    %v3206 = vsel %vm2062, %v2765, 0
    %3208 = vmatprep.subr.mxu0 0.0
    %3209 = vmatpush1.msra.mxu0 %v1986
    %3210 = vmatprep.subr.mxu0 0.0
    %3211 = vmatpush1.msra.mxu0 0.0
    %3212 = vmatprep.subr.mxu0 0.0
    %3213 = vmatpush1.msra.mxu0 0.0
    %3214 = vmatprep.subr.mxu0 0.0
    %3215 = vmatpush1.msra.mxu0 0.0
    %3216 = vmatprep.subr.mxu0 0.0
    %3217 = vmatpush1.msra.mxu0 0.0
    %3218 = vmatprep.subr.mxu0 0.0
    %3219 = vmatpush1.msra.mxu0 0.0
    %3220 = vmatprep.subr.mxu0 0.0
    %3221 = vmatpush1.msra.mxu0 0.0
    %3222 = vmatprep.subr.mxu0 0.0
    %3223 = vmatpush1.msra.mxu0 0.0
    %3224 = vmatprep.subr.mxu0 0.0
    %3225 = vmatpush1.msra.mxu0 0.0
    %3226 = vmatprep.subr.mxu0 0.0
    %3227 = vmatpush1.msra.mxu0 0.0
    %3228 = vmatprep.subr.mxu0 0.0
    %3229 = vmatpush1.msra.mxu0 0.0
    %3230 = vmatprep.subr.mxu0 0.0
    %3231 = vmatpush1.msra.mxu0 0.0
    %3232 = vmatprep.subr.mxu0 0.0
    %3233 = vmatpush1.msra.mxu0 0.0
    %3234 = vmatprep.subr.mxu0 0.0
    %3235 = vmatpush1.msra.mxu0 0.0
    %3236 = vmatprep.subr.mxu0 0.0
    %3237 = vmatpush1.msra.mxu0 0.0
    %3238 = vmatprep.subr.mxu0 0.0
    %3239 = vmatpush1.msra.mxu0 0.0
    %3240 = vmatprep.subr.mxu0 0.0
    %3241 = vmatpush1.msra.mxu0 0.0
    %3242 = vmatprep.subr.mxu0 0.0
    %3243 = vmatpush1.msra.mxu0 0.0
    %3244 = vmatprep.subr.mxu0 0.0
    %3245 = vmatpush1.msra.mxu0 0.0
    %3246 = vmatprep.subr.mxu0 0.0
    %3247 = vmatpush1.msra.mxu0 0.0
    %3248 = vmatprep.subr.mxu0 0.0
    %3249 = vmatpush1.msra.mxu0 0.0
    %3250 = vmatprep.subr.mxu0 0.0
    %3251 = vmatpush1.msra.mxu0 0.0
    %3252 = vmatprep.subr.mxu0 0.0
    %3253 = vmatpush1.msra.mxu0 0.0
    %3254 = vmatprep.subr.mxu0 0.0
    %3255 = vmatpush1.msra.mxu0 0.0
    %3256 = vmatprep.subr.mxu0 0.0
    %3257 = vmatpush1.msra.mxu0 0.0
    %3258 = vmatprep.subr.mxu0 0.0
    %3259 = vmatpush1.msra.mxu0 0.0
    %3260 = vmatprep.subr.mxu0 0.0
    %3261 = vmatpush1.msra.mxu0 0.0
    %3262 = vmatprep.subr.mxu0 0.0
    %3263 = vmatpush1.msra.mxu0 0.0
    %3264 = vmatprep.subr.mxu0 0.0
    %3265 = vmatpush1.msra.mxu0 0.0
    %3266 = vmatprep.subr.mxu0 0.0
    %3267 = vmatpush1.msra.mxu0 0.0
    %3268 = vmatprep.subr.mxu0 0.0
    %3269 = vmatpush1.msra.mxu0 0.0
    %3270 = vmatprep.subr.mxu0 0.0
    %3271 = vmatpush1.msra.mxu0 0.0
    %3272 = vmatprep.mubr.f32.mxu0 0.0
    %3273 = vmatmul.mubr.f32.gmra.mrb[0].mxu0 %v3206
    %v3274 = vpop.f32.mrb[0].mxu0
    %v3275 = vadd.f32 0.0, %v3274
    %v3276 = vpop.f32.mrb[0].mxu0
    %3277 = vdwg.mxu0
    %v3279 = vsel %vm2062, %v2766, 0
    %3281 = vmatprep.subr.mxu0 0.0
    %3282 = vmatpush1.msra.mxu0 %v2059
    %3283 = vmatprep.subr.mxu0 0.0
    %3284 = vmatpush1.msra.mxu0 0.0
    %3285 = vmatprep.subr.mxu0 0.0
    %3286 = vmatpush1.msra.mxu0 0.0
    %3287 = vmatprep.subr.mxu0 0.0
    %3288 = vmatpush1.msra.mxu0 0.0
    %3289 = vmatprep.subr.mxu0 0.0
    %3290 = vmatpush1.msra.mxu0 0.0
    %3291 = vmatprep.subr.mxu0 0.0
    %3292 = vmatpush1.msra.mxu0 0.0
    %3293 = vmatprep.subr.mxu0 0.0
    %3294 = vmatpush1.msra.mxu0 0.0
    %3295 = vmatprep.subr.mxu0 0.0
    %3296 = vmatpush1.msra.mxu0 0.0
    %3297 = vmatprep.subr.mxu0 0.0
    %3298 = vmatpush1.msra.mxu0 0.0
    %3299 = vmatprep.subr.mxu0 0.0
    %3300 = vmatpush1.msra.mxu0 0.0
    %3301 = vmatprep.subr.mxu0 0.0
    %3302 = vmatpush1.msra.mxu0 0.0
    %3303 = vmatprep.subr.mxu0 0.0
    %3304 = vmatpush1.msra.mxu0 0.0
    %3305 = vmatprep.subr.mxu0 0.0
    %3306 = vmatpush1.msra.mxu0 0.0
    %3307 = vmatprep.subr.mxu0 0.0
    %3308 = vmatpush1.msra.mxu0 0.0
    %3309 = vmatprep.subr.mxu0 0.0
    %3310 = vmatpush1.msra.mxu0 0.0
    %3311 = vmatprep.subr.mxu0 0.0
    %3312 = vmatpush1.msra.mxu0 0.0
    %3313 = vmatprep.subr.mxu0 0.0
    %3314 = vmatpush1.msra.mxu0 0.0
    %3315 = vmatprep.subr.mxu0 0.0
    %3316 = vmatpush1.msra.mxu0 0.0
    %3317 = vmatprep.subr.mxu0 0.0
    %3318 = vmatpush1.msra.mxu0 0.0
    %3319 = vmatprep.subr.mxu0 0.0
    %3320 = vmatpush1.msra.mxu0 0.0
    %3321 = vmatprep.subr.mxu0 0.0
    %3322 = vmatpush1.msra.mxu0 0.0
    %3323 = vmatprep.subr.mxu0 0.0
    %3324 = vmatpush1.msra.mxu0 0.0
    %3325 = vmatprep.subr.mxu0 0.0
    %3326 = vmatpush1.msra.mxu0 0.0
    %3327 = vmatprep.subr.mxu0 0.0
    %3328 = vmatpush1.msra.mxu0 0.0
    %3329 = vmatprep.subr.mxu0 0.0
    %3330 = vmatpush1.msra.mxu0 0.0
    %3331 = vmatprep.subr.mxu0 0.0
    %3332 = vmatpush1.msra.mxu0 0.0
    %3333 = vmatprep.subr.mxu0 0.0
    %3334 = vmatpush1.msra.mxu0 0.0
    %3335 = vmatprep.subr.mxu0 0.0
    %3336 = vmatpush1.msra.mxu0 0.0
    %3337 = vmatprep.subr.mxu0 0.0
    %3338 = vmatpush1.msra.mxu0 0.0
    %3339 = vmatprep.subr.mxu0 0.0
    %3340 = vmatpush1.msra.mxu0 0.0
    %3341 = vmatprep.subr.mxu0 0.0
    %3342 = vmatpush1.msra.mxu0 0.0
    %3343 = vmatprep.subr.mxu0 0.0
    %3344 = vmatpush1.msra.mxu0 0.0
    %3345 = vmatprep.mubr.f32.mxu0 0.0
    %3346 = vmatmul.mubr.f32.gmra.mrb[0].mxu0 %v3279
    %v3347 = vpop.f32.mrb[0].mxu0
    %v3348 = vadd.f32 0.0, %v3347
    %v3349 = vpop.f32.mrb[0].mxu0
    %3350 = vdwg.mxu0
    %v3351 = vld [vmem:[%s3] sm:$0xff]
    %v3352 = vld [vmem:[%s3 + $0x8] sm:$0xff]
    %v3353 = vld [vmem:[%s3 + $0x10] sm:$0xff]
    %v3354 = vld [vmem:[%s3 + $0x18] sm:$0xff]
    %v3355 = vld [vmem:[%s3 + $0x20] sm:$0xff]
    %v3356 = vld [vmem:[%s3 + $0x28] sm:$0xff]
    %v3357 = vld [vmem:[%s3 + $0x30] sm:$0xff]
    %v3358 = vld [vmem:[%s3 + $0x38] sm:$0xff]
    %v3360 = vsel %vm2062, %v2837, 0
    %3362 = vmatprep.subr.mxu0 0.0
    %3363 = vmatpush1.msra.mxu0 %v3351
    %3364 = vmatprep.subr.mxu0 0.0
    %3365 = vmatpush1.msra.mxu0 0.0
    %3366 = vmatprep.subr.mxu0 0.0
    %3367 = vmatpush1.msra.mxu0 0.0
    %3368 = vmatprep.subr.mxu0 0.0
    %3369 = vmatpush1.msra.mxu0 0.0
    %3370 = vmatprep.subr.mxu0 0.0
    %3371 = vmatpush1.msra.mxu0 0.0
    %3372 = vmatprep.subr.mxu0 0.0
    %3373 = vmatpush1.msra.mxu0 0.0
    %3374 = vmatprep.subr.mxu0 0.0
    %3375 = vmatpush1.msra.mxu0 0.0
    %3376 = vmatprep.subr.mxu0 0.0
    %3377 = vmatpush1.msra.mxu0 0.0
    %3378 = vmatprep.subr.mxu0 0.0
    %3379 = vmatpush1.msra.mxu0 0.0
    %3380 = vmatprep.subr.mxu0 0.0
    %3381 = vmatpush1.msra.mxu0 0.0
    %3382 = vmatprep.subr.mxu0 0.0
    %3383 = vmatpush1.msra.mxu0 0.0
    %3384 = vmatprep.subr.mxu0 0.0
    %3385 = vmatpush1.msra.mxu0 0.0
    %3386 = vmatprep.subr.mxu0 0.0
    %3387 = vmatpush1.msra.mxu0 0.0
    %3388 = vmatprep.subr.mxu0 0.0
    %3389 = vmatpush1.msra.mxu0 0.0
    %3390 = vmatprep.subr.mxu0 0.0
    %3391 = vmatpush1.msra.mxu0 0.0
    %3392 = vmatprep.subr.mxu0 0.0
    %3393 = vmatpush1.msra.mxu0 0.0
    %3394 = vmatprep.subr.mxu0 0.0
    %3395 = vmatpush1.msra.mxu0 0.0
    %3396 = vmatprep.subr.mxu0 0.0
    %3397 = vmatpush1.msra.mxu0 0.0
    %3398 = vmatprep.subr.mxu0 0.0
    %3399 = vmatpush1.msra.mxu0 0.0
    %3400 = vmatprep.subr.mxu0 0.0
    %3401 = vmatpush1.msra.mxu0 0.0
    %3402 = vmatprep.subr.mxu0 0.0
    %3403 = vmatpush1.msra.mxu0 0.0
    %3404 = vmatprep.subr.mxu0 0.0
    %3405 = vmatpush1.msra.mxu0 0.0
    %3406 = vmatprep.subr.mxu0 0.0
    %3407 = vmatpush1.msra.mxu0 0.0
    %3408 = vmatprep.subr.mxu0 0.0
    %3409 = vmatpush1.msra.mxu0 0.0
    %3410 = vmatprep.subr.mxu0 0.0
    %3411 = vmatpush1.msra.mxu0 0.0
    %3412 = vmatprep.subr.mxu0 0.0
    %3413 = vmatpush1.msra.mxu0 0.0
    %3414 = vmatprep.subr.mxu0 0.0
    %3415 = vmatpush1.msra.mxu0 0.0
    %3416 = vmatprep.subr.mxu0 0.0
    %3417 = vmatpush1.msra.mxu0 0.0
    %3418 = vmatprep.subr.mxu0 0.0
    %3419 = vmatpush1.msra.mxu0 0.0
    %3420 = vmatprep.subr.mxu0 0.0
    %3421 = vmatpush1.msra.mxu0 0.0
    %3422 = vmatprep.subr.mxu0 0.0
    %3423 = vmatpush1.msra.mxu0 0.0
    %3424 = vmatprep.subr.mxu0 0.0
    %3425 = vmatpush1.msra.mxu0 0.0
    %3426 = vmatprep.mubr.f32.mxu0 0.0
    %3427 = vmatmul.mubr.f32.gmra.mrb[0].mxu0 %v3360
    %v3428 = vpop.f32.mrb[0].mxu0
    %v3429 = vadd.f32 0.0, %v3428
    %v3430 = vpop.f32.mrb[0].mxu0
    %3431 = vdwg.mxu0
    %v3433 = vsel %vm2062, %v2910, 0
    %3435 = vmatprep.subr.mxu0 0.0
    %3436 = vmatpush1.msra.mxu0 %v3352
    %3437 = vmatprep.subr.mxu0 0.0
    %3438 = vmatpush1.msra.mxu0 0.0
    %3439 = vmatprep.subr.mxu0 0.0
    %3440 = vmatpush1.msra.mxu0 0.0
    %3441 = vmatprep.subr.mxu0 0.0
    %3442 = vmatpush1.msra.mxu0 0.0
    %3443 = vmatprep.subr.mxu0 0.0
    %3444 = vmatpush1.msra.mxu0 0.0
    %3445 = vmatprep.subr.mxu0 0.0
    %3446 = vmatpush1.msra.mxu0 0.0
    %3447 = vmatprep.subr.mxu0 0.0
    %3448 = vmatpush1.msra.mxu0 0.0
    %3449 = vmatprep.subr.mxu0 0.0
    %3450 = vmatpush1.msra.mxu0 0.0
    %3451 = vmatprep.subr.mxu0 0.0
    %3452 = vmatpush1.msra.mxu0 0.0
    %3453 = vmatprep.subr.mxu0 0.0
    %3454 = vmatpush1.msra.mxu0 0.0
    %3455 = vmatprep.subr.mxu0 0.0
    %3456 = vmatpush1.msra.mxu0 0.0
    %3457 = vmatprep.subr.mxu0 0.0
    %3458 = vmatpush1.msra.mxu0 0.0
    %3459 = vmatprep.subr.mxu0 0.0
    %3460 = vmatpush1.msra.mxu0 0.0
    %3461 = vmatprep.subr.mxu0 0.0
    %3462 = vmatpush1.msra.mxu0 0.0
    %3463 = vmatprep.subr.mxu0 0.0
    %3464 = vmatpush1.msra.mxu0 0.0
    %3465 = vmatprep.subr.mxu0 0.0
    %3466 = vmatpush1.msra.mxu0 0.0
    %3467 = vmatprep.subr.mxu0 0.0
    %3468 = vmatpush1.msra.mxu0 0.0
    %3469 = vmatprep.subr.mxu0 0.0
    %3470 = vmatpush1.msra.mxu0 0.0
    %3471 = vmatprep.subr.mxu0 0.0
    %3472 = vmatpush1.msra.mxu0 0.0
    %3473 = vmatprep.subr.mxu0 0.0
    %3474 = vmatpush1.msra.mxu0 0.0
    %3475 = vmatprep.subr.mxu0 0.0
    %3476 = vmatpush1.msra.mxu0 0.0
    %3477 = vmatprep.subr.mxu0 0.0
    %3478 = vmatpush1.msra.mxu0 0.0
    %3479 = vmatprep.subr.mxu0 0.0
    %3480 = vmatpush1.msra.mxu0 0.0
    %3481 = vmatprep.subr.mxu0 0.0
    %3482 = vmatpush1.msra.mxu0 0.0
    %3483 = vmatprep.subr.mxu0 0.0
    %3484 = vmatpush1.msra.mxu0 0.0
    %3485 = vmatprep.subr.mxu0 0.0
    %3486 = vmatpush1.msra.mxu0 0.0
    %3487 = vmatprep.subr.mxu0 0.0
    %3488 = vmatpush1.msra.mxu0 0.0
    %3489 = vmatprep.subr.mxu0 0.0
    %3490 = vmatpush1.msra.mxu0 0.0
    %3491 = vmatprep.subr.mxu0 0.0
    %3492 = vmatpush1.msra.mxu0 0.0
    %3493 = vmatprep.subr.mxu0 0.0
    %3494 = vmatpush1.msra.mxu0 0.0
    %3495 = vmatprep.subr.mxu0 0.0
    %3496 = vmatpush1.msra.mxu0 0.0
    %3497 = vmatprep.subr.mxu0 0.0
    %3498 = vmatpush1.msra.mxu0 0.0
    %3499 = vmatprep.mubr.f32.mxu0 0.0
    %3500 = vmatmul.mubr.f32.gmra.mrb[0].mxu0 %v3433
    %v3501 = vpop.f32.mrb[0].mxu0
    %v3502 = vadd.f32 0.0, %v3501
    %v3503 = vpop.f32.mrb[0].mxu0
    %3504 = vdwg.mxu0
    %v3506 = vsel %vm2062, %v2983, 0
    %3508 = vmatprep.subr.mxu0 0.0
    %3509 = vmatpush1.msra.mxu0 %v3353
    %3510 = vmatprep.subr.mxu0 0.0
    %3511 = vmatpush1.msra.mxu0 0.0
    %3512 = vmatprep.subr.mxu0 0.0
    %3513 = vmatpush1.msra.mxu0 0.0
    %3514 = vmatprep.subr.mxu0 0.0
    %3515 = vmatpush1.msra.mxu0 0.0
    %3516 = vmatprep.subr.mxu0 0.0
    %3517 = vmatpush1.msra.mxu0 0.0
    %3518 = vmatprep.subr.mxu0 0.0
    %3519 = vmatpush1.msra.mxu0 0.0
    %3520 = vmatprep.subr.mxu0 0.0
    %3521 = vmatpush1.msra.mxu0 0.0
    %3522 = vmatprep.subr.mxu0 0.0
    %3523 = vmatpush1.msra.mxu0 0.0
    %3524 = vmatprep.subr.mxu0 0.0
    %3525 = vmatpush1.msra.mxu0 0.0
    %3526 = vmatprep.subr.mxu0 0.0
    %3527 = vmatpush1.msra.mxu0 0.0
    %3528 = vmatprep.subr.mxu0 0.0
    %3529 = vmatpush1.msra.mxu0 0.0
    %3530 = vmatprep.subr.mxu0 0.0
    %3531 = vmatpush1.msra.mxu0 0.0
    %3532 = vmatprep.subr.mxu0 0.0
    %3533 = vmatpush1.msra.mxu0 0.0
    %3534 = vmatprep.subr.mxu0 0.0
    %3535 = vmatpush1.msra.mxu0 0.0
    %3536 = vmatprep.subr.mxu0 0.0
    %3537 = vmatpush1.msra.mxu0 0.0
    %3538 = vmatprep.subr.mxu0 0.0
    %3539 = vmatpush1.msra.mxu0 0.0
    %3540 = vmatprep.subr.mxu0 0.0
    %3541 = vmatpush1.msra.mxu0 0.0
    %3542 = vmatprep.subr.mxu0 0.0
    %3543 = vmatpush1.msra.mxu0 0.0
    %3544 = vmatprep.subr.mxu0 0.0
    %3545 = vmatpush1.msra.mxu0 0.0
    %3546 = vmatprep.subr.mxu0 0.0
    %3547 = vmatpush1.msra.mxu0 0.0
    %3548 = vmatprep.subr.mxu0 0.0
    %3549 = vmatpush1.msra.mxu0 0.0
    %3550 = vmatprep.subr.mxu0 0.0
    %3551 = vmatpush1.msra.mxu0 0.0
    %3552 = vmatprep.subr.mxu0 0.0
    %3553 = vmatpush1.msra.mxu0 0.0
    %3554 = vmatprep.subr.mxu0 0.0
    %3555 = vmatpush1.msra.mxu0 0.0
    %3556 = vmatprep.subr.mxu0 0.0
    %3557 = vmatpush1.msra.mxu0 0.0
    %3558 = vmatprep.subr.mxu0 0.0
    %3559 = vmatpush1.msra.mxu0 0.0
    %3560 = vmatprep.subr.mxu0 0.0
    %3561 = vmatpush1.msra.mxu0 0.0
    %3562 = vmatprep.subr.mxu0 0.0
    %3563 = vmatpush1.msra.mxu0 0.0
    %3564 = vmatprep.subr.mxu0 0.0
    %3565 = vmatpush1.msra.mxu0 0.0
    %3566 = vmatprep.subr.mxu0 0.0
    %3567 = vmatpush1.msra.mxu0 0.0
    %3568 = vmatprep.subr.mxu0 0.0
    %3569 = vmatpush1.msra.mxu0 0.0
    %3570 = vmatprep.subr.mxu0 0.0
    %3571 = vmatpush1.msra.mxu0 0.0
    %3572 = vmatprep.mubr.f32.mxu0 0.0
    %3573 = vmatmul.mubr.f32.gmra.mrb[0].mxu0 %v3506
    %v3574 = vpop.f32.mrb[0].mxu0
    %v3575 = vadd.f32 0.0, %v3574
    %v3576 = vpop.f32.mrb[0].mxu0
    %3577 = vdwg.mxu0
    %v3579 = vsel %vm2062, %v3056, 0
    %3581 = vmatprep.subr.mxu0 0.0
    %3582 = vmatpush1.msra.mxu0 %v3354
    %3583 = vmatprep.subr.mxu0 0.0
    %3584 = vmatpush1.msra.mxu0 0.0
    %3585 = vmatprep.subr.mxu0 0.0
    %3586 = vmatpush1.msra.mxu0 0.0
    %3587 = vmatprep.subr.mxu0 0.0
    %3588 = vmatpush1.msra.mxu0 0.0
    %3589 = vmatprep.subr.mxu0 0.0
    %3590 = vmatpush1.msra.mxu0 0.0
    %3591 = vmatprep.subr.mxu0 0.0
    %3592 = vmatpush1.msra.mxu0 0.0
    %3593 = vmatprep.subr.mxu0 0.0
    %3594 = vmatpush1.msra.mxu0 0.0
    %3595 = vmatprep.subr.mxu0 0.0
    %3596 = vmatpush1.msra.mxu0 0.0
    %3597 = vmatprep.subr.mxu0 0.0
    %3598 = vmatpush1.msra.mxu0 0.0
    %3599 = vmatprep.subr.mxu0 0.0
    %3600 = vmatpush1.msra.mxu0 0.0
    %3601 = vmatprep.subr.mxu0 0.0
    %3602 = vmatpush1.msra.mxu0 0.0
    %3603 = vmatprep.subr.mxu0 0.0
    %3604 = vmatpush1.msra.mxu0 0.0
    %3605 = vmatprep.subr.mxu0 0.0
    %3606 = vmatpush1.msra.mxu0 0.0
    %3607 = vmatprep.subr.mxu0 0.0
    %3608 = vmatpush1.msra.mxu0 0.0
    %3609 = vmatprep.subr.mxu0 0.0
    %3610 = vmatpush1.msra.mxu0 0.0
    %3611 = vmatprep.subr.mxu0 0.0
    %3612 = vmatpush1.msra.mxu0 0.0
    %3613 = vmatprep.subr.mxu0 0.0
    %3614 = vmatpush1.msra.mxu0 0.0
    %3615 = vmatprep.subr.mxu0 0.0
    %3616 = vmatpush1.msra.mxu0 0.0
    %3617 = vmatprep.subr.mxu0 0.0
    %3618 = vmatpush1.msra.mxu0 0.0
    %3619 = vmatprep.subr.mxu0 0.0
    %3620 = vmatpush1.msra.mxu0 0.0
    %3621 = vmatprep.subr.mxu0 0.0
    %3622 = vmatpush1.msra.mxu0 0.0
    %3623 = vmatprep.subr.mxu0 0.0
    %3624 = vmatpush1.msra.mxu0 0.0
    %3625 = vmatprep.subr.mxu0 0.0
    %3626 = vmatpush1.msra.mxu0 0.0
    %3627 = vmatprep.subr.mxu0 0.0
    %3628 = vmatpush1.msra.mxu0 0.0
    %3629 = vmatprep.subr.mxu0 0.0
    %3630 = vmatpush1.msra.mxu0 0.0
    %3631 = vmatprep.subr.mxu0 0.0
    %3632 = vmatpush1.msra.mxu0 0.0
    %3633 = vmatprep.subr.mxu0 0.0
    %3634 = vmatpush1.msra.mxu0 0.0
    %3635 = vmatprep.subr.mxu0 0.0
    %3636 = vmatpush1.msra.mxu0 0.0
    %3637 = vmatprep.subr.mxu0 0.0
    %3638 = vmatpush1.msra.mxu0 0.0
    %3639 = vmatprep.subr.mxu0 0.0
    %3640 = vmatpush1.msra.mxu0 0.0
    %3641 = vmatprep.subr.mxu0 0.0
    %3642 = vmatpush1.msra.mxu0 0.0
    %3643 = vmatprep.subr.mxu0 0.0
    %3644 = vmatpush1.msra.mxu0 0.0
    %3645 = vmatprep.mubr.f32.mxu0 0.0
    %3646 = vmatmul.mubr.f32.gmra.mrb[0].mxu0 %v3579
    %v3647 = vpop.f32.mrb[0].mxu0
    %v3648 = vadd.f32 0.0, %v3647
    %v3649 = vpop.f32.mrb[0].mxu0
    %3650 = vdwg.mxu0
    %v3652 = vsel %vm2062, %v3129, 0
    %3654 = vmatprep.subr.mxu0 0.0
    %3655 = vmatpush1.msra.mxu0 %v3355
    %3656 = vmatprep.subr.mxu0 0.0
    %3657 = vmatpush1.msra.mxu0 0.0
    %3658 = vmatprep.subr.mxu0 0.0
    %3659 = vmatpush1.msra.mxu0 0.0
    %3660 = vmatprep.subr.mxu0 0.0
    %3661 = vmatpush1.msra.mxu0 0.0
    %3662 = vmatprep.subr.mxu0 0.0
    %3663 = vmatpush1.msra.mxu0 0.0
    %3664 = vmatprep.subr.mxu0 0.0
    %3665 = vmatpush1.msra.mxu0 0.0
    %3666 = vmatprep.subr.mxu0 0.0
    %3667 = vmatpush1.msra.mxu0 0.0
    %3668 = vmatprep.subr.mxu0 0.0
    %3669 = vmatpush1.msra.mxu0 0.0
    %3670 = vmatprep.subr.mxu0 0.0
    %3671 = vmatpush1.msra.mxu0 0.0
    %3672 = vmatprep.subr.mxu0 0.0
    %3673 = vmatpush1.msra.mxu0 0.0
    %3674 = vmatprep.subr.mxu0 0.0
    %3675 = vmatpush1.msra.mxu0 0.0
    %3676 = vmatprep.subr.mxu0 0.0
    %3677 = vmatpush1.msra.mxu0 0.0
    %3678 = vmatprep.subr.mxu0 0.0
    %3679 = vmatpush1.msra.mxu0 0.0
    %3680 = vmatprep.subr.mxu0 0.0
    %3681 = vmatpush1.msra.mxu0 0.0
    %3682 = vmatprep.subr.mxu0 0.0
    %3683 = vmatpush1.msra.mxu0 0.0
    %3684 = vmatprep.subr.mxu0 0.0
    %3685 = vmatpush1.msra.mxu0 0.0
    %3686 = vmatprep.subr.mxu0 0.0
    %3687 = vmatpush1.msra.mxu0 0.0
    %3688 = vmatprep.subr.mxu0 0.0
    %3689 = vmatpush1.msra.mxu0 0.0
    %3690 = vmatprep.subr.mxu0 0.0
    %3691 = vmatpush1.msra.mxu0 0.0
    %3692 = vmatprep.subr.mxu0 0.0
    %3693 = vmatpush1.msra.mxu0 0.0
    %3694 = vmatprep.subr.mxu0 0.0
    %3695 = vmatpush1.msra.mxu0 0.0
    %3696 = vmatprep.subr.mxu0 0.0
    %3697 = vmatpush1.msra.mxu0 0.0
    %3698 = vmatprep.subr.mxu0 0.0
    %3699 = vmatpush1.msra.mxu0 0.0
    %3700 = vmatprep.subr.mxu0 0.0
    %3701 = vmatpush1.msra.mxu0 0.0
    %3702 = vmatprep.subr.mxu0 0.0
    %3703 = vmatpush1.msra.mxu0 0.0
    %3704 = vmatprep.subr.mxu0 0.0
    %3705 = vmatpush1.msra.mxu0 0.0
    %3706 = vmatprep.subr.mxu0 0.0
    %3707 = vmatpush1.msra.mxu0 0.0
    %3708 = vmatprep.subr.mxu0 0.0
    %3709 = vmatpush1.msra.mxu0 0.0
    %3710 = vmatprep.subr.mxu0 0.0
    %3711 = vmatpush1.msra.mxu0 0.0
    %3712 = vmatprep.subr.mxu0 0.0
    %3713 = vmatpush1.msra.mxu0 0.0
    %3714 = vmatprep.subr.mxu0 0.0
    %3715 = vmatpush1.msra.mxu0 0.0
    %3716 = vmatprep.subr.mxu0 0.0
    %3717 = vmatpush1.msra.mxu0 0.0
    %3718 = vmatprep.mubr.f32.mxu0 0.0
    %3719 = vmatmul.mubr.f32.gmra.mrb[0].mxu0 %v3652
    %v3720 = vpop.f32.mrb[0].mxu0
    %v3721 = vadd.f32 0.0, %v3720
    %v3722 = vpop.f32.mrb[0].mxu0
    %3723 = vdwg.mxu0
    %v3725 = vsel %vm2062, %v3202, 0
    %3727 = vmatprep.subr.mxu0 0.0
    %3728 = vmatpush1.msra.mxu0 %v3356
    %3729 = vmatprep.subr.mxu0 0.0
    %3730 = vmatpush1.msra.mxu0 0.0
    %3731 = vmatprep.subr.mxu0 0.0
    %3732 = vmatpush1.msra.mxu0 0.0
    %3733 = vmatprep.subr.mxu0 0.0
    %3734 = vmatpush1.msra.mxu0 0.0
    %3735 = vmatprep.subr.mxu0 0.0
    %3736 = vmatpush1.msra.mxu0 0.0
    %3737 = vmatprep.subr.mxu0 0.0
    %3738 = vmatpush1.msra.mxu0 0.0
    %3739 = vmatprep.subr.mxu0 0.0
    %3740 = vmatpush1.msra.mxu0 0.0
    %3741 = vmatprep.subr.mxu0 0.0
    %3742 = vmatpush1.msra.mxu0 0.0
    %3743 = vmatprep.subr.mxu0 0.0
    %3744 = vmatpush1.msra.mxu0 0.0
    %3745 = vmatprep.subr.mxu0 0.0
    %3746 = vmatpush1.msra.mxu0 0.0
    %3747 = vmatprep.subr.mxu0 0.0
    %3748 = vmatpush1.msra.mxu0 0.0
    %3749 = vmatprep.subr.mxu0 0.0
    %3750 = vmatpush1.msra.mxu0 0.0
    %3751 = vmatprep.subr.mxu0 0.0
    %3752 = vmatpush1.msra.mxu0 0.0
    %3753 = vmatprep.subr.mxu0 0.0
    %3754 = vmatpush1.msra.mxu0 0.0
    %3755 = vmatprep.subr.mxu0 0.0
    %3756 = vmatpush1.msra.mxu0 0.0
    %3757 = vmatprep.subr.mxu0 0.0
    %3758 = vmatpush1.msra.mxu0 0.0
    %3759 = vmatprep.subr.mxu0 0.0
    %3760 = vmatpush1.msra.mxu0 0.0
    %3761 = vmatprep.subr.mxu0 0.0
    %3762 = vmatpush1.msra.mxu0 0.0
    %3763 = vmatprep.subr.mxu0 0.0
    %3764 = vmatpush1.msra.mxu0 0.0
    %3765 = vmatprep.subr.mxu0 0.0
    %3766 = vmatpush1.msra.mxu0 0.0
    %3767 = vmatprep.subr.mxu0 0.0
    %3768 = vmatpush1.msra.mxu0 0.0
    %3769 = vmatprep.subr.mxu0 0.0
    %3770 = vmatpush1.msra.mxu0 0.0
    %3771 = vmatprep.subr.mxu0 0.0
    %3772 = vmatpush1.msra.mxu0 0.0
    %3773 = vmatprep.subr.mxu0 0.0
    %3774 = vmatpush1.msra.mxu0 0.0
    %3775 = vmatprep.subr.mxu0 0.0
    %3776 = vmatpush1.msra.mxu0 0.0
    %3777 = vmatprep.subr.mxu0 0.0
    %3778 = vmatpush1.msra.mxu0 0.0
    %3779 = vmatprep.subr.mxu0 0.0
    %3780 = vmatpush1.msra.mxu0 0.0
    %3781 = vmatprep.subr.mxu0 0.0
    %3782 = vmatpush1.msra.mxu0 0.0
    %3783 = vmatprep.subr.mxu0 0.0
    %3784 = vmatpush1.msra.mxu0 0.0
    %3785 = vmatprep.subr.mxu0 0.0
    %3786 = vmatpush1.msra.mxu0 0.0
    %3787 = vmatprep.subr.mxu0 0.0
    %3788 = vmatpush1.msra.mxu0 0.0
    %3789 = vmatprep.subr.mxu0 0.0
    %3790 = vmatpush1.msra.mxu0 0.0
    %3791 = vmatprep.mubr.f32.mxu0 0.0
    %3792 = vmatmul.mubr.f32.gmra.mrb[0].mxu0 %v3725
    %v3793 = vpop.f32.mrb[0].mxu0
    %v3794 = vadd.f32 0.0, %v3793
    %v3795 = vpop.f32.mrb[0].mxu0
    %3796 = vdwg.mxu0
    %v3798 = vsel %vm2062, %v3275, 0
    %3800 = vmatprep.subr.mxu0 0.0
    %3801 = vmatpush1.msra.mxu0 %v3357
    %3802 = vmatprep.subr.mxu0 0.0
    %3803 = vmatpush1.msra.mxu0 0.0
    %3804 = vmatprep.subr.mxu0 0.0
    %3805 = vmatpush1.msra.mxu0 0.0
    %3806 = vmatprep.subr.mxu0 0.0
    %3807 = vmatpush1.msra.mxu0 0.0
    %3808 = vmatprep.subr.mxu0 0.0
    %3809 = vmatpush1.msra.mxu0 0.0
    %3810 = vmatprep.subr.mxu0 0.0
    %3811 = vmatpush1.msra.mxu0 0.0
    %3812 = vmatprep.subr.mxu0 0.0
    %3813 = vmatpush1.msra.mxu0 0.0
    %3814 = vmatprep.subr.mxu0 0.0
    %3815 = vmatpush1.msra.mxu0 0.0
    %3816 = vmatprep.subr.mxu0 0.0
    %3817 = vmatpush1.msra.mxu0 0.0
    %3818 = vmatprep.subr.mxu0 0.0
    %3819 = vmatpush1.msra.mxu0 0.0
    %3820 = vmatprep.subr.mxu0 0.0
    %3821 = vmatpush1.msra.mxu0 0.0
    %3822 = vmatprep.subr.mxu0 0.0
    %3823 = vmatpush1.msra.mxu0 0.0
    %3824 = vmatprep.subr.mxu0 0.0
    %3825 = vmatpush1.msra.mxu0 0.0
    %3826 = vmatprep.subr.mxu0 0.0
    %3827 = vmatpush1.msra.mxu0 0.0
    %3828 = vmatprep.subr.mxu0 0.0
    %3829 = vmatpush1.msra.mxu0 0.0
    %3830 = vmatprep.subr.mxu0 0.0
    %3831 = vmatpush1.msra.mxu0 0.0
    %3832 = vmatprep.subr.mxu0 0.0
    %3833 = vmatpush1.msra.mxu0 0.0
    %3834 = vmatprep.subr.mxu0 0.0
    %3835 = vmatpush1.msra.mxu0 0.0
    %3836 = vmatprep.subr.mxu0 0.0
    %3837 = vmatpush1.msra.mxu0 0.0
    %3838 = vmatprep.subr.mxu0 0.0
    %3839 = vmatpush1.msra.mxu0 0.0
    %3840 = vmatprep.subr.mxu0 0.0
    %3841 = vmatpush1.msra.mxu0 0.0
    %3842 = vmatprep.subr.mxu0 0.0
    %3843 = vmatpush1.msra.mxu0 0.0
    %3844 = vmatprep.subr.mxu0 0.0
    %3845 = vmatpush1.msra.mxu0 0.0
    %3846 = vmatprep.subr.mxu0 0.0
    %3847 = vmatpush1.msra.mxu0 0.0
    %3848 = vmatprep.subr.mxu0 0.0
    %3849 = vmatpush1.msra.mxu0 0.0
    %3850 = vmatprep.subr.mxu0 0.0
    %3851 = vmatpush1.msra.mxu0 0.0
    %3852 = vmatprep.subr.mxu0 0.0
    %3853 = vmatpush1.msra.mxu0 0.0
    %3854 = vmatprep.subr.mxu0 0.0
    %3855 = vmatpush1.msra.mxu0 0.0
    %3856 = vmatprep.subr.mxu0 0.0
    %3857 = vmatpush1.msra.mxu0 0.0
    %3858 = vmatprep.subr.mxu0 0.0
    %3859 = vmatpush1.msra.mxu0 0.0
    %3860 = vmatprep.subr.mxu0 0.0
    %3861 = vmatpush1.msra.mxu0 0.0
    %3862 = vmatprep.subr.mxu0 0.0
    %3863 = vmatpush1.msra.mxu0 0.0
    %3864 = vmatprep.mubr.f32.mxu0 0.0
    %3865 = vmatmul.mubr.f32.gmra.mrb[0].mxu0 %v3798
    %v3866 = vpop.f32.mrb[0].mxu0
    %v3867 = vadd.f32 0.0, %v3866
    %v3868 = vpop.f32.mrb[0].mxu0
    %3869 = vdwg.mxu0
    %v3871 = vsel %vm2062, %v3348, 0
    %3873 = vmatprep.subr.mxu0 0.0
    %3874 = vmatpush1.msra.mxu0 %v3358
    %3875 = vmatprep.subr.mxu0 0.0
    %3876 = vmatpush1.msra.mxu0 0.0
    %3877 = vmatprep.subr.mxu0 0.0
    %3878 = vmatpush1.msra.mxu0 0.0
    %3879 = vmatprep.subr.mxu0 0.0
    %3880 = vmatpush1.msra.mxu0 0.0
    %3881 = vmatprep.subr.mxu0 0.0
    %3882 = vmatpush1.msra.mxu0 0.0
    %3883 = vmatprep.subr.mxu0 0.0
    %3884 = vmatpush1.msra.mxu0 0.0
    %3885 = vmatprep.subr.mxu0 0.0
    %3886 = vmatpush1.msra.mxu0 0.0
    %3887 = vmatprep.subr.mxu0 0.0
    %3888 = vmatpush1.msra.mxu0 0.0
    %3889 = vmatprep.subr.mxu0 0.0
    %3890 = vmatpush1.msra.mxu0 0.0
    %3891 = vmatprep.subr.mxu0 0.0
    %3892 = vmatpush1.msra.mxu0 0.0
    %3893 = vmatprep.subr.mxu0 0.0
    %3894 = vmatpush1.msra.mxu0 0.0
    %3895 = vmatprep.subr.mxu0 0.0
    %3896 = vmatpush1.msra.mxu0 0.0
    %3897 = vmatprep.subr.mxu0 0.0
    %3898 = vmatpush1.msra.mxu0 0.0
    %3899 = vmatprep.subr.mxu0 0.0
    %3900 = vmatpush1.msra.mxu0 0.0
    %3901 = vmatprep.subr.mxu0 0.0
    %3902 = vmatpush1.msra.mxu0 0.0
    %3903 = vmatprep.subr.mxu0 0.0
    %3904 = vmatpush1.msra.mxu0 0.0
    %3905 = vmatprep.subr.mxu0 0.0
    %3906 = vmatpush1.msra.mxu0 0.0
    %3907 = vmatprep.subr.mxu0 0.0
    %3908 = vmatpush1.msra.mxu0 0.0
    %3909 = vmatprep.subr.mxu0 0.0
    %3910 = vmatpush1.msra.mxu0 0.0
    %3911 = vmatprep.subr.mxu0 0.0
    %3912 = vmatpush1.msra.mxu0 0.0
    %3913 = vmatprep.subr.mxu0 0.0
    %3914 = vmatpush1.msra.mxu0 0.0
    %3915 = vmatprep.subr.mxu0 0.0
    %3916 = vmatpush1.msra.mxu0 0.0
    %3917 = vmatprep.subr.mxu0 0.0
    %3918 = vmatpush1.msra.mxu0 0.0
    %3919 = vmatprep.subr.mxu0 0.0
    %3920 = vmatpush1.msra.mxu0 0.0
    %3921 = vmatprep.subr.mxu0 0.0
    %3922 = vmatpush1.msra.mxu0 0.0
    %3923 = vmatprep.subr.mxu0 0.0
    %3924 = vmatpush1.msra.mxu0 0.0
    %3925 = vmatprep.subr.mxu0 0.0
    %3926 = vmatpush1.msra.mxu0 0.0
    %3927 = vmatprep.subr.mxu0 0.0
    %3928 = vmatpush1.msra.mxu0 0.0
    %3929 = vmatprep.subr.mxu0 0.0
    %3930 = vmatpush1.msra.mxu0 0.0
    %3931 = vmatprep.subr.mxu0 0.0
    %3932 = vmatpush1.msra.mxu0 0.0
    %3933 = vmatprep.subr.mxu0 0.0
    %3934 = vmatpush1.msra.mxu0 0.0
    %3935 = vmatprep.subr.mxu0 0.0
    %3936 = vmatpush1.msra.mxu0 0.0
    %3937 = vmatprep.mubr.f32.mxu0 0.0
    %3938 = vmatmul.mubr.f32.gmra.mrb[0].mxu0 %v3871
    %v3939 = vpop.f32.mrb[0].mxu0
    %v3940 = vadd.f32 0.0, %v3939
    %v3941 = vpop.f32.mrb[0].mxu0
    %3942 = vdwg.mxu0
    %v3943 = vadd.f32 %v3429, %v3502
    %v3944 = vadd.f32 %v3943, %v3575
    %v3945 = vadd.f32 %v3944, %v3648
    %v3946 = vadd.f32 %v3721, %v3794
    %v3947 = vadd.f32 %v3946, %v3867
    %v3948 = vadd.f32 %v3947, %v3940
    %v3949 = vld [vmem:[%s4] sm:$0x1]
    %v3951 = vlaneseq
    %v3952 = vshrl.u32 %v3951, 7
    %v3953 = vsub.s32 0, %v3952
    %v3954 = vrot.slane %v3949, %v3953
    %v3956 = vadd.f32 %v3945, %v3954
    %v3957 = vadd.f32 %v3948, %v3954
    %3958 = vst [vmem:[#allocation2] sm:$0xff] %v3956
    %3959 = vst [vmem:[#allocation2 + $0x8] sm:$0xff] %v3957
    // Predicated region
    $region22: #{tpu_custom_call.1} parent=1 // pred_check
      _
    $region23: #{tpu_custom_call.1} parent=1 // pred_check_branch
      %3961 = sbr.rel (0) target = $region25
    $region24: #{tpu_custom_call.1} parent=1 // pred_region
      %s3963 = ssub.s32 256, 256
      %3964 = vsyncadd [#allocation3], %s3963
      %s3965 = sshll.u32 [#allocation2], 4
      %s3966 = int_to_ptr.vmem [resolvable:$true] %s3965
      %3971 = dma.vmem_to_hbm [thread:$0]  %s3966, 256, %s5, [#allocation3], 128, 128, 8
    $region25: #{tpu_custom_call.1} parent=1 // pred_fallthru
      _
    // Predicated region
    $region26: #{tpu_custom_call.1} parent=1 // pred_check
      _
    $region27: #{tpu_custom_call.1} parent=1 // pred_check_branch
      %3973 = sbr.rel (0) target = $region29
    $region28: #{tpu_custom_call.1} parent=1 // pred_region
      %3974 = dma.done [#allocation3], 256
    $region29: #{tpu_custom_call.1} parent=1 // pred_fallthru
      _
    %3975 = vsyncpa [#allocation3], 1

</llo_original>
